<compile_context>
chip_gen: v7x
topology: tpu7x:2x2x1
jax: 0.10.0
libtpu: 0.0.40
codegen_flags: <defaults>
</compile_context>

<pallas_src>
import functools

import jax
import jax.numpy as jnp
from jax import lax
from jax.experimental import pallas as pl
from jax.experimental.pallas import tpu as pltpu


def _round_up(x: int, m: int) -> int:
    return (x + m - 1) // m * m


def _residual_block_kernel(xp_ref, w1_ref, b1_ref, w2s_ref, b2s_ref, o_ref,
                           *, H, W, We):
    """One batch element per grid step.

    xp_ref : (H+4, We+2, Cin)   zero-padded NHWC input (pad 2 top/bottom/left,
                                We-W right), f32
    w1_ref : (9*Cin, Cout)      flattened 3x3 conv1 weight, (ky, kx, ci) order
    b1_ref : (1, Cout)
    w2s_ref: (Cout, 9*Cout+Cin) transposed [flattened conv2 | 1x1 shortcut] weight
    b2s_ref: (Cout, 1)          b2 + bs
    o_ref  : (Cout, H*W)        output, channel-major (lane-dense store)
    """
    He = H + 2
    Cout = o_ref.shape[0]
    Cin = xp_ref.shape[-1]

    xp = xp_ref[...]                                   # f32 already; no casts

    # ---- conv1 as ONE im2col GEMM over the extended (He, We) domain ---------
    # K order = (ky, kx, cin), matching w1.reshape(9*Cin, Cout).
    taps1 = [xp[ky:ky + He, kx:kx + We, :]
             for ky in range(3) for kx in range(3)]
    p1 = jnp.concatenate(taps1, axis=-1).reshape(He * We, 9 * Cin)
    y1 = jnp.dot(p1, w1_ref[...], preferred_element_type=jnp.float32)
    y1 = jnp.maximum(y1 + b1_ref[...], 0.0).reshape(He, We, Cout)   # A1 = ReLU

    # Zero the ring outside the valid HxW interior (rows/cols 1..H / 1..W of
    # the extended domain).  This realizes the SAME zero-padding of ReLU(W1(x))
    # for conv2 purely in registers: no scratch zeroing, no store/reload.
    ii = lax.broadcasted_iota(jnp.int32, (He, We, Cout), 0)
    jj = lax.broadcasted_iota(jnp.int32, (He, We, Cout), 1)
    inside = (ii >= 1) & (ii <= H) & (jj >= 1) & (jj <= W)
    y1p = jnp.where(inside, y1, 0.0)

    # ---- conv2 + fused 1x1 shortcut as ONE GEMM -----------------------------
    # K order = (ky, kx, c_hidden) for the 3x3 taps, then the Cin shortcut cols.
    taps2 = [y1p[ky:ky + H, kx:kx + W, :]
             for ky in range(3) for kx in range(3)]
    xs = xp[2:2 + H, 2:2 + W, :]                       # shortcut input (H, W, Cin)
    p2 = jnp.concatenate(taps2 + [xs], axis=-1).reshape(H * W, 9 * Cout + Cin)

    # out^T = W2s^T @ P2^T  (NT matmul): result (Cout, H*W) has 256 dense lanes
    # per row, so the bias+ReLU epilogue and the store are unmasked/dense.
    out_t = lax.dot_general(
        w2s_ref[...], p2,
        dimension_numbers=(((1,), (1,)), ((), ())),
        preferred_element_type=jnp.float32)
    out_t = jnp.maximum(out_t + b2s_ref[...], 0.0)     # A2 = ReLU
    o_ref[...] = out_t.astype(o_ref.dtype)


@jax.jit
def standard_residual_block(x_nchw, w1, b1, w2, b2, ws, bs):
    """x_nchw: (N, Cin, H, W). Returns (N, Cout, H, W)."""
    N, Cin, H, W = x_nchw.shape
    Cout = w1.shape[-1]
    # conv1 is computed on an extended domain (H+2 rows, We cols) so that the
    # halo needed by conv2 is produced in-kernel; We is rounded up to a multiple
    # of 8 so all in-kernel reshapes stay sublane-aligned.
    We = _round_up(W + 2, 8)

    # NCHW -> NHWC, zero-pad: 2 rows top/bottom, 2 cols left, We - W cols right.
    x_nhwc = jnp.transpose(x_nchw, (0, 2, 3, 1))
    x_pad = jnp.pad(x_nhwc, ((0, 0), (2, 2), (2, We - W), (0, 0)))

    # Flattened / fused weights (prepared once, outside the kernel).
    w1f = w1.reshape(9 * Cin, Cout)                                  # (36, Cout)
    w2sT = jnp.concatenate([w2.reshape(9 * Cout, Cout), ws], 0).T    # (Cout, 76)
    b1_2d = b1.reshape(1, Cout)
    b2s = (b2 + bs).reshape(Cout, 1)

    kernel = functools.partial(_residual_block_kernel, H=H, W=W, We=We)

    out_t = pl.pallas_call(
        kernel,
        out_shape=jax.ShapeDtypeStruct((N, Cout, H * W), x_nchw.dtype),
        grid_spec=pltpu.PrefetchScalarGridSpec(
            num_scalar_prefetch=0,
            grid=(N,),
            in_specs=[
                pl.BlockSpec((None, H + 4, We + 2, Cin), lambda n: (n, 0, 0, 0)),
                pl.BlockSpec((9 * Cin, Cout), lambda n: (0, 0)),
                pl.BlockSpec((1, Cout), lambda n: (0, 0)),
                pl.BlockSpec((Cout, 9 * Cout + Cin), lambda n: (0, 0)),
                pl.BlockSpec((Cout, 1), lambda n: (0, 0)),
            ],
            out_specs=pl.BlockSpec((None, Cout, H * W), lambda n: (n, 0, 0)),
        ),
        compiler_params=pltpu.CompilerParams(
            dimension_semantics=("parallel",)),
    )(x_pad, w1f, b1_2d, w2sT, b2s)

    # (N, Cout, H*W) is already channel-major: a reshape gives NCHW directly
    # (no output transpose needed in the wrapper).
    return out_t.reshape(N, Cout, H, W)


def _reference(x_nchw, w1, b1, w2, b2, ws, bs):
    """Pure-JAX reference (mirrors the PyTorch forward)."""
    dn = ("NHWC", "HWIO", "NHWC")
    x = jnp.transpose(x_nchw, (0, 2, 3, 1))
    y1 = lax.conv_general_dilated(x, w1, (1, 1), "SAME", dimension_numbers=dn) + b1
    y1 = jnp.maximum(y1, 0.0)
    y2 = lax.conv_general_dilated(y1, w2, (1, 1), "SAME", dimension_numbers=dn) + b2
    s = lax.conv_general_dilated(
        x, ws[None, None], (1, 1), "SAME", dimension_numbers=dn) + bs
    out = jnp.maximum(s + y2, 0.0)
    return jnp.transpose(out, (0, 3, 1, 2))


if __name__ == "__main__":
    N, Cin, Cout, H, W = 2, 4, 8, 16, 16

    key = jax.random.PRNGKey(0)
    kx, k1, kb1, k2, kb2, ks, kbs = jax.random.split(key, 7)

    x = jax.random.normal(kx, (N, Cin, H, W), jnp.float32)          # NCHW input
    # Deterministic synthetic parameters (HWIO conv weights).
    w1 = jax.random.normal(k1, (3, 3, Cin, Cout), jnp.float32) * 0.1
    b1 = jax.random.normal(kb1, (Cout,), jnp.float32) * 0.1
    w2 = jax.random.normal(k2, (3, 3, Cout, Cout), jnp.float32) * 0.1
    b2 = jax.random.normal(kb2, (Cout,), jnp.float32) * 0.1
    ws = jax.random.normal(ks, (Cin, Cout), jnp.float32) * 0.1       # 1x1 shortcut
    bs = jax.random.normal(kbs, (Cout,), jnp.float32) * 0.1

    out = standard_residual_block(x, w1, b1, w2, b2, ws, bs)
    out = jax.block_until_ready(out)

    ref = _reference(x, w1, b1, w2, b2, ws, bs)
    assert out.shape == (N, Cout, H, W), out.shape
    assert jnp.allclose(out, ref, atol=1e-4, rtol=1e-4), \
        float(jnp.max(jnp.abs(out - ref)))

    print("KERNEL_OK")
</pallas_src>

<mosaic_0001>
module attributes {stable_mosaic.version = 11 : i64} {
  func.func @_residual_block_kernel(%arg0: i32, %arg1: memref<1x20x26x4xf32, #tpu.memory_space<vmem>>, %arg2: memref<36x8xf32, #tpu.memory_space<vmem>>, %arg3: memref<1x8xf32, #tpu.memory_space<vmem>>, %arg4: memref<8x76xf32, #tpu.memory_space<vmem>>, %arg5: memref<8x1xf32, #tpu.memory_space<vmem>>, %arg6: memref<1x8x256xf32, #tpu.memory_space<vmem>>) attributes {dimension_semantics = [#tpu.dimension_semantics<parallel>], iteration_bounds = array<i64: 2>, scalar_prefetch = 0 : i64, scratch_operands = 0 : i64, tpu.core_type = #tpu.core_type<tc>, window_params = [{transform_indices = @transform_0, window_bounds = array<i64: 1, 20, 26, 4>}, {pipeline_mode = #tpu.pipeline_mode<synchronous>, transform_indices = @transform_1, window_bounds = array<i64: 36, 8>}, {pipeline_mode = #tpu.pipeline_mode<synchronous>, transform_indices = @transform_2, window_bounds = array<i64: 1, 8>}, {pipeline_mode = #tpu.pipeline_mode<synchronous>, transform_indices = @transform_3, window_bounds = array<i64: 8, 76>}, {pipeline_mode = #tpu.pipeline_mode<synchronous>, transform_indices = @transform_4, window_bounds = array<i64: 8, 1>}, {transform_indices = @transform_5, window_bounds = array<i64: 1, 8, 256>}]} {
    %c0 = arith.constant 0 : index
    %c0_0 = arith.constant 0 : index
    %c0_1 = arith.constant 0 : index
    %c0_2 = arith.constant 0 : index
    %0 = vector.load %arg1[%c0, %c0_0, %c0_1, %c0_2] : memref<1x20x26x4xf32, #tpu.memory_space<vmem>>, vector<1x20x26x4xf32>
    %1 = vector.shape_cast %0 : vector<1x20x26x4xf32> to vector<20x26x4xf32>
    %2 = vector.extract_strided_slice %1 {offsets = [0, 0, 0], sizes = [18, 24, 4], strides = [1, 1, 1]} : vector<20x26x4xf32> to vector<18x24x4xf32>
    %3 = vector.extract_strided_slice %1 {offsets = [0, 1, 0], sizes = [18, 24, 4], strides = [1, 1, 1]} : vector<20x26x4xf32> to vector<18x24x4xf32>
    %4 = vector.extract_strided_slice %1 {offsets = [0, 2, 0], sizes = [18, 24, 4], strides = [1, 1, 1]} : vector<20x26x4xf32> to vector<18x24x4xf32>
    %5 = vector.extract_strided_slice %1 {offsets = [1, 0, 0], sizes = [18, 24, 4], strides = [1, 1, 1]} : vector<20x26x4xf32> to vector<18x24x4xf32>
    %6 = vector.extract_strided_slice %1 {offsets = [1, 1, 0], sizes = [18, 24, 4], strides = [1, 1, 1]} : vector<20x26x4xf32> to vector<18x24x4xf32>
    %7 = vector.extract_strided_slice %1 {offsets = [1, 2, 0], sizes = [18, 24, 4], strides = [1, 1, 1]} : vector<20x26x4xf32> to vector<18x24x4xf32>
    %8 = vector.extract_strided_slice %1 {offsets = [2, 0, 0], sizes = [18, 24, 4], strides = [1, 1, 1]} : vector<20x26x4xf32> to vector<18x24x4xf32>
    %9 = vector.extract_strided_slice %1 {offsets = [2, 1, 0], sizes = [18, 24, 4], strides = [1, 1, 1]} : vector<20x26x4xf32> to vector<18x24x4xf32>
    %10 = vector.extract_strided_slice %1 {offsets = [2, 2, 0], sizes = [18, 24, 4], strides = [1, 1, 1]} : vector<20x26x4xf32> to vector<18x24x4xf32>
    %11 = tpu.concatenate %2, %3, %4, %5, %6, %7, %8, %9, %10 in 2 : vector<18x24x4xf32>, vector<18x24x4xf32>, vector<18x24x4xf32>, vector<18x24x4xf32>, vector<18x24x4xf32>, vector<18x24x4xf32>, vector<18x24x4xf32>, vector<18x24x4xf32>, vector<18x24x4xf32> -> vector<18x24x36xf32>
    %12 = vector.shape_cast %11 : vector<18x24x36xf32> to vector<432x36xf32>
    %c0_3 = arith.constant 0 : index
    %c0_4 = arith.constant 0 : index
    %13 = vector.load %arg2[%c0_3, %c0_4] : memref<36x8xf32, #tpu.memory_space<vmem>>, vector<36x8xf32>
    %cst = arith.constant dense<0.000000e+00> : vector<432x8xf32>
    %14 = tpu.matmul %12, %13, %cst {dimension_numbers = #tpu.dot_dimension_numbers<[1], [0], [0], [1], [0, 0, 1, 1], [], []>} : vector<432x36xf32>, vector<36x8xf32>, vector<432x8xf32> -> vector<432x8xf32>
    %c0_5 = arith.constant 0 : index
    %c0_6 = arith.constant 0 : index
    %15 = vector.load %arg3[%c0_5, %c0_6] : memref<1x8xf32, #tpu.memory_space<vmem>>, vector<1x8xf32>
    %16 = vector.broadcast %15 : vector<1x8xf32> to vector<432x8xf32>
    %17 = arith.addf %14, %16 : vector<432x8xf32>
    %cst_7 = arith.constant 0.000000e+00 : f32
    %18 = vector.broadcast %cst_7 : f32 to vector<432x8xf32>
    %19 = arith.maximumf %17, %18 : vector<432x8xf32>
    %20 = vector.shape_cast %19 : vector<432x8xf32> to vector<18x24x8xf32>
    %21 = tpu.iota {dimensions = array<i32: 0>} : vector<18x24x8xi32>
    %22 = tpu.iota {dimensions = array<i32: 1>} : vector<18x24x8xi32>
    %c1_i32 = arith.constant 1 : i32
    %23 = vector.broadcast %c1_i32 : i32 to vector<18x24x8xi32>
    %24 = arith.cmpi sge, %21, %23 : vector<18x24x8xi32>
    %c16_i32 = arith.constant 16 : i32
    %25 = vector.broadcast %c16_i32 : i32 to vector<18x24x8xi32>
    %26 = arith.cmpi sle, %21, %25 : vector<18x24x8xi32>
    %27 = arith.andi %24, %26 : vector<18x24x8xi1>
    %c1_i32_8 = arith.constant 1 : i32
    %28 = vector.broadcast %c1_i32_8 : i32 to vector<18x24x8xi32>
    %29 = arith.cmpi sge, %22, %28 : vector<18x24x8xi32>
    %30 = arith.andi %27, %29 : vector<18x24x8xi1>
    %c16_i32_9 = arith.constant 16 : i32
    %31 = vector.broadcast %c16_i32_9 : i32 to vector<18x24x8xi32>
    %32 = arith.cmpi sle, %22, %31 : vector<18x24x8xi32>
    %33 = arith.andi %30, %32 : vector<18x24x8xi1>
    %cst_10 = arith.constant 0.000000e+00 : f32
    %34 = vector.broadcast %cst_10 : f32 to vector<18x24x8xf32>
    %35 = arith.select %33, %20, %34 : vector<18x24x8xi1>, vector<18x24x8xf32>
    %36 = vector.extract_strided_slice %35 {offsets = [0, 0, 0], sizes = [16, 16, 8], strides = [1, 1, 1]} : vector<18x24x8xf32> to vector<16x16x8xf32>
    %37 = vector.extract_strided_slice %35 {offsets = [0, 1, 0], sizes = [16, 16, 8], strides = [1, 1, 1]} : vector<18x24x8xf32> to vector<16x16x8xf32>
    %38 = vector.extract_strided_slice %35 {offsets = [0, 2, 0], sizes = [16, 16, 8], strides = [1, 1, 1]} : vector<18x24x8xf32> to vector<16x16x8xf32>
    %39 = vector.extract_strided_slice %35 {offsets = [1, 0, 0], sizes = [16, 16, 8], strides = [1, 1, 1]} : vector<18x24x8xf32> to vector<16x16x8xf32>
    %40 = vector.extract_strided_slice %35 {offsets = [1, 1, 0], sizes = [16, 16, 8], strides = [1, 1, 1]} : vector<18x24x8xf32> to vector<16x16x8xf32>
    %41 = vector.extract_strided_slice %35 {offsets = [1, 2, 0], sizes = [16, 16, 8], strides = [1, 1, 1]} : vector<18x24x8xf32> to vector<16x16x8xf32>
    %42 = vector.extract_strided_slice %35 {offsets = [2, 0, 0], sizes = [16, 16, 8], strides = [1, 1, 1]} : vector<18x24x8xf32> to vector<16x16x8xf32>
    %43 = vector.extract_strided_slice %35 {offsets = [2, 1, 0], sizes = [16, 16, 8], strides = [1, 1, 1]} : vector<18x24x8xf32> to vector<16x16x8xf32>
    %44 = vector.extract_strided_slice %35 {offsets = [2, 2, 0], sizes = [16, 16, 8], strides = [1, 1, 1]} : vector<18x24x8xf32> to vector<16x16x8xf32>
    %45 = vector.extract_strided_slice %1 {offsets = [2, 2, 0], sizes = [16, 16, 4], strides = [1, 1, 1]} : vector<20x26x4xf32> to vector<16x16x4xf32>
    %46 = tpu.concatenate %36, %37, %38, %39, %40, %41, %42, %43, %44, %45 in 2 : vector<16x16x8xf32>, vector<16x16x8xf32>, vector<16x16x8xf32>, vector<16x16x8xf32>, vector<16x16x8xf32>, vector<16x16x8xf32>, vector<16x16x8xf32>, vector<16x16x8xf32>, vector<16x16x8xf32>, vector<16x16x4xf32> -> vector<16x16x76xf32>
    %47 = vector.shape_cast %46 : vector<16x16x76xf32> to vector<256x76xf32>
    %c0_11 = arith.constant 0 : index
    %c0_12 = arith.constant 0 : index
    %48 = vector.load %arg4[%c0_11, %c0_12] : memref<8x76xf32, #tpu.memory_space<vmem>>, vector<8x76xf32>
    %cst_13 = arith.constant dense<0.000000e+00> : vector<8x256xf32>
    %49 = tpu.matmul %48, %47, %cst_13 {dimension_numbers = #tpu.dot_dimension_numbers<[1], [1], [0], [0], [0, 0, 1, 0], [], []>} : vector<8x76xf32>, vector<256x76xf32>, vector<8x256xf32> -> vector<8x256xf32>
    %c0_14 = arith.constant 0 : index
    %c0_15 = arith.constant 0 : index
    %50 = vector.load %arg5[%c0_14, %c0_15] : memref<8x1xf32, #tpu.memory_space<vmem>>, vector<8x1xf32>
    %51 = vector.broadcast %50 : vector<8x1xf32> to vector<8x256xf32>
    %52 = arith.addf %49, %51 : vector<8x256xf32>
    %cst_16 = arith.constant 0.000000e+00 : f32
    %53 = vector.broadcast %cst_16 : f32 to vector<8x256xf32>
    %54 = arith.maximumf %52, %53 : vector<8x256xf32>
    %c0_17 = arith.constant 0 : index
    %c0_18 = arith.constant 0 : index
    %c0_19 = arith.constant 0 : index
    %55 = vector.load %arg6[%c0_17, %c0_18, %c0_19] : memref<1x8x256xf32, #tpu.memory_space<vmem>>, vector<1x8x256xf32>
    %56 = vector.shape_cast %55 : vector<1x8x256xf32> to vector<8x256xf32>
    %57 = vector.shape_cast %54 : vector<8x256xf32> to vector<1x8x256xf32>
    tpu.vector_store %arg6[%c0_17, %c0_18, %c0_19], %57 {strides = array<i32>} : memref<1x8x256xf32, #tpu.memory_space<vmem>>, vector<1x8x256xf32>,
    return
  }
  func.func @transform_0(%arg0: i32) -> (i32, i32, i32, i32) {
    %c0_i32 = arith.constant 0 : i32
    %c0_i32_0 = arith.constant 0 : i32
    %c0_i32_1 = arith.constant 0 : i32
    %c0_i32_2 = arith.constant 0 : i32
    return %arg0, %c0_i32, %c0_i32_0, %c0_i32_1 : i32, i32, i32, i32
  }
  func.func @transform_1(%arg0: i32) -> (i32, i32) {
    %c0_i32 = arith.constant 0 : i32
    %c0_i32_0 = arith.constant 0 : i32
    %c0_i32_1 = arith.constant 0 : i32
    return %c0_i32, %c0_i32_0 : i32, i32
  }
  func.func @transform_2(%arg0: i32) -> (i32, i32) {
    %c0_i32 = arith.constant 0 : i32
    %c0_i32_0 = arith.constant 0 : i32
    %c0_i32_1 = arith.constant 0 : i32
    return %c0_i32, %c0_i32_0 : i32, i32
  }
  func.func @transform_3(%arg0: i32) -> (i32, i32) {
    %c0_i32 = arith.constant 0 : i32
    %c0_i32_0 = arith.constant 0 : i32
    %c0_i32_1 = arith.constant 0 : i32
    return %c0_i32, %c0_i32_0 : i32, i32
  }
  func.func @transform_4(%arg0: i32) -> (i32, i32) {
    %c0_i32 = arith.constant 0 : i32
    %c0_i32_0 = arith.constant 0 : i32
    %c0_i32_1 = arith.constant 0 : i32
    return %c0_i32, %c0_i32_0 : i32, i32
  }
  func.func @transform_5(%arg0: i32) -> (i32, i32, i32) {
    %c0_i32 = arith.constant 0 : i32
    %c0_i32_0 = arith.constant 0 : i32
    %c0_i32_1 = arith.constant 0 : i32
    return %arg0, %c0_i32, %c0_i32_0 : i32, i32, i32
  }
}

</mosaic_0001>

<llo_original>
// kernel: standard_residual_block.1
$region0: #{standard_residual_block.1}
  #allocation0 [shape = 'u32[]', space=smem, size = 0x4, offset = 0x4, fixed_abs, tag = 'smem constant byte address 0x4 - core index']
  #allocation1 [shape = 'u32[144,128]{1,0:T(1,128)}', space=vmem, size = 0x12000, scoped, tag = 'internal scratch']
  %s0 = inlined_call_operand.vmem [shape: f32[2,20,26,4], index: 0, kind: input, shape index: {}]
  %s1 = inlined_call_operand.vmem [shape: f32[36,8], index: 1, kind: input, shape index: {}]
  %s2 = inlined_call_operand.vmem [shape: f32[1,8], index: 2, kind: input, shape index: {}]
  %s3 = inlined_call_operand.vmem [shape: f32[8,76], index: 3, kind: input, shape index: {}]
  %s4 = inlined_call_operand.vmem [shape: f32[8,1], index: 4, kind: input, shape index: {}]
  %s5 = inlined_call_operand.vmem [shape: f32[2,8,256], index: 5, kind: output, shape index: {}]
  %s6 = sld [smem:[#allocation0]]
  $region53: #{standard_residual_block.1} parent=0
    _
  %s8 = ssub.s32 1, %s6
  %s9 = scalar_select 0, %s8, %s6
  loop: start=0, step=1, limit=4
  $region2: #{standard_residual_block.1} parent=0 // loop_pre_header
    _
  $region3: #{standard_residual_block.1} parent=0 // loop_header
    %s11 = sphi 0, %s15
    %p12 = scmp.ge.s32.totalorder %s11, 4
    %s21 = sphi 0, %s23
    %s24 = sphi 0, %s21
    %s25 = sphi 0, %s24
    %s41 = sphi 0, %s25
    %s45 = sphi 0, %s45
    %s47 = sphi 0, %s45
    %s48 = sphi 0, %s47
    %s62 = sphi 0, %s48
    %s66 = sphi 0, %s66
    %s68 = sphi 0, %s66
    %s69 = sphi 0, %s68
    %s83 = sphi 0, %s69
    %s87 = sphi 0, %s87
    %s89 = sphi 0, %s87
    %s90 = sphi 0, %s89
    %s104 = sphi 0, %s90
    %s108 = sphi 0, %s108
    %s110 = sphi 0, %s108
    %s111 = sphi 0, %s110
    %s125 = sphi 0, %s111
    %s131 = sphi 0, %s133
    %s134 = sphi 0, %s131
    %s135 = sphi 0, %s134
    %s151 = sphi 0, %s135
  $region4: #{standard_residual_block.1} parent=0 // loop_header_branch
    %14 = sbr.rel (%p12) target = $region8
  $region5: #{standard_residual_block.1} parent=0 // loop_body
    %s16 = ssub.s32 %s11, 1
    %s17 = ssub.s32 %s11, 2
    %s18 = sadd.s32 %s11, 1
    %s19 = ssub.s32 %s11, %s18
    %p20 = scmp.eq.s32.totalorder %s19, 0
    %s22 = sadd.s32 %s21, 1
    %s23 = scalar_select %p20, %s21, %s22
    %p26 = pneg %p20
    %p27 = scmp.eq.s32.totalorder %s11, 1
    %p28 = por %p26, %p27
    %p29 = scmp.ne.s32.totalorder %s21, %s24
    %p30 = scmp.eq.s32.totalorder %s11, 0
    %p31 = por %p29, %p30
    %p32 = scmp.ne.s32.totalorder %s21, %s24
    %p33 = scmp.eq.s32.totalorder %s16, 1
    %p34 = por %p32, %p33
    %p35 = scmp.ne.s32.totalorder %s24, %s25
    %p36 = scmp.eq.s32.totalorder %s16, 0
    %p37 = por %p35, %p36
    %p38 = scmp.ne.s32.totalorder %s24, %s25
    %p39 = scmp.eq.s32.totalorder %s17, 1
    %p40 = por %p38, %p39
    %p42 = scmp.ne.s32.totalorder %s25, %s41
    %p43 = scmp.eq.s32.totalorder %s17, 0
    %p44 = por %p42, %p43
    %s46 = sadd.s32 %s45, 1
    %p49 = scmp.eq.s32.totalorder %s11, 1
    %p50 = scmp.ne.s32.totalorder %s45, %s47
    %p51 = scmp.eq.s32.totalorder %s11, 0
    %p52 = por %p50, %p51
    %p53 = scmp.ne.s32.totalorder %s45, %s47
    %p54 = scmp.eq.s32.totalorder %s16, 1
    %p55 = por %p53, %p54
    %p56 = scmp.ne.s32.totalorder %s47, %s48
    %p57 = scmp.eq.s32.totalorder %s16, 0
    %p58 = por %p56, %p57
    %p59 = scmp.ne.s32.totalorder %s47, %s48
    %p60 = scmp.eq.s32.totalorder %s17, 1
    %p61 = por %p59, %p60
    %p63 = scmp.ne.s32.totalorder %s48, %s62
    %p64 = scmp.eq.s32.totalorder %s17, 0
    %p65 = por %p63, %p64
    %s67 = sadd.s32 %s66, 1
    %p70 = scmp.eq.s32.totalorder %s11, 1
    %p71 = scmp.ne.s32.totalorder %s66, %s68
    %p72 = scmp.eq.s32.totalorder %s11, 0
    %p73 = por %p71, %p72
    %p74 = scmp.ne.s32.totalorder %s66, %s68
    %p75 = scmp.eq.s32.totalorder %s16, 1
    %p76 = por %p74, %p75
    %p77 = scmp.ne.s32.totalorder %s68, %s69
    %p78 = scmp.eq.s32.totalorder %s16, 0
    %p79 = por %p77, %p78
    %p80 = scmp.ne.s32.totalorder %s68, %s69
    %p81 = scmp.eq.s32.totalorder %s17, 1
    %p82 = por %p80, %p81
    %p84 = scmp.ne.s32.totalorder %s69, %s83
    %p85 = scmp.eq.s32.totalorder %s17, 0
    %p86 = por %p84, %p85
    %s88 = sadd.s32 %s87, 1
    %p91 = scmp.eq.s32.totalorder %s11, 1
    %p92 = scmp.ne.s32.totalorder %s87, %s89
    %p93 = scmp.eq.s32.totalorder %s11, 0
    %p94 = por %p92, %p93
    %p95 = scmp.ne.s32.totalorder %s87, %s89
    %p96 = scmp.eq.s32.totalorder %s16, 1
    %p97 = por %p95, %p96
    %p98 = scmp.ne.s32.totalorder %s89, %s90
    %p99 = scmp.eq.s32.totalorder %s16, 0
    %p100 = por %p98, %p99
    %p101 = scmp.ne.s32.totalorder %s89, %s90
    %p102 = scmp.eq.s32.totalorder %s17, 1
    %p103 = por %p101, %p102
    %p105 = scmp.ne.s32.totalorder %s90, %s104
    %p106 = scmp.eq.s32.totalorder %s17, 0
    %p107 = por %p105, %p106
    %s109 = sadd.s32 %s108, 1
    %p112 = scmp.eq.s32.totalorder %s11, 1
    %p113 = scmp.ne.s32.totalorder %s108, %s110
    %p114 = scmp.eq.s32.totalorder %s11, 0
    %p115 = por %p113, %p114
    %p116 = scmp.ne.s32.totalorder %s108, %s110
    %p117 = scmp.eq.s32.totalorder %s16, 1
    %p118 = por %p116, %p117
    %p119 = scmp.ne.s32.totalorder %s110, %s111
    %p120 = scmp.eq.s32.totalorder %s16, 0
    %p121 = por %p119, %p120
    %p122 = scmp.ne.s32.totalorder %s110, %s111
    %p123 = scmp.eq.s32.totalorder %s17, 1
    %p124 = por %p122, %p123
    %p126 = scmp.ne.s32.totalorder %s111, %s125
    %p127 = scmp.eq.s32.totalorder %s17, 0
    %p128 = por %p126, %p127
    %s129 = ssub.s32 %s11, %s18
    %p130 = scmp.eq.s32.totalorder %s129, 0
    %s132 = sadd.s32 %s131, 1
    %s133 = scalar_select %p130, %s131, %s132
    %p136 = pneg %p130
    %p137 = scmp.eq.s32.totalorder %s11, 1
    %p138 = por %p136, %p137
    %p139 = scmp.ne.s32.totalorder %s131, %s134
    %p140 = scmp.eq.s32.totalorder %s11, 0
    %p141 = por %p139, %p140
    %p142 = scmp.ne.s32.totalorder %s131, %s134
    %p143 = scmp.eq.s32.totalorder %s16, 1
    %p144 = por %p142, %p143
    %p145 = scmp.ne.s32.totalorder %s134, %s135
    %p146 = scmp.eq.s32.totalorder %s16, 0
    %p147 = por %p145, %p146
    %p148 = scmp.ne.s32.totalorder %s134, %s135
    %p149 = scmp.eq.s32.totalorder %s17, 1
    %p150 = por %p148, %p149
    %p152 = scmp.ne.s32.totalorder %s135, %s151
    %p153 = scmp.eq.s32.totalorder %s17, 0
    %p154 = por %p152, %p153
    %p155 = scmp.le.s32.totalorder 1, %s11
    %p156 = scmp.lt.s32.totalorder %s11, 3
    %p157 = pnand %p155, %p156
    %p158 = pneg %p157
    // Predicated region
    $region9: #{standard_residual_block.1} parent=5 // pred_check
      _
    $region10: #{standard_residual_block.1} parent=5 // pred_check_branch
      %160 = sbr.rel (%p157) target = $region12
    $region11: #{standard_residual_block.1} parent=5 // pred_region
      %s161 = ssub.s32 %s11, 1
      // Predicated region
      $region13: #{standard_residual_block.1} parent=11 // pred_check
        %p162 = pneg %p58
      $region14: #{standard_residual_block.1} parent=11 // pred_check_branch
        %164 = sbr.rel (%p162) target = $region16
      $region15: #{standard_residual_block.1} parent=11 // pred_region
        _
      $region16: #{standard_residual_block.1} parent=11 // pred_fallthru
        _
      // Predicated region
      $region17: #{standard_residual_block.1} parent=11 // pred_check
        %p165 = pneg %p79
      $region18: #{standard_residual_block.1} parent=11 // pred_check_branch
        %167 = sbr.rel (%p165) target = $region20
      $region19: #{standard_residual_block.1} parent=11 // pred_region
        _
      $region20: #{standard_residual_block.1} parent=11 // pred_fallthru
        _
      // Predicated region
      $region21: #{standard_residual_block.1} parent=11 // pred_check
        %p168 = pneg %p100
      $region22: #{standard_residual_block.1} parent=11 // pred_check_branch
        %170 = sbr.rel (%p168) target = $region24
      $region23: #{standard_residual_block.1} parent=11 // pred_region
        _
      $region24: #{standard_residual_block.1} parent=11 // pred_fallthru
        _
      // Predicated region
      $region25: #{standard_residual_block.1} parent=11 // pred_check
        %p171 = pneg %p121
      $region26: #{standard_residual_block.1} parent=11 // pred_check_branch
        %173 = sbr.rel (%p171) target = $region28
      $region27: #{standard_residual_block.1} parent=11 // pred_region
        _
      $region28: #{standard_residual_block.1} parent=11 // pred_fallthru
        _
    $region12: #{standard_residual_block.1} parent=5 // pred_fallthru
      _
    %p174 = scmp.lt.s32.totalorder %s11, 2
    // Predicated region
    $region29: #{standard_residual_block.1} parent=5 // pred_check
      %p175 = pneg %p174
    $region30: #{standard_residual_block.1} parent=5 // pred_check_branch
      %177 = sbr.rel (%p175) target = $region32
    $region31: #{standard_residual_block.1} parent=5 // pred_region
      // Predicated region
      $region33: #{standard_residual_block.1} parent=31 // pred_check
        %p178 = pneg %p31
      $region34: #{standard_residual_block.1} parent=31 // pred_check_branch
        %180 = sbr.rel (%p178) target = $region36
      $region35: #{standard_residual_block.1} parent=31 // pred_region
        %p181 = scmp.lt.s32.totalorder %s11, 1
        %s182 = scalar_select %p181, %s11, 1
        %s183 = smul.addr %s182, 80
        %s184 = smul.addr %s183, 8
        %s185 = scalar_lea.vmem %s0, %s184
      $region36: #{standard_residual_block.1} parent=31 // pred_fallthru
        _
    $region32: #{standard_residual_block.1} parent=5 // pred_fallthru
      _
    %p186 = scmp.le.s32.totalorder 1, %s11
    %p187 = scmp.lt.s32.totalorder %s11, 3
    %p188 = pnand %p186, %p187
    %p189 = pneg %p188
    // Predicated region
    $region37: #{standard_residual_block.1} parent=5 // pred_check
      _
    $region38: #{standard_residual_block.1} parent=5 // pred_check_branch
      %191 = sbr.rel (%p188) target = $region40
    $region39: #{standard_residual_block.1} parent=5 // pred_region
      %s192 = ssub.s32 %s11, 1
      %p193 = scmp.lt.s32.totalorder %s16, 1
      %s194 = scalar_select %p193, %s16, 1
      %s195 = smul.addr %s194, 80
      %s196 = smul.addr %s195, 8
      %s197 = scalar_lea.vmem %s0, %s196
      %p198 = pneg %p37
      %p199 = pneg %p34
      %p200 = pneg %p58
      %p201 = pneg %p55
      %p202 = pneg %p79
      %p203 = pneg %p76
      %p204 = pneg %p100
      %p205 = pneg %p97
      %p206 = pneg %p121
      %p207 = pneg %p118
      %p208 = pneg %p147
      %p209 = pneg %p144
      %p210 = scmp.lt.s32.totalorder %s16, 1
      %s211 = scalar_select %p210, %s16, 1
      %s212 = smul.addr %s211, 2
      %s213 = smul.addr %s212, 8
      %s214 = scalar_lea.vmem %s5, %s213
      %p215 = scmp.lt.s32.totalorder %s16, 1
      %s216 = scalar_select %p215, %s16, 1
      %s217 = smul.addr %s216, 80
      %s218 = smul.addr %s217, 8
      %s219 = scalar_lea.vmem %s0, %s218
      %p220 = scmp.lt.s32.totalorder %s16, 1
      %s221 = scalar_select %p220, %s16, 1
      %s222 = smul.addr %s221, 2
      %s223 = smul.addr %s222, 8
      %s224 = scalar_lea.vmem %s5, %s223
      %v225 = vld [vmem:[%s219] sm:$0xff]
      %v226 = vld [vmem:[%s219 + $0x8] sm:$0xff]
      %v227 = vld [vmem:[%s219 + $0x10] sm:$0xff]
      %v228 = vld [vmem:[%s219 + $0x18] sm:$0x3]
      %v229 = vld [vmem:[%s219 + $0x20] sm:$0xff]
      %v230 = vld [vmem:[%s219 + $0x28] sm:$0xff]
      %v231 = vld [vmem:[%s219 + $0x30] sm:$0xff]
      %v232 = vld [vmem:[%s219 + $0x38] sm:$0x3]
      %v233 = vld [vmem:[%s219 + $0x40] sm:$0xff]
      %v234 = vld [vmem:[%s219 + $0x48] sm:$0xff]
      %v235 = vld [vmem:[%s219 + $0x50] sm:$0xff]
      %v236 = vld [vmem:[%s219 + $0x58] sm:$0x3]
      %v237 = vld [vmem:[%s219 + $0x60] sm:$0xff]
      %v238 = vld [vmem:[%s219 + $0x68] sm:$0xff]
      %v239 = vld [vmem:[%s219 + $0x70] sm:$0xff]
      %v240 = vld [vmem:[%s219 + $0x78] sm:$0x3]
      %v241 = vld [vmem:[%s219 + $0x80] sm:$0xff]
      %v242 = vld [vmem:[%s219 + $0x88] sm:$0xff]
      %v243 = vld [vmem:[%s219 + $0x90] sm:$0xff]
      %v244 = vld [vmem:[%s219 + $0x98] sm:$0x3]
      %v245 = vld [vmem:[%s219 + $0xa0] sm:$0xff]
      %v246 = vld [vmem:[%s219 + $0xa8] sm:$0xff]
      %v247 = vld [vmem:[%s219 + $0xb0] sm:$0xff]
      %v248 = vld [vmem:[%s219 + $0xb8] sm:$0x3]
      %v249 = vld [vmem:[%s219 + $0xc0] sm:$0xff]
      %v250 = vld [vmem:[%s219 + $0xc8] sm:$0xff]
      %v251 = vld [vmem:[%s219 + $0xd0] sm:$0xff]
      %v252 = vld [vmem:[%s219 + $0xd8] sm:$0x3]
      %v253 = vld [vmem:[%s219 + $0xe0] sm:$0xff]
      %v254 = vld [vmem:[%s219 + $0xe8] sm:$0xff]
      %v255 = vld [vmem:[%s219 + $0xf0] sm:$0xff]
      %v256 = vld [vmem:[%s219 + $0xf8] sm:$0x3]
      %v257 = vld [vmem:[%s219 + $0x100] sm:$0xff]
      %v258 = vld [vmem:[%s219 + $0x108] sm:$0xff]
      %v259 = vld [vmem:[%s219 + $0x110] sm:$0xff]
      %v260 = vld [vmem:[%s219 + $0x118] sm:$0x3]
      %v261 = vld [vmem:[%s219 + $0x120] sm:$0xff]
      %v262 = vld [vmem:[%s219 + $0x128] sm:$0xff]
      %v263 = vld [vmem:[%s219 + $0x130] sm:$0xff]
      %v264 = vld [vmem:[%s219 + $0x138] sm:$0x3]
      %v265 = vld [vmem:[%s219 + $0x140] sm:$0xff]
      %v266 = vld [vmem:[%s219 + $0x148] sm:$0xff]
      %v267 = vld [vmem:[%s219 + $0x150] sm:$0xff]
      %v268 = vld [vmem:[%s219 + $0x158] sm:$0x3]
      %v269 = vld [vmem:[%s219 + $0x160] sm:$0xff]
      %v270 = vld [vmem:[%s219 + $0x168] sm:$0xff]
      %v271 = vld [vmem:[%s219 + $0x170] sm:$0xff]
      %v272 = vld [vmem:[%s219 + $0x178] sm:$0x3]
      %v273 = vld [vmem:[%s219 + $0x180] sm:$0xff]
      %v274 = vld [vmem:[%s219 + $0x188] sm:$0xff]
      %v275 = vld [vmem:[%s219 + $0x190] sm:$0xff]
      %v276 = vld [vmem:[%s219 + $0x198] sm:$0x3]
      %v277 = vld [vmem:[%s219 + $0x1a0] sm:$0xff]
      %v278 = vld [vmem:[%s219 + $0x1a8] sm:$0xff]
      %v279 = vld [vmem:[%s219 + $0x1b0] sm:$0xff]
      %v280 = vld [vmem:[%s219 + $0x1b8] sm:$0x3]
      %v281 = vld [vmem:[%s219 + $0x1c0] sm:$0xff]
      %v282 = vld [vmem:[%s219 + $0x1c8] sm:$0xff]
      %v283 = vld [vmem:[%s219 + $0x1d0] sm:$0xff]
      %v284 = vld [vmem:[%s219 + $0x1d8] sm:$0x3]
      %v285 = vld [vmem:[%s219 + $0x1e0] sm:$0xff]
      %v286 = vld [vmem:[%s219 + $0x1e8] sm:$0xff]
      %v287 = vld [vmem:[%s219 + $0x1f0] sm:$0xff]
      %v288 = vld [vmem:[%s219 + $0x1f8] sm:$0x3]
      %v289 = vld [vmem:[%s219 + $0x200] sm:$0xff]
      %v290 = vld [vmem:[%s219 + $0x208] sm:$0xff]
      %v291 = vld [vmem:[%s219 + $0x210] sm:$0xff]
      %v292 = vld [vmem:[%s219 + $0x218] sm:$0x3]
      %v293 = vld [vmem:[%s219 + $0x220] sm:$0xff]
      %v294 = vld [vmem:[%s219 + $0x228] sm:$0xff]
      %v295 = vld [vmem:[%s219 + $0x230] sm:$0xff]
      %v296 = vld [vmem:[%s219 + $0x238] sm:$0x3]
      %v297 = vld [vmem:[%s219 + $0x240] sm:$0xff]
      %v298 = vld [vmem:[%s219 + $0x248] sm:$0xff]
      %v299 = vld [vmem:[%s219 + $0x250] sm:$0xff]
      %v300 = vld [vmem:[%s219 + $0x258] sm:$0x3]
      %v301 = vld [vmem:[%s219 + $0x260] sm:$0xff]
      %v302 = vld [vmem:[%s219 + $0x268] sm:$0xff]
      %v303 = vld [vmem:[%s219 + $0x270] sm:$0xff]
      %v304 = vld [vmem:[%s219 + $0x278] sm:$0x3]
      %vm377 = vcmask 1046528
      %v378 = vrot.slane %v225, 1
      %v379 = vrot.slane %v226, 1
      %v380 = vsel %vm377, %v378, %v379
      %v381 = vrot.slane %v227, 1
      %v382 = vsel %vm377, %v379, %v381
      %v383 = vrot.slane %v228, 1
      %v384 = vsel %vm377, %v381, %v383
      %v385 = vrot.slane %v229, 1
      %v386 = vrot.slane %v230, 1
      %v387 = vsel %vm377, %v385, %v386
      %v388 = vrot.slane %v231, 1
      %v389 = vsel %vm377, %v386, %v388
      %v390 = vrot.slane %v232, 1
      %v391 = vsel %vm377, %v388, %v390
      %v392 = vrot.slane %v233, 1
      %v393 = vrot.slane %v234, 1
      %v394 = vsel %vm377, %v392, %v393
      %v395 = vrot.slane %v235, 1
      %v396 = vsel %vm377, %v393, %v395
      %v397 = vrot.slane %v236, 1
      %v398 = vsel %vm377, %v395, %v397
      %v399 = vrot.slane %v237, 1
      %v400 = vrot.slane %v238, 1
      %v401 = vsel %vm377, %v399, %v400
      %v402 = vrot.slane %v239, 1
      %v403 = vsel %vm377, %v400, %v402
      %v404 = vrot.slane %v240, 1
      %v405 = vsel %vm377, %v402, %v404
      %v406 = vrot.slane %v241, 1
      %v407 = vrot.slane %v242, 1
      %v408 = vsel %vm377, %v406, %v407
      %v409 = vrot.slane %v243, 1
      %v410 = vsel %vm377, %v407, %v409
      %v411 = vrot.slane %v244, 1
      %v412 = vsel %vm377, %v409, %v411
      %v413 = vrot.slane %v245, 1
      %v414 = vrot.slane %v246, 1
      %v415 = vsel %vm377, %v413, %v414
      %v416 = vrot.slane %v247, 1
      %v417 = vsel %vm377, %v414, %v416
      %v418 = vrot.slane %v248, 1
      %v419 = vsel %vm377, %v416, %v418
      %v420 = vrot.slane %v249, 1
      %v421 = vrot.slane %v250, 1
      %v422 = vsel %vm377, %v420, %v421
      %v423 = vrot.slane %v251, 1
      %v424 = vsel %vm377, %v421, %v423
      %v425 = vrot.slane %v252, 1
      %v426 = vsel %vm377, %v423, %v425
      %v427 = vrot.slane %v253, 1
      %v428 = vrot.slane %v254, 1
      %v429 = vsel %vm377, %v427, %v428
      %v430 = vrot.slane %v255, 1
      %v431 = vsel %vm377, %v428, %v430
      %v432 = vrot.slane %v256, 1
      %v433 = vsel %vm377, %v430, %v432
      %v434 = vrot.slane %v257, 1
      %v435 = vrot.slane %v258, 1
      %v436 = vsel %vm377, %v434, %v435
      %v437 = vrot.slane %v259, 1
      %v438 = vsel %vm377, %v435, %v437
      %v439 = vrot.slane %v260, 1
      %v440 = vsel %vm377, %v437, %v439
      %v441 = vrot.slane %v261, 1
      %v442 = vrot.slane %v262, 1
      %v443 = vsel %vm377, %v441, %v442
      %v444 = vrot.slane %v263, 1
      %v445 = vsel %vm377, %v442, %v444
      %v446 = vrot.slane %v264, 1
      %v447 = vsel %vm377, %v444, %v446
      %v448 = vrot.slane %v265, 1
      %v449 = vrot.slane %v266, 1
      %v450 = vsel %vm377, %v448, %v449
      %v451 = vrot.slane %v267, 1
      %v452 = vsel %vm377, %v449, %v451
      %v453 = vrot.slane %v268, 1
      %v454 = vsel %vm377, %v451, %v453
      %v455 = vrot.slane %v269, 1
      %v456 = vrot.slane %v270, 1
      %v457 = vsel %vm377, %v455, %v456
      %v458 = vrot.slane %v271, 1
      %v459 = vsel %vm377, %v456, %v458
      %v460 = vrot.slane %v272, 1
      %v461 = vsel %vm377, %v458, %v460
      %v462 = vrot.slane %v273, 1
      %v463 = vrot.slane %v274, 1
      %v464 = vsel %vm377, %v462, %v463
      %v465 = vrot.slane %v275, 1
      %v466 = vsel %vm377, %v463, %v465
      %v467 = vrot.slane %v276, 1
      %v468 = vsel %vm377, %v465, %v467
      %v469 = vrot.slane %v277, 1
      %v470 = vrot.slane %v278, 1
      %v471 = vsel %vm377, %v469, %v470
      %v472 = vrot.slane %v279, 1
      %v473 = vsel %vm377, %v470, %v472
      %v474 = vrot.slane %v280, 1
      %v475 = vsel %vm377, %v472, %v474
      %v476 = vrot.slane %v281, 1
      %v477 = vrot.slane %v282, 1
      %v478 = vsel %vm377, %v476, %v477
      %v479 = vrot.slane %v283, 1
      %v480 = vsel %vm377, %v477, %v479
      %v481 = vrot.slane %v284, 1
      %v482 = vsel %vm377, %v479, %v481
      %v483 = vrot.slane %v285, 1
      %v484 = vrot.slane %v286, 1
      %v485 = vsel %vm377, %v483, %v484
      %v486 = vrot.slane %v287, 1
      %v487 = vsel %vm377, %v484, %v486
      %v488 = vrot.slane %v288, 1
      %v489 = vsel %vm377, %v486, %v488
      %v490 = vrot.slane %v289, 1
      %v491 = vrot.slane %v290, 1
      %v492 = vsel %vm377, %v490, %v491
      %v493 = vrot.slane %v291, 1
      %v494 = vsel %vm377, %v491, %v493
      %v495 = vrot.slane %v292, 1
      %v496 = vsel %vm377, %v493, %v495
      %v497 = vrot.slane %v293, 1
      %v498 = vrot.slane %v294, 1
      %v499 = vsel %vm377, %v497, %v498
      %v500 = vrot.slane %v295, 1
      %v501 = vsel %vm377, %v498, %v500
      %v502 = vrot.slane %v296, 1
      %v503 = vsel %vm377, %v500, %v502
      %504 = vrot.lane.b32.xlu0 %v380, 4
      %v505 = vpop.permute.xlu0 %504
      %506 = vrot.lane.b32.xlu0 %v382, 4
      %v507 = vpop.permute.xlu0 %506
      %508 = vrot.lane.b32.xlu0 %v384, 4
      %v509 = vpop.permute.xlu0 %508
      %510 = vrot.lane.b32.xlu0 %v387, 4
      %v511 = vpop.permute.xlu0 %510
      %512 = vrot.lane.b32.xlu0 %v389, 4
      %v513 = vpop.permute.xlu0 %512
      %514 = vrot.lane.b32.xlu0 %v391, 4
      %v515 = vpop.permute.xlu0 %514
      %516 = vrot.lane.b32.xlu0 %v394, 4
      %v517 = vpop.permute.xlu0 %516
      %518 = vrot.lane.b32.xlu0 %v396, 4
      %v519 = vpop.permute.xlu0 %518
      %520 = vrot.lane.b32.xlu0 %v398, 4
      %v521 = vpop.permute.xlu0 %520
      %522 = vrot.lane.b32.xlu0 %v401, 4
      %v523 = vpop.permute.xlu0 %522
      %524 = vrot.lane.b32.xlu0 %v403, 4
      %v525 = vpop.permute.xlu0 %524
      %526 = vrot.lane.b32.xlu0 %v405, 4
      %v527 = vpop.permute.xlu0 %526
      %528 = vrot.lane.b32.xlu0 %v408, 4
      %v529 = vpop.permute.xlu0 %528
      %530 = vrot.lane.b32.xlu0 %v410, 4
      %v531 = vpop.permute.xlu0 %530
      %532 = vrot.lane.b32.xlu0 %v412, 4
      %v533 = vpop.permute.xlu0 %532
      %534 = vrot.lane.b32.xlu0 %v415, 4
      %v535 = vpop.permute.xlu0 %534
      %536 = vrot.lane.b32.xlu0 %v417, 4
      %v537 = vpop.permute.xlu0 %536
      %538 = vrot.lane.b32.xlu0 %v419, 4
      %v539 = vpop.permute.xlu0 %538
      %540 = vrot.lane.b32.xlu0 %v422, 4
      %v541 = vpop.permute.xlu0 %540
      %542 = vrot.lane.b32.xlu0 %v424, 4
      %v543 = vpop.permute.xlu0 %542
      %544 = vrot.lane.b32.xlu0 %v426, 4
      %v545 = vpop.permute.xlu0 %544
      %546 = vrot.lane.b32.xlu0 %v429, 4
      %v547 = vpop.permute.xlu0 %546
      %548 = vrot.lane.b32.xlu0 %v431, 4
      %v549 = vpop.permute.xlu0 %548
      %550 = vrot.lane.b32.xlu0 %v433, 4
      %v551 = vpop.permute.xlu0 %550
      %552 = vrot.lane.b32.xlu0 %v436, 4
      %v553 = vpop.permute.xlu0 %552
      %554 = vrot.lane.b32.xlu0 %v438, 4
      %v555 = vpop.permute.xlu0 %554
      %556 = vrot.lane.b32.xlu0 %v440, 4
      %v557 = vpop.permute.xlu0 %556
      %558 = vrot.lane.b32.xlu0 %v443, 4
      %v559 = vpop.permute.xlu0 %558
      %560 = vrot.lane.b32.xlu0 %v445, 4
      %v561 = vpop.permute.xlu0 %560
      %562 = vrot.lane.b32.xlu0 %v447, 4
      %v563 = vpop.permute.xlu0 %562
      %564 = vrot.lane.b32.xlu0 %v450, 4
      %v565 = vpop.permute.xlu0 %564
      %566 = vrot.lane.b32.xlu0 %v452, 4
      %v567 = vpop.permute.xlu0 %566
      %568 = vrot.lane.b32.xlu0 %v454, 4
      %v569 = vpop.permute.xlu0 %568
      %570 = vrot.lane.b32.xlu0 %v457, 4
      %v571 = vpop.permute.xlu0 %570
      %572 = vrot.lane.b32.xlu0 %v459, 4
      %v573 = vpop.permute.xlu0 %572
      %574 = vrot.lane.b32.xlu0 %v461, 4
      %v575 = vpop.permute.xlu0 %574
      %576 = vrot.lane.b32.xlu0 %v464, 4
      %v577 = vpop.permute.xlu0 %576
      %578 = vrot.lane.b32.xlu0 %v466, 4
      %v579 = vpop.permute.xlu0 %578
      %580 = vrot.lane.b32.xlu0 %v468, 4
      %v581 = vpop.permute.xlu0 %580
      %582 = vrot.lane.b32.xlu0 %v471, 4
      %v583 = vpop.permute.xlu0 %582
      %584 = vrot.lane.b32.xlu0 %v473, 4
      %v585 = vpop.permute.xlu0 %584
      %586 = vrot.lane.b32.xlu0 %v475, 4
      %v587 = vpop.permute.xlu0 %586
      %588 = vrot.lane.b32.xlu0 %v478, 4
      %v589 = vpop.permute.xlu0 %588
      %590 = vrot.lane.b32.xlu0 %v480, 4
      %v591 = vpop.permute.xlu0 %590
      %592 = vrot.lane.b32.xlu0 %v482, 4
      %v593 = vpop.permute.xlu0 %592
      %594 = vrot.lane.b32.xlu0 %v485, 4
      %v595 = vpop.permute.xlu0 %594
      %596 = vrot.lane.b32.xlu0 %v487, 4
      %v597 = vpop.permute.xlu0 %596
      %598 = vrot.lane.b32.xlu0 %v489, 4
      %v599 = vpop.permute.xlu0 %598
      %600 = vrot.lane.b32.xlu0 %v492, 4
      %v601 = vpop.permute.xlu0 %600
      %602 = vrot.lane.b32.xlu0 %v494, 4
      %v603 = vpop.permute.xlu0 %602
      %604 = vrot.lane.b32.xlu0 %v496, 4
      %v605 = vpop.permute.xlu0 %604
      %606 = vrot.lane.b32.xlu0 %v499, 4
      %v607 = vpop.permute.xlu0 %606
      %608 = vrot.lane.b32.xlu0 %v501, 4
      %v609 = vpop.permute.xlu0 %608
      %610 = vrot.lane.b32.xlu0 %v503, 4
      %v611 = vpop.permute.xlu0 %610
      %vm666 = vcmask 1045504
      %v667 = vrot.slane %v225, 2
      %v668 = vrot.slane %v226, 2
      %v669 = vsel %vm666, %v667, %v668
      %v670 = vrot.slane %v227, 2
      %v671 = vsel %vm666, %v668, %v670
      %v672 = vrot.slane %v228, 2
      %v673 = vsel %vm666, %v670, %v672
      %v674 = vrot.slane %v229, 2
      %v675 = vrot.slane %v230, 2
      %v676 = vsel %vm666, %v674, %v675
      %v677 = vrot.slane %v231, 2
      %v678 = vsel %vm666, %v675, %v677
      %v679 = vrot.slane %v232, 2
      %v680 = vsel %vm666, %v677, %v679
      %v681 = vrot.slane %v233, 2
      %v682 = vrot.slane %v234, 2
      %v683 = vsel %vm666, %v681, %v682
      %v684 = vrot.slane %v235, 2
      %v685 = vsel %vm666, %v682, %v684
      %v686 = vrot.slane %v236, 2
      %v687 = vsel %vm666, %v684, %v686
      %v688 = vrot.slane %v237, 2
      %v689 = vrot.slane %v238, 2
      %v690 = vsel %vm666, %v688, %v689
      %v691 = vrot.slane %v239, 2
      %v692 = vsel %vm666, %v689, %v691
      %v693 = vrot.slane %v240, 2
      %v694 = vsel %vm666, %v691, %v693
      %v695 = vrot.slane %v241, 2
      %v696 = vrot.slane %v242, 2
      %v697 = vsel %vm666, %v695, %v696
      %v698 = vrot.slane %v243, 2
      %v699 = vsel %vm666, %v696, %v698
      %v700 = vrot.slane %v244, 2
      %v701 = vsel %vm666, %v698, %v700
      %v702 = vrot.slane %v245, 2
      %v703 = vrot.slane %v246, 2
      %v704 = vsel %vm666, %v702, %v703
      %v705 = vrot.slane %v247, 2
      %v706 = vsel %vm666, %v703, %v705
      %v707 = vrot.slane %v248, 2
      %v708 = vsel %vm666, %v705, %v707
      %v709 = vrot.slane %v249, 2
      %v710 = vrot.slane %v250, 2
      %v711 = vsel %vm666, %v709, %v710
      %v712 = vrot.slane %v251, 2
      %v713 = vsel %vm666, %v710, %v712
      %v714 = vrot.slane %v252, 2
      %v715 = vsel %vm666, %v712, %v714
      %v716 = vrot.slane %v253, 2
      %v717 = vrot.slane %v254, 2
      %v718 = vsel %vm666, %v716, %v717
      %v719 = vrot.slane %v255, 2
      %v720 = vsel %vm666, %v717, %v719
      %v721 = vrot.slane %v256, 2
      %v722 = vsel %vm666, %v719, %v721
      %v723 = vrot.slane %v257, 2
      %v724 = vrot.slane %v258, 2
      %v725 = vsel %vm666, %v723, %v724
      %v726 = vrot.slane %v259, 2
      %v727 = vsel %vm666, %v724, %v726
      %v728 = vrot.slane %v260, 2
      %v729 = vsel %vm666, %v726, %v728
      %v730 = vrot.slane %v261, 2
      %v731 = vrot.slane %v262, 2
      %v732 = vsel %vm666, %v730, %v731
      %v733 = vrot.slane %v263, 2
      %v734 = vsel %vm666, %v731, %v733
      %v735 = vrot.slane %v264, 2
      %v736 = vsel %vm666, %v733, %v735
      %v737 = vrot.slane %v265, 2
      %v738 = vrot.slane %v266, 2
      %v739 = vsel %vm666, %v737, %v738
      %v740 = vrot.slane %v267, 2
      %v741 = vsel %vm666, %v738, %v740
      %v742 = vrot.slane %v268, 2
      %v743 = vsel %vm666, %v740, %v742
      %v744 = vrot.slane %v269, 2
      %v745 = vrot.slane %v270, 2
      %v746 = vsel %vm666, %v744, %v745
      %v747 = vrot.slane %v271, 2
      %v748 = vsel %vm666, %v745, %v747
      %v749 = vrot.slane %v272, 2
      %v750 = vsel %vm666, %v747, %v749
      %v751 = vrot.slane %v273, 2
      %v752 = vrot.slane %v274, 2
      %v753 = vsel %vm666, %v751, %v752
      %v754 = vrot.slane %v275, 2
      %v755 = vsel %vm666, %v752, %v754
      %v756 = vrot.slane %v276, 2
      %v757 = vsel %vm666, %v754, %v756
      %v758 = vrot.slane %v277, 2
      %v759 = vrot.slane %v278, 2
      %v760 = vsel %vm666, %v758, %v759
      %v761 = vrot.slane %v279, 2
      %v762 = vsel %vm666, %v759, %v761
      %v763 = vrot.slane %v280, 2
      %v764 = vsel %vm666, %v761, %v763
      %v765 = vrot.slane %v281, 2
      %v766 = vrot.slane %v282, 2
      %v767 = vsel %vm666, %v765, %v766
      %v768 = vrot.slane %v283, 2
      %v769 = vsel %vm666, %v766, %v768
      %v770 = vrot.slane %v284, 2
      %v771 = vsel %vm666, %v768, %v770
      %v772 = vrot.slane %v285, 2
      %v773 = vrot.slane %v286, 2
      %v774 = vsel %vm666, %v772, %v773
      %v775 = vrot.slane %v287, 2
      %v776 = vsel %vm666, %v773, %v775
      %v777 = vrot.slane %v288, 2
      %v778 = vsel %vm666, %v775, %v777
      %v779 = vrot.slane %v289, 2
      %v780 = vrot.slane %v290, 2
      %v781 = vsel %vm666, %v779, %v780
      %v782 = vrot.slane %v291, 2
      %v783 = vsel %vm666, %v780, %v782
      %v784 = vrot.slane %v292, 2
      %v785 = vsel %vm666, %v782, %v784
      %v786 = vrot.slane %v293, 2
      %v787 = vrot.slane %v294, 2
      %v788 = vsel %vm666, %v786, %v787
      %v789 = vrot.slane %v295, 2
      %v790 = vsel %vm666, %v787, %v789
      %v791 = vrot.slane %v296, 2
      %v792 = vsel %vm666, %v789, %v791
      %793 = vrot.lane.b32.xlu0 %v669, 8
      %v794 = vpop.permute.xlu0 %793
      %795 = vrot.lane.b32.xlu0 %v671, 8
      %v796 = vpop.permute.xlu0 %795
      %797 = vrot.lane.b32.xlu0 %v673, 8
      %v798 = vpop.permute.xlu0 %797
      %799 = vrot.lane.b32.xlu0 %v676, 8
      %v800 = vpop.permute.xlu0 %799
      %801 = vrot.lane.b32.xlu0 %v678, 8
      %v802 = vpop.permute.xlu0 %801
      %803 = vrot.lane.b32.xlu0 %v680, 8
      %v804 = vpop.permute.xlu0 %803
      %805 = vrot.lane.b32.xlu0 %v683, 8
      %v806 = vpop.permute.xlu0 %805
      %807 = vrot.lane.b32.xlu0 %v685, 8
      %v808 = vpop.permute.xlu0 %807
      %809 = vrot.lane.b32.xlu0 %v687, 8
      %v810 = vpop.permute.xlu0 %809
      %811 = vrot.lane.b32.xlu0 %v690, 8
      %v812 = vpop.permute.xlu0 %811
      %813 = vrot.lane.b32.xlu0 %v692, 8
      %v814 = vpop.permute.xlu0 %813
      %815 = vrot.lane.b32.xlu0 %v694, 8
      %v816 = vpop.permute.xlu0 %815
      %817 = vrot.lane.b32.xlu0 %v697, 8
      %v818 = vpop.permute.xlu0 %817
      %819 = vrot.lane.b32.xlu0 %v699, 8
      %v820 = vpop.permute.xlu0 %819
      %821 = vrot.lane.b32.xlu0 %v701, 8
      %v822 = vpop.permute.xlu0 %821
      %823 = vrot.lane.b32.xlu0 %v704, 8
      %v824 = vpop.permute.xlu0 %823
      %825 = vrot.lane.b32.xlu0 %v706, 8
      %v826 = vpop.permute.xlu0 %825
      %827 = vrot.lane.b32.xlu0 %v708, 8
      %v828 = vpop.permute.xlu0 %827
      %829 = vrot.lane.b32.xlu0 %v711, 8
      %v830 = vpop.permute.xlu0 %829
      %831 = vrot.lane.b32.xlu0 %v713, 8
      %v832 = vpop.permute.xlu0 %831
      %833 = vrot.lane.b32.xlu0 %v715, 8
      %v834 = vpop.permute.xlu0 %833
      %835 = vrot.lane.b32.xlu0 %v718, 8
      %v836 = vpop.permute.xlu0 %835
      %837 = vrot.lane.b32.xlu0 %v720, 8
      %v838 = vpop.permute.xlu0 %837
      %839 = vrot.lane.b32.xlu0 %v722, 8
      %v840 = vpop.permute.xlu0 %839
      %841 = vrot.lane.b32.xlu0 %v725, 8
      %v842 = vpop.permute.xlu0 %841
      %843 = vrot.lane.b32.xlu0 %v727, 8
      %v844 = vpop.permute.xlu0 %843
      %845 = vrot.lane.b32.xlu0 %v729, 8
      %v846 = vpop.permute.xlu0 %845
      %847 = vrot.lane.b32.xlu0 %v732, 8
      %v848 = vpop.permute.xlu0 %847
      %849 = vrot.lane.b32.xlu0 %v734, 8
      %v850 = vpop.permute.xlu0 %849
      %851 = vrot.lane.b32.xlu0 %v736, 8
      %v852 = vpop.permute.xlu0 %851
      %853 = vrot.lane.b32.xlu0 %v739, 8
      %v854 = vpop.permute.xlu0 %853
      %855 = vrot.lane.b32.xlu0 %v741, 8
      %v856 = vpop.permute.xlu0 %855
      %857 = vrot.lane.b32.xlu0 %v743, 8
      %v858 = vpop.permute.xlu0 %857
      %859 = vrot.lane.b32.xlu0 %v746, 8
      %v860 = vpop.permute.xlu0 %859
      %861 = vrot.lane.b32.xlu0 %v748, 8
      %v862 = vpop.permute.xlu0 %861
      %863 = vrot.lane.b32.xlu0 %v750, 8
      %v864 = vpop.permute.xlu0 %863
      %865 = vrot.lane.b32.xlu0 %v753, 8
      %v866 = vpop.permute.xlu0 %865
      %867 = vrot.lane.b32.xlu0 %v755, 8
      %v868 = vpop.permute.xlu0 %867
      %869 = vrot.lane.b32.xlu0 %v757, 8
      %v870 = vpop.permute.xlu0 %869
      %871 = vrot.lane.b32.xlu0 %v760, 8
      %v872 = vpop.permute.xlu0 %871
      %873 = vrot.lane.b32.xlu0 %v762, 8
      %v874 = vpop.permute.xlu0 %873
      %875 = vrot.lane.b32.xlu0 %v764, 8
      %v876 = vpop.permute.xlu0 %875
      %877 = vrot.lane.b32.xlu0 %v767, 8
      %v878 = vpop.permute.xlu0 %877
      %879 = vrot.lane.b32.xlu0 %v769, 8
      %v880 = vpop.permute.xlu0 %879
      %881 = vrot.lane.b32.xlu0 %v771, 8
      %v882 = vpop.permute.xlu0 %881
      %883 = vrot.lane.b32.xlu0 %v774, 8
      %v884 = vpop.permute.xlu0 %883
      %885 = vrot.lane.b32.xlu0 %v776, 8
      %v886 = vpop.permute.xlu0 %885
      %887 = vrot.lane.b32.xlu0 %v778, 8
      %v888 = vpop.permute.xlu0 %887
      %889 = vrot.lane.b32.xlu0 %v781, 8
      %v890 = vpop.permute.xlu0 %889
      %891 = vrot.lane.b32.xlu0 %v783, 8
      %v892 = vpop.permute.xlu0 %891
      %893 = vrot.lane.b32.xlu0 %v785, 8
      %v894 = vpop.permute.xlu0 %893
      %895 = vrot.lane.b32.xlu0 %v788, 8
      %v896 = vpop.permute.xlu0 %895
      %897 = vrot.lane.b32.xlu0 %v790, 8
      %v898 = vpop.permute.xlu0 %897
      %899 = vrot.lane.b32.xlu0 %v792, 8
      %v900 = vpop.permute.xlu0 %899
      %958 = vrot.lane.b32.xlu0 %v229, 12
      %v959 = vpop.permute.xlu0 %958
      %960 = vrot.lane.b32.xlu0 %v230, 12
      %v961 = vpop.permute.xlu0 %960
      %962 = vrot.lane.b32.xlu0 %v231, 12
      %v963 = vpop.permute.xlu0 %962
      %964 = vrot.lane.b32.xlu0 %v233, 12
      %v965 = vpop.permute.xlu0 %964
      %966 = vrot.lane.b32.xlu0 %v234, 12
      %v967 = vpop.permute.xlu0 %966
      %968 = vrot.lane.b32.xlu0 %v235, 12
      %v969 = vpop.permute.xlu0 %968
      %970 = vrot.lane.b32.xlu0 %v237, 12
      %v971 = vpop.permute.xlu0 %970
      %972 = vrot.lane.b32.xlu0 %v238, 12
      %v973 = vpop.permute.xlu0 %972
      %974 = vrot.lane.b32.xlu0 %v239, 12
      %v975 = vpop.permute.xlu0 %974
      %976 = vrot.lane.b32.xlu0 %v241, 12
      %v977 = vpop.permute.xlu0 %976
      %978 = vrot.lane.b32.xlu0 %v242, 12
      %v979 = vpop.permute.xlu0 %978
      %980 = vrot.lane.b32.xlu0 %v243, 12
      %v981 = vpop.permute.xlu0 %980
      %982 = vrot.lane.b32.xlu0 %v245, 12
      %v983 = vpop.permute.xlu0 %982
      %984 = vrot.lane.b32.xlu0 %v246, 12
      %v985 = vpop.permute.xlu0 %984
      %986 = vrot.lane.b32.xlu0 %v247, 12
      %v987 = vpop.permute.xlu0 %986
      %988 = vrot.lane.b32.xlu0 %v249, 12
      %v989 = vpop.permute.xlu0 %988
      %990 = vrot.lane.b32.xlu0 %v250, 12
      %v991 = vpop.permute.xlu0 %990
      %992 = vrot.lane.b32.xlu0 %v251, 12
      %v993 = vpop.permute.xlu0 %992
      %994 = vrot.lane.b32.xlu0 %v253, 12
      %v995 = vpop.permute.xlu0 %994
      %996 = vrot.lane.b32.xlu0 %v254, 12
      %v997 = vpop.permute.xlu0 %996
      %998 = vrot.lane.b32.xlu0 %v255, 12
      %v999 = vpop.permute.xlu0 %998
      %1000 = vrot.lane.b32.xlu0 %v257, 12
      %v1001 = vpop.permute.xlu0 %1000
      %1002 = vrot.lane.b32.xlu0 %v258, 12
      %v1003 = vpop.permute.xlu0 %1002
      %1004 = vrot.lane.b32.xlu0 %v259, 12
      %v1005 = vpop.permute.xlu0 %1004
      %1006 = vrot.lane.b32.xlu0 %v261, 12
      %v1007 = vpop.permute.xlu0 %1006
      %1008 = vrot.lane.b32.xlu0 %v262, 12
      %v1009 = vpop.permute.xlu0 %1008
      %1010 = vrot.lane.b32.xlu0 %v263, 12
      %v1011 = vpop.permute.xlu0 %1010
      %1012 = vrot.lane.b32.xlu0 %v265, 12
      %v1013 = vpop.permute.xlu0 %1012
      %1014 = vrot.lane.b32.xlu0 %v266, 12
      %v1015 = vpop.permute.xlu0 %1014
      %1016 = vrot.lane.b32.xlu0 %v267, 12
      %v1017 = vpop.permute.xlu0 %1016
      %1018 = vrot.lane.b32.xlu0 %v269, 12
      %v1019 = vpop.permute.xlu0 %1018
      %1020 = vrot.lane.b32.xlu0 %v270, 12
      %v1021 = vpop.permute.xlu0 %1020
      %1022 = vrot.lane.b32.xlu0 %v271, 12
      %v1023 = vpop.permute.xlu0 %1022
      %1024 = vrot.lane.b32.xlu0 %v273, 12
      %v1025 = vpop.permute.xlu0 %1024
      %1026 = vrot.lane.b32.xlu0 %v274, 12
      %v1027 = vpop.permute.xlu0 %1026
      %1028 = vrot.lane.b32.xlu0 %v275, 12
      %v1029 = vpop.permute.xlu0 %1028
      %1030 = vrot.lane.b32.xlu0 %v277, 12
      %v1031 = vpop.permute.xlu0 %1030
      %1032 = vrot.lane.b32.xlu0 %v278, 12
      %v1033 = vpop.permute.xlu0 %1032
      %1034 = vrot.lane.b32.xlu0 %v279, 12
      %v1035 = vpop.permute.xlu0 %1034
      %1036 = vrot.lane.b32.xlu0 %v281, 12
      %v1037 = vpop.permute.xlu0 %1036
      %1038 = vrot.lane.b32.xlu0 %v282, 12
      %v1039 = vpop.permute.xlu0 %1038
      %1040 = vrot.lane.b32.xlu0 %v283, 12
      %v1041 = vpop.permute.xlu0 %1040
      %1042 = vrot.lane.b32.xlu0 %v285, 12
      %v1043 = vpop.permute.xlu0 %1042
      %1044 = vrot.lane.b32.xlu0 %v286, 12
      %v1045 = vpop.permute.xlu0 %1044
      %1046 = vrot.lane.b32.xlu0 %v287, 12
      %v1047 = vpop.permute.xlu0 %1046
      %1048 = vrot.lane.b32.xlu0 %v289, 12
      %v1049 = vpop.permute.xlu0 %1048
      %1050 = vrot.lane.b32.xlu0 %v290, 12
      %v1051 = vpop.permute.xlu0 %1050
      %1052 = vrot.lane.b32.xlu0 %v291, 12
      %v1053 = vpop.permute.xlu0 %1052
      %1054 = vrot.lane.b32.xlu0 %v293, 12
      %v1055 = vpop.permute.xlu0 %1054
      %1056 = vrot.lane.b32.xlu0 %v294, 12
      %v1057 = vpop.permute.xlu0 %1056
      %1058 = vrot.lane.b32.xlu0 %v295, 12
      %v1059 = vpop.permute.xlu0 %1058
      %1060 = vrot.lane.b32.xlu0 %v297, 12
      %v1061 = vpop.permute.xlu0 %1060
      %1062 = vrot.lane.b32.xlu0 %v298, 12
      %v1063 = vpop.permute.xlu0 %1062
      %1064 = vrot.lane.b32.xlu0 %v299, 12
      %v1065 = vpop.permute.xlu0 %1064
      %v1121 = vrot.slane %v297, 1
      %v1122 = vrot.slane %v298, 1
      %v1123 = vsel %vm377, %v1121, %v1122
      %v1124 = vrot.slane %v299, 1
      %v1125 = vsel %vm377, %v1122, %v1124
      %v1126 = vrot.slane %v300, 1
      %v1127 = vsel %vm377, %v1124, %v1126
      %1128 = vrot.lane.b32.xlu0 %v387, 16
      %v1129 = vpop.permute.xlu0 %1128
      %1130 = vrot.lane.b32.xlu0 %v389, 16
      %v1131 = vpop.permute.xlu0 %1130
      %1132 = vrot.lane.b32.xlu0 %v391, 16
      %v1133 = vpop.permute.xlu0 %1132
      %1134 = vrot.lane.b32.xlu0 %v394, 16
      %v1135 = vpop.permute.xlu0 %1134
      %1136 = vrot.lane.b32.xlu0 %v396, 16
      %v1137 = vpop.permute.xlu0 %1136
      %1138 = vrot.lane.b32.xlu0 %v398, 16
      %v1139 = vpop.permute.xlu0 %1138
      %1140 = vrot.lane.b32.xlu0 %v401, 16
      %v1141 = vpop.permute.xlu0 %1140
      %1142 = vrot.lane.b32.xlu0 %v403, 16
      %v1143 = vpop.permute.xlu0 %1142
      %1144 = vrot.lane.b32.xlu0 %v405, 16
      %v1145 = vpop.permute.xlu0 %1144
      %1146 = vrot.lane.b32.xlu0 %v408, 16
      %v1147 = vpop.permute.xlu0 %1146
      %1148 = vrot.lane.b32.xlu0 %v410, 16
      %v1149 = vpop.permute.xlu0 %1148
      %1150 = vrot.lane.b32.xlu0 %v412, 16
      %v1151 = vpop.permute.xlu0 %1150
      %1152 = vrot.lane.b32.xlu0 %v415, 16
      %v1153 = vpop.permute.xlu0 %1152
      %1154 = vrot.lane.b32.xlu0 %v417, 16
      %v1155 = vpop.permute.xlu0 %1154
      %1156 = vrot.lane.b32.xlu0 %v419, 16
      %v1157 = vpop.permute.xlu0 %1156
      %1158 = vrot.lane.b32.xlu0 %v422, 16
      %v1159 = vpop.permute.xlu0 %1158
      %1160 = vrot.lane.b32.xlu0 %v424, 16
      %v1161 = vpop.permute.xlu0 %1160
      %1162 = vrot.lane.b32.xlu0 %v426, 16
      %v1163 = vpop.permute.xlu0 %1162
      %1164 = vrot.lane.b32.xlu0 %v429, 16
      %v1165 = vpop.permute.xlu0 %1164
      %1166 = vrot.lane.b32.xlu0 %v431, 16
      %v1167 = vpop.permute.xlu0 %1166
      %1168 = vrot.lane.b32.xlu0 %v433, 16
      %v1169 = vpop.permute.xlu0 %1168
      %1170 = vrot.lane.b32.xlu0 %v436, 16
      %v1171 = vpop.permute.xlu0 %1170
      %1172 = vrot.lane.b32.xlu0 %v438, 16
      %v1173 = vpop.permute.xlu0 %1172
      %1174 = vrot.lane.b32.xlu0 %v440, 16
      %v1175 = vpop.permute.xlu0 %1174
      %1176 = vrot.lane.b32.xlu0 %v443, 16
      %v1177 = vpop.permute.xlu0 %1176
      %1178 = vrot.lane.b32.xlu0 %v445, 16
      %v1179 = vpop.permute.xlu0 %1178
      %1180 = vrot.lane.b32.xlu0 %v447, 16
      %v1181 = vpop.permute.xlu0 %1180
      %1182 = vrot.lane.b32.xlu0 %v450, 16
      %v1183 = vpop.permute.xlu0 %1182
      %1184 = vrot.lane.b32.xlu0 %v452, 16
      %v1185 = vpop.permute.xlu0 %1184
      %1186 = vrot.lane.b32.xlu0 %v454, 16
      %v1187 = vpop.permute.xlu0 %1186
      %1188 = vrot.lane.b32.xlu0 %v457, 16
      %v1189 = vpop.permute.xlu0 %1188
      %1190 = vrot.lane.b32.xlu0 %v459, 16
      %v1191 = vpop.permute.xlu0 %1190
      %1192 = vrot.lane.b32.xlu0 %v461, 16
      %v1193 = vpop.permute.xlu0 %1192
      %1194 = vrot.lane.b32.xlu0 %v464, 16
      %v1195 = vpop.permute.xlu0 %1194
      %1196 = vrot.lane.b32.xlu0 %v466, 16
      %v1197 = vpop.permute.xlu0 %1196
      %1198 = vrot.lane.b32.xlu0 %v468, 16
      %v1199 = vpop.permute.xlu0 %1198
      %1200 = vrot.lane.b32.xlu0 %v471, 16
      %v1201 = vpop.permute.xlu0 %1200
      %1202 = vrot.lane.b32.xlu0 %v473, 16
      %v1203 = vpop.permute.xlu0 %1202
      %1204 = vrot.lane.b32.xlu0 %v475, 16
      %v1205 = vpop.permute.xlu0 %1204
      %1206 = vrot.lane.b32.xlu0 %v478, 16
      %v1207 = vpop.permute.xlu0 %1206
      %1208 = vrot.lane.b32.xlu0 %v480, 16
      %v1209 = vpop.permute.xlu0 %1208
      %1210 = vrot.lane.b32.xlu0 %v482, 16
      %v1211 = vpop.permute.xlu0 %1210
      %1212 = vrot.lane.b32.xlu0 %v485, 16
      %v1213 = vpop.permute.xlu0 %1212
      %1214 = vrot.lane.b32.xlu0 %v487, 16
      %v1215 = vpop.permute.xlu0 %1214
      %1216 = vrot.lane.b32.xlu0 %v489, 16
      %v1217 = vpop.permute.xlu0 %1216
      %1218 = vrot.lane.b32.xlu0 %v492, 16
      %v1219 = vpop.permute.xlu0 %1218
      %1220 = vrot.lane.b32.xlu0 %v494, 16
      %v1221 = vpop.permute.xlu0 %1220
      %1222 = vrot.lane.b32.xlu0 %v496, 16
      %v1223 = vpop.permute.xlu0 %1222
      %1224 = vrot.lane.b32.xlu0 %v499, 16
      %v1225 = vpop.permute.xlu0 %1224
      %1226 = vrot.lane.b32.xlu0 %v501, 16
      %v1227 = vpop.permute.xlu0 %1226
      %1228 = vrot.lane.b32.xlu0 %v503, 16
      %v1229 = vpop.permute.xlu0 %1228
      %1230 = vrot.lane.b32.xlu0 %v1123, 16
      %v1231 = vpop.permute.xlu0 %1230
      %1232 = vrot.lane.b32.xlu0 %v1125, 16
      %v1233 = vpop.permute.xlu0 %1232
      %1234 = vrot.lane.b32.xlu0 %v1127, 16
      %v1235 = vpop.permute.xlu0 %1234
      %v1290 = vrot.slane %v297, 2
      %v1291 = vrot.slane %v298, 2
      %v1292 = vsel %vm666, %v1290, %v1291
      %v1293 = vrot.slane %v299, 2
      %v1294 = vsel %vm666, %v1291, %v1293
      %v1295 = vrot.slane %v300, 2
      %v1296 = vsel %vm666, %v1293, %v1295
      %1297 = vrot.lane.b32.xlu0 %v676, 20
      %v1298 = vpop.permute.xlu0 %1297
      %1299 = vrot.lane.b32.xlu0 %v678, 20
      %v1300 = vpop.permute.xlu0 %1299
      %1301 = vrot.lane.b32.xlu0 %v680, 20
      %v1302 = vpop.permute.xlu0 %1301
      %1303 = vrot.lane.b32.xlu0 %v683, 20
      %v1304 = vpop.permute.xlu0 %1303
      %1305 = vrot.lane.b32.xlu0 %v685, 20
      %v1306 = vpop.permute.xlu0 %1305
      %1307 = vrot.lane.b32.xlu0 %v687, 20
      %v1308 = vpop.permute.xlu0 %1307
      %1309 = vrot.lane.b32.xlu0 %v690, 20
      %v1310 = vpop.permute.xlu0 %1309
      %1311 = vrot.lane.b32.xlu0 %v692, 20
      %v1312 = vpop.permute.xlu0 %1311
      %1313 = vrot.lane.b32.xlu0 %v694, 20
      %v1314 = vpop.permute.xlu0 %1313
      %1315 = vrot.lane.b32.xlu0 %v697, 20
      %v1316 = vpop.permute.xlu0 %1315
      %1317 = vrot.lane.b32.xlu0 %v699, 20
      %v1318 = vpop.permute.xlu0 %1317
      %1319 = vrot.lane.b32.xlu0 %v701, 20
      %v1320 = vpop.permute.xlu0 %1319
      %1321 = vrot.lane.b32.xlu0 %v704, 20
      %v1322 = vpop.permute.xlu0 %1321
      %1323 = vrot.lane.b32.xlu0 %v706, 20
      %v1324 = vpop.permute.xlu0 %1323
      %1325 = vrot.lane.b32.xlu0 %v708, 20
      %v1326 = vpop.permute.xlu0 %1325
      %1327 = vrot.lane.b32.xlu0 %v711, 20
      %v1328 = vpop.permute.xlu0 %1327
      %1329 = vrot.lane.b32.xlu0 %v713, 20
      %v1330 = vpop.permute.xlu0 %1329
      %1331 = vrot.lane.b32.xlu0 %v715, 20
      %v1332 = vpop.permute.xlu0 %1331
      %1333 = vrot.lane.b32.xlu0 %v718, 20
      %v1334 = vpop.permute.xlu0 %1333
      %1335 = vrot.lane.b32.xlu0 %v720, 20
      %v1336 = vpop.permute.xlu0 %1335
      %1337 = vrot.lane.b32.xlu0 %v722, 20
      %v1338 = vpop.permute.xlu0 %1337
      %1339 = vrot.lane.b32.xlu0 %v725, 20
      %v1340 = vpop.permute.xlu0 %1339
      %1341 = vrot.lane.b32.xlu0 %v727, 20
      %v1342 = vpop.permute.xlu0 %1341
      %1343 = vrot.lane.b32.xlu0 %v729, 20
      %v1344 = vpop.permute.xlu0 %1343
      %1345 = vrot.lane.b32.xlu0 %v732, 20
      %v1346 = vpop.permute.xlu0 %1345
      %1347 = vrot.lane.b32.xlu0 %v734, 20
      %v1348 = vpop.permute.xlu0 %1347
      %1349 = vrot.lane.b32.xlu0 %v736, 20
      %v1350 = vpop.permute.xlu0 %1349
      %1351 = vrot.lane.b32.xlu0 %v739, 20
      %v1352 = vpop.permute.xlu0 %1351
      %1353 = vrot.lane.b32.xlu0 %v741, 20
      %v1354 = vpop.permute.xlu0 %1353
      %1355 = vrot.lane.b32.xlu0 %v743, 20
      %v1356 = vpop.permute.xlu0 %1355
      %1357 = vrot.lane.b32.xlu0 %v746, 20
      %v1358 = vpop.permute.xlu0 %1357
      %1359 = vrot.lane.b32.xlu0 %v748, 20
      %v1360 = vpop.permute.xlu0 %1359
      %1361 = vrot.lane.b32.xlu0 %v750, 20
      %v1362 = vpop.permute.xlu0 %1361
      %1363 = vrot.lane.b32.xlu0 %v753, 20
      %v1364 = vpop.permute.xlu0 %1363
      %1365 = vrot.lane.b32.xlu0 %v755, 20
      %v1366 = vpop.permute.xlu0 %1365
      %1367 = vrot.lane.b32.xlu0 %v757, 20
      %v1368 = vpop.permute.xlu0 %1367
      %1369 = vrot.lane.b32.xlu0 %v760, 20
      %v1370 = vpop.permute.xlu0 %1369
      %1371 = vrot.lane.b32.xlu0 %v762, 20
      %v1372 = vpop.permute.xlu0 %1371
      %1373 = vrot.lane.b32.xlu0 %v764, 20
      %v1374 = vpop.permute.xlu0 %1373
      %1375 = vrot.lane.b32.xlu0 %v767, 20
      %v1376 = vpop.permute.xlu0 %1375
      %1377 = vrot.lane.b32.xlu0 %v769, 20
      %v1378 = vpop.permute.xlu0 %1377
      %1379 = vrot.lane.b32.xlu0 %v771, 20
      %v1380 = vpop.permute.xlu0 %1379
      %1381 = vrot.lane.b32.xlu0 %v774, 20
      %v1382 = vpop.permute.xlu0 %1381
      %1383 = vrot.lane.b32.xlu0 %v776, 20
      %v1384 = vpop.permute.xlu0 %1383
      %1385 = vrot.lane.b32.xlu0 %v778, 20
      %v1386 = vpop.permute.xlu0 %1385
      %1387 = vrot.lane.b32.xlu0 %v781, 20
      %v1388 = vpop.permute.xlu0 %1387
      %1389 = vrot.lane.b32.xlu0 %v783, 20
      %v1390 = vpop.permute.xlu0 %1389
      %1391 = vrot.lane.b32.xlu0 %v785, 20
      %v1392 = vpop.permute.xlu0 %1391
      %1393 = vrot.lane.b32.xlu0 %v788, 20
      %v1394 = vpop.permute.xlu0 %1393
      %1395 = vrot.lane.b32.xlu0 %v790, 20
      %v1396 = vpop.permute.xlu0 %1395
      %1397 = vrot.lane.b32.xlu0 %v792, 20
      %v1398 = vpop.permute.xlu0 %1397
      %1399 = vrot.lane.b32.xlu0 %v1292, 20
      %v1400 = vpop.permute.xlu0 %1399
      %1401 = vrot.lane.b32.xlu0 %v1294, 20
      %v1402 = vpop.permute.xlu0 %1401
      %1403 = vrot.lane.b32.xlu0 %v1296, 20
      %v1404 = vpop.permute.xlu0 %1403
      %1462 = vrot.lane.b32.xlu0 %v233, 24
      %v1463 = vpop.permute.xlu0 %1462
      %1464 = vrot.lane.b32.xlu0 %v234, 24
      %v1465 = vpop.permute.xlu0 %1464
      %1466 = vrot.lane.b32.xlu0 %v235, 24
      %v1467 = vpop.permute.xlu0 %1466
      %1468 = vrot.lane.b32.xlu0 %v237, 24
      %v1469 = vpop.permute.xlu0 %1468
      %1470 = vrot.lane.b32.xlu0 %v238, 24
      %v1471 = vpop.permute.xlu0 %1470
      %1472 = vrot.lane.b32.xlu0 %v239, 24
      %v1473 = vpop.permute.xlu0 %1472
      %1474 = vrot.lane.b32.xlu0 %v241, 24
      %v1475 = vpop.permute.xlu0 %1474
      %1476 = vrot.lane.b32.xlu0 %v242, 24
      %v1477 = vpop.permute.xlu0 %1476
      %1478 = vrot.lane.b32.xlu0 %v243, 24
      %v1479 = vpop.permute.xlu0 %1478
      %1480 = vrot.lane.b32.xlu0 %v245, 24
      %v1481 = vpop.permute.xlu0 %1480
      %1482 = vrot.lane.b32.xlu0 %v246, 24
      %v1483 = vpop.permute.xlu0 %1482
      %1484 = vrot.lane.b32.xlu0 %v247, 24
      %v1485 = vpop.permute.xlu0 %1484
      %1486 = vrot.lane.b32.xlu0 %v249, 24
      %v1487 = vpop.permute.xlu0 %1486
      %1488 = vrot.lane.b32.xlu0 %v250, 24
      %v1489 = vpop.permute.xlu0 %1488
      %1490 = vrot.lane.b32.xlu0 %v251, 24
      %v1491 = vpop.permute.xlu0 %1490
      %1492 = vrot.lane.b32.xlu0 %v253, 24
      %v1493 = vpop.permute.xlu0 %1492
      %1494 = vrot.lane.b32.xlu0 %v254, 24
      %v1495 = vpop.permute.xlu0 %1494
      %1496 = vrot.lane.b32.xlu0 %v255, 24
      %v1497 = vpop.permute.xlu0 %1496
      %1498 = vrot.lane.b32.xlu0 %v257, 24
      %v1499 = vpop.permute.xlu0 %1498
      %1500 = vrot.lane.b32.xlu0 %v258, 24
      %v1501 = vpop.permute.xlu0 %1500
      %1502 = vrot.lane.b32.xlu0 %v259, 24
      %v1503 = vpop.permute.xlu0 %1502
      %1504 = vrot.lane.b32.xlu0 %v261, 24
      %v1505 = vpop.permute.xlu0 %1504
      %1506 = vrot.lane.b32.xlu0 %v262, 24
      %v1507 = vpop.permute.xlu0 %1506
      %1508 = vrot.lane.b32.xlu0 %v263, 24
      %v1509 = vpop.permute.xlu0 %1508
      %1510 = vrot.lane.b32.xlu0 %v265, 24
      %v1511 = vpop.permute.xlu0 %1510
      %1512 = vrot.lane.b32.xlu0 %v266, 24
      %v1513 = vpop.permute.xlu0 %1512
      %1514 = vrot.lane.b32.xlu0 %v267, 24
      %v1515 = vpop.permute.xlu0 %1514
      %1516 = vrot.lane.b32.xlu0 %v269, 24
      %v1517 = vpop.permute.xlu0 %1516
      %1518 = vrot.lane.b32.xlu0 %v270, 24
      %v1519 = vpop.permute.xlu0 %1518
      %1520 = vrot.lane.b32.xlu0 %v271, 24
      %v1521 = vpop.permute.xlu0 %1520
      %1522 = vrot.lane.b32.xlu0 %v273, 24
      %v1523 = vpop.permute.xlu0 %1522
      %1524 = vrot.lane.b32.xlu0 %v274, 24
      %v1525 = vpop.permute.xlu0 %1524
      %1526 = vrot.lane.b32.xlu0 %v275, 24
      %v1527 = vpop.permute.xlu0 %1526
      %1528 = vrot.lane.b32.xlu0 %v277, 24
      %v1529 = vpop.permute.xlu0 %1528
      %1530 = vrot.lane.b32.xlu0 %v278, 24
      %v1531 = vpop.permute.xlu0 %1530
      %1532 = vrot.lane.b32.xlu0 %v279, 24
      %v1533 = vpop.permute.xlu0 %1532
      %1534 = vrot.lane.b32.xlu0 %v281, 24
      %v1535 = vpop.permute.xlu0 %1534
      %1536 = vrot.lane.b32.xlu0 %v282, 24
      %v1537 = vpop.permute.xlu0 %1536
      %1538 = vrot.lane.b32.xlu0 %v283, 24
      %v1539 = vpop.permute.xlu0 %1538
      %1540 = vrot.lane.b32.xlu0 %v285, 24
      %v1541 = vpop.permute.xlu0 %1540
      %1542 = vrot.lane.b32.xlu0 %v286, 24
      %v1543 = vpop.permute.xlu0 %1542
      %1544 = vrot.lane.b32.xlu0 %v287, 24
      %v1545 = vpop.permute.xlu0 %1544
      %1546 = vrot.lane.b32.xlu0 %v289, 24
      %v1547 = vpop.permute.xlu0 %1546
      %1548 = vrot.lane.b32.xlu0 %v290, 24
      %v1549 = vpop.permute.xlu0 %1548
      %1550 = vrot.lane.b32.xlu0 %v291, 24
      %v1551 = vpop.permute.xlu0 %1550
      %1552 = vrot.lane.b32.xlu0 %v293, 24
      %v1553 = vpop.permute.xlu0 %1552
      %1554 = vrot.lane.b32.xlu0 %v294, 24
      %v1555 = vpop.permute.xlu0 %1554
      %1556 = vrot.lane.b32.xlu0 %v295, 24
      %v1557 = vpop.permute.xlu0 %1556
      %1558 = vrot.lane.b32.xlu0 %v297, 24
      %v1559 = vpop.permute.xlu0 %1558
      %1560 = vrot.lane.b32.xlu0 %v298, 24
      %v1561 = vpop.permute.xlu0 %1560
      %1562 = vrot.lane.b32.xlu0 %v299, 24
      %v1563 = vpop.permute.xlu0 %1562
      %1564 = vrot.lane.b32.xlu0 %v301, 24
      %v1565 = vpop.permute.xlu0 %1564
      %1566 = vrot.lane.b32.xlu0 %v302, 24
      %v1567 = vpop.permute.xlu0 %1566
      %1568 = vrot.lane.b32.xlu0 %v303, 24
      %v1569 = vpop.permute.xlu0 %1568
      %v1625 = vrot.slane %v301, 1
      %v1626 = vrot.slane %v302, 1
      %v1627 = vsel %vm377, %v1625, %v1626
      %v1628 = vrot.slane %v303, 1
      %v1629 = vsel %vm377, %v1626, %v1628
      %v1630 = vrot.slane %v304, 1
      %v1631 = vsel %vm377, %v1628, %v1630
      %1632 = vrot.lane.b32.xlu0 %v394, 28
      %v1633 = vpop.permute.xlu0 %1632
      %1634 = vrot.lane.b32.xlu0 %v396, 28
      %v1635 = vpop.permute.xlu0 %1634
      %1636 = vrot.lane.b32.xlu0 %v398, 28
      %v1637 = vpop.permute.xlu0 %1636
      %1638 = vrot.lane.b32.xlu0 %v401, 28
      %v1639 = vpop.permute.xlu0 %1638
      %1640 = vrot.lane.b32.xlu0 %v403, 28
      %v1641 = vpop.permute.xlu0 %1640
      %1642 = vrot.lane.b32.xlu0 %v405, 28
      %v1643 = vpop.permute.xlu0 %1642
      %1644 = vrot.lane.b32.xlu0 %v408, 28
      %v1645 = vpop.permute.xlu0 %1644
      %1646 = vrot.lane.b32.xlu0 %v410, 28
      %v1647 = vpop.permute.xlu0 %1646
      %1648 = vrot.lane.b32.xlu0 %v412, 28
      %v1649 = vpop.permute.xlu0 %1648
      %1650 = vrot.lane.b32.xlu0 %v415, 28
      %v1651 = vpop.permute.xlu0 %1650
      %1652 = vrot.lane.b32.xlu0 %v417, 28
      %v1653 = vpop.permute.xlu0 %1652
      %1654 = vrot.lane.b32.xlu0 %v419, 28
      %v1655 = vpop.permute.xlu0 %1654
      %1656 = vrot.lane.b32.xlu0 %v422, 28
      %v1657 = vpop.permute.xlu0 %1656
      %1658 = vrot.lane.b32.xlu0 %v424, 28
      %v1659 = vpop.permute.xlu0 %1658
      %1660 = vrot.lane.b32.xlu0 %v426, 28
      %v1661 = vpop.permute.xlu0 %1660
      %1662 = vrot.lane.b32.xlu0 %v429, 28
      %v1663 = vpop.permute.xlu0 %1662
      %1664 = vrot.lane.b32.xlu0 %v431, 28
      %v1665 = vpop.permute.xlu0 %1664
      %1666 = vrot.lane.b32.xlu0 %v433, 28
      %v1667 = vpop.permute.xlu0 %1666
      %1668 = vrot.lane.b32.xlu0 %v436, 28
      %v1669 = vpop.permute.xlu0 %1668
      %1670 = vrot.lane.b32.xlu0 %v438, 28
      %v1671 = vpop.permute.xlu0 %1670
      %1672 = vrot.lane.b32.xlu0 %v440, 28
      %v1673 = vpop.permute.xlu0 %1672
      %1674 = vrot.lane.b32.xlu0 %v443, 28
      %v1675 = vpop.permute.xlu0 %1674
      %1676 = vrot.lane.b32.xlu0 %v445, 28
      %v1677 = vpop.permute.xlu0 %1676
      %1678 = vrot.lane.b32.xlu0 %v447, 28
      %v1679 = vpop.permute.xlu0 %1678
      %1680 = vrot.lane.b32.xlu0 %v450, 28
      %v1681 = vpop.permute.xlu0 %1680
      %1682 = vrot.lane.b32.xlu0 %v452, 28
      %v1683 = vpop.permute.xlu0 %1682
      %1684 = vrot.lane.b32.xlu0 %v454, 28
      %v1685 = vpop.permute.xlu0 %1684
      %1686 = vrot.lane.b32.xlu0 %v457, 28
      %v1687 = vpop.permute.xlu0 %1686
      %1688 = vrot.lane.b32.xlu0 %v459, 28
      %v1689 = vpop.permute.xlu0 %1688
      %1690 = vrot.lane.b32.xlu0 %v461, 28
      %v1691 = vpop.permute.xlu0 %1690
      %1692 = vrot.lane.b32.xlu0 %v464, 28
      %v1693 = vpop.permute.xlu0 %1692
      %1694 = vrot.lane.b32.xlu0 %v466, 28
      %v1695 = vpop.permute.xlu0 %1694
      %1696 = vrot.lane.b32.xlu0 %v468, 28
      %v1697 = vpop.permute.xlu0 %1696
      %1698 = vrot.lane.b32.xlu0 %v471, 28
      %v1699 = vpop.permute.xlu0 %1698
      %1700 = vrot.lane.b32.xlu0 %v473, 28
      %v1701 = vpop.permute.xlu0 %1700
      %1702 = vrot.lane.b32.xlu0 %v475, 28
      %v1703 = vpop.permute.xlu0 %1702
      %1704 = vrot.lane.b32.xlu0 %v478, 28
      %v1705 = vpop.permute.xlu0 %1704
      %1706 = vrot.lane.b32.xlu0 %v480, 28
      %v1707 = vpop.permute.xlu0 %1706
      %1708 = vrot.lane.b32.xlu0 %v482, 28
      %v1709 = vpop.permute.xlu0 %1708
      %1710 = vrot.lane.b32.xlu0 %v485, 28
      %v1711 = vpop.permute.xlu0 %1710
      %1712 = vrot.lane.b32.xlu0 %v487, 28
      %v1713 = vpop.permute.xlu0 %1712
      %1714 = vrot.lane.b32.xlu0 %v489, 28
      %v1715 = vpop.permute.xlu0 %1714
      %1716 = vrot.lane.b32.xlu0 %v492, 28
      %v1717 = vpop.permute.xlu0 %1716
      %1718 = vrot.lane.b32.xlu0 %v494, 28
      %v1719 = vpop.permute.xlu0 %1718
      %1720 = vrot.lane.b32.xlu0 %v496, 28
      %v1721 = vpop.permute.xlu0 %1720
      %1722 = vrot.lane.b32.xlu0 %v499, 28
      %v1723 = vpop.permute.xlu0 %1722
      %1724 = vrot.lane.b32.xlu0 %v501, 28
      %v1725 = vpop.permute.xlu0 %1724
      %1726 = vrot.lane.b32.xlu0 %v503, 28
      %v1727 = vpop.permute.xlu0 %1726
      %1728 = vrot.lane.b32.xlu0 %v1123, 28
      %v1729 = vpop.permute.xlu0 %1728
      %1730 = vrot.lane.b32.xlu0 %v1125, 28
      %v1731 = vpop.permute.xlu0 %1730
      %1732 = vrot.lane.b32.xlu0 %v1127, 28
      %v1733 = vpop.permute.xlu0 %1732
      %1734 = vrot.lane.b32.xlu0 %v1627, 28
      %v1735 = vpop.permute.xlu0 %1734
      %1736 = vrot.lane.b32.xlu0 %v1629, 28
      %v1737 = vpop.permute.xlu0 %1736
      %1738 = vrot.lane.b32.xlu0 %v1631, 28
      %v1739 = vpop.permute.xlu0 %1738
      %v1794 = vrot.slane %v301, 2
      %v1795 = vrot.slane %v302, 2
      %v1796 = vsel %vm666, %v1794, %v1795
      %v1797 = vrot.slane %v303, 2
      %v1798 = vsel %vm666, %v1795, %v1797
      %v1799 = vrot.slane %v304, 2
      %v1800 = vsel %vm666, %v1797, %v1799
      %1801 = vrot.lane.b32.xlu0 %v683, 32
      %v1802 = vpop.permute.xlu0 %1801
      %1803 = vrot.lane.b32.xlu0 %v685, 32
      %v1804 = vpop.permute.xlu0 %1803
      %1805 = vrot.lane.b32.xlu0 %v687, 32
      %v1806 = vpop.permute.xlu0 %1805
      %1807 = vrot.lane.b32.xlu0 %v690, 32
      %v1808 = vpop.permute.xlu0 %1807
      %1809 = vrot.lane.b32.xlu0 %v692, 32
      %v1810 = vpop.permute.xlu0 %1809
      %1811 = vrot.lane.b32.xlu0 %v694, 32
      %v1812 = vpop.permute.xlu0 %1811
      %1813 = vrot.lane.b32.xlu0 %v697, 32
      %v1814 = vpop.permute.xlu0 %1813
      %1815 = vrot.lane.b32.xlu0 %v699, 32
      %v1816 = vpop.permute.xlu0 %1815
      %1817 = vrot.lane.b32.xlu0 %v701, 32
      %v1818 = vpop.permute.xlu0 %1817
      %1819 = vrot.lane.b32.xlu0 %v704, 32
      %v1820 = vpop.permute.xlu0 %1819
      %1821 = vrot.lane.b32.xlu0 %v706, 32
      %v1822 = vpop.permute.xlu0 %1821
      %1823 = vrot.lane.b32.xlu0 %v708, 32
      %v1824 = vpop.permute.xlu0 %1823
      %1825 = vrot.lane.b32.xlu0 %v711, 32
      %v1826 = vpop.permute.xlu0 %1825
      %1827 = vrot.lane.b32.xlu0 %v713, 32
      %v1828 = vpop.permute.xlu0 %1827
      %1829 = vrot.lane.b32.xlu0 %v715, 32
      %v1830 = vpop.permute.xlu0 %1829
      %1831 = vrot.lane.b32.xlu0 %v718, 32
      %v1832 = vpop.permute.xlu0 %1831
      %1833 = vrot.lane.b32.xlu0 %v720, 32
      %v1834 = vpop.permute.xlu0 %1833
      %1835 = vrot.lane.b32.xlu0 %v722, 32
      %v1836 = vpop.permute.xlu0 %1835
      %1837 = vrot.lane.b32.xlu0 %v725, 32
      %v1838 = vpop.permute.xlu0 %1837
      %1839 = vrot.lane.b32.xlu0 %v727, 32
      %v1840 = vpop.permute.xlu0 %1839
      %1841 = vrot.lane.b32.xlu0 %v729, 32
      %v1842 = vpop.permute.xlu0 %1841
      %1843 = vrot.lane.b32.xlu0 %v732, 32
      %v1844 = vpop.permute.xlu0 %1843
      %1845 = vrot.lane.b32.xlu0 %v734, 32
      %v1846 = vpop.permute.xlu0 %1845
      %1847 = vrot.lane.b32.xlu0 %v736, 32
      %v1848 = vpop.permute.xlu0 %1847
      %1849 = vrot.lane.b32.xlu0 %v739, 32
      %v1850 = vpop.permute.xlu0 %1849
      %1851 = vrot.lane.b32.xlu0 %v741, 32
      %v1852 = vpop.permute.xlu0 %1851
      %1853 = vrot.lane.b32.xlu0 %v743, 32
      %v1854 = vpop.permute.xlu0 %1853
      %1855 = vrot.lane.b32.xlu0 %v746, 32
      %v1856 = vpop.permute.xlu0 %1855
      %1857 = vrot.lane.b32.xlu0 %v748, 32
      %v1858 = vpop.permute.xlu0 %1857
      %1859 = vrot.lane.b32.xlu0 %v750, 32
      %v1860 = vpop.permute.xlu0 %1859
      %1861 = vrot.lane.b32.xlu0 %v753, 32
      %v1862 = vpop.permute.xlu0 %1861
      %1863 = vrot.lane.b32.xlu0 %v755, 32
      %v1864 = vpop.permute.xlu0 %1863
      %1865 = vrot.lane.b32.xlu0 %v757, 32
      %v1866 = vpop.permute.xlu0 %1865
      %1867 = vrot.lane.b32.xlu0 %v760, 32
      %v1868 = vpop.permute.xlu0 %1867
      %1869 = vrot.lane.b32.xlu0 %v762, 32
      %v1870 = vpop.permute.xlu0 %1869
      %1871 = vrot.lane.b32.xlu0 %v764, 32
      %v1872 = vpop.permute.xlu0 %1871
      %1873 = vrot.lane.b32.xlu0 %v767, 32
      %v1874 = vpop.permute.xlu0 %1873
      %1875 = vrot.lane.b32.xlu0 %v769, 32
      %v1876 = vpop.permute.xlu0 %1875
      %1877 = vrot.lane.b32.xlu0 %v771, 32
      %v1878 = vpop.permute.xlu0 %1877
      %1879 = vrot.lane.b32.xlu0 %v774, 32
      %v1880 = vpop.permute.xlu0 %1879
      %1881 = vrot.lane.b32.xlu0 %v776, 32
      %v1882 = vpop.permute.xlu0 %1881
      %1883 = vrot.lane.b32.xlu0 %v778, 32
      %v1884 = vpop.permute.xlu0 %1883
      %1885 = vrot.lane.b32.xlu0 %v781, 32
      %v1886 = vpop.permute.xlu0 %1885
      %1887 = vrot.lane.b32.xlu0 %v783, 32
      %v1888 = vpop.permute.xlu0 %1887
      %1889 = vrot.lane.b32.xlu0 %v785, 32
      %v1890 = vpop.permute.xlu0 %1889
      %1891 = vrot.lane.b32.xlu0 %v788, 32
      %v1892 = vpop.permute.xlu0 %1891
      %1893 = vrot.lane.b32.xlu0 %v790, 32
      %v1894 = vpop.permute.xlu0 %1893
      %1895 = vrot.lane.b32.xlu0 %v792, 32
      %v1896 = vpop.permute.xlu0 %1895
      %1897 = vrot.lane.b32.xlu0 %v1292, 32
      %v1898 = vpop.permute.xlu0 %1897
      %1899 = vrot.lane.b32.xlu0 %v1294, 32
      %v1900 = vpop.permute.xlu0 %1899
      %1901 = vrot.lane.b32.xlu0 %v1296, 32
      %v1902 = vpop.permute.xlu0 %1901
      %1903 = vrot.lane.b32.xlu0 %v1796, 32
      %v1904 = vpop.permute.xlu0 %1903
      %1905 = vrot.lane.b32.xlu0 %v1798, 32
      %v1906 = vpop.permute.xlu0 %1905
      %1907 = vrot.lane.b32.xlu0 %v1800, 32
      %v1908 = vpop.permute.xlu0 %1907
      %vm1963 = vcmask 31744
      %v1964 = vsel %vm1963, %v225, %v505
      %v1965 = vsel %vm1963, %v226, %v507
      %v1966 = vsel %vm1963, %v227, %v509
      %v1967 = vsel %vm1963, %v229, %v511
      %v1968 = vsel %vm1963, %v230, %v513
      %v1969 = vsel %vm1963, %v231, %v515
      %v1970 = vsel %vm1963, %v233, %v517
      %v1971 = vsel %vm1963, %v234, %v519
      %v1972 = vsel %vm1963, %v235, %v521
      %v1973 = vsel %vm1963, %v237, %v523
      %v1974 = vsel %vm1963, %v238, %v525
      %v1975 = vsel %vm1963, %v239, %v527
      %v1976 = vsel %vm1963, %v241, %v529
      %v1977 = vsel %vm1963, %v242, %v531
      %v1978 = vsel %vm1963, %v243, %v533
      %v1979 = vsel %vm1963, %v245, %v535
      %v1980 = vsel %vm1963, %v246, %v537
      %v1981 = vsel %vm1963, %v247, %v539
      %v1982 = vsel %vm1963, %v249, %v541
      %v1983 = vsel %vm1963, %v250, %v543
      %v1984 = vsel %vm1963, %v251, %v545
      %v1985 = vsel %vm1963, %v253, %v547
      %v1986 = vsel %vm1963, %v254, %v549
      %v1987 = vsel %vm1963, %v255, %v551
      %v1988 = vsel %vm1963, %v257, %v553
      %v1989 = vsel %vm1963, %v258, %v555
      %v1990 = vsel %vm1963, %v259, %v557
      %v1991 = vsel %vm1963, %v261, %v559
      %v1992 = vsel %vm1963, %v262, %v561
      %v1993 = vsel %vm1963, %v263, %v563
      %v1994 = vsel %vm1963, %v265, %v565
      %v1995 = vsel %vm1963, %v266, %v567
      %v1996 = vsel %vm1963, %v267, %v569
      %v1997 = vsel %vm1963, %v269, %v571
      %v1998 = vsel %vm1963, %v270, %v573
      %v1999 = vsel %vm1963, %v271, %v575
      %v2000 = vsel %vm1963, %v273, %v577
      %v2001 = vsel %vm1963, %v274, %v579
      %v2002 = vsel %vm1963, %v275, %v581
      %v2003 = vsel %vm1963, %v277, %v583
      %v2004 = vsel %vm1963, %v278, %v585
      %v2005 = vsel %vm1963, %v279, %v587
      %v2006 = vsel %vm1963, %v281, %v589
      %v2007 = vsel %vm1963, %v282, %v591
      %v2008 = vsel %vm1963, %v283, %v593
      %v2009 = vsel %vm1963, %v285, %v595
      %v2010 = vsel %vm1963, %v286, %v597
      %v2011 = vsel %vm1963, %v287, %v599
      %v2012 = vsel %vm1963, %v289, %v601
      %v2013 = vsel %vm1963, %v290, %v603
      %v2014 = vsel %vm1963, %v291, %v605
      %v2015 = vsel %vm1963, %v293, %v607
      %v2016 = vsel %vm1963, %v294, %v609
      %v2017 = vsel %vm1963, %v295, %v611
      %vm2018 = vcmask 64512
      %v2019 = vsel %vm2018, %v1964, %v794
      %v2020 = vsel %vm2018, %v1965, %v796
      %v2021 = vsel %vm2018, %v1966, %v798
      %v2022 = vsel %vm2018, %v1967, %v800
      %v2023 = vsel %vm2018, %v1968, %v802
      %v2024 = vsel %vm2018, %v1969, %v804
      %v2025 = vsel %vm2018, %v1970, %v806
      %v2026 = vsel %vm2018, %v1971, %v808
      %v2027 = vsel %vm2018, %v1972, %v810
      %v2028 = vsel %vm2018, %v1973, %v812
      %v2029 = vsel %vm2018, %v1974, %v814
      %v2030 = vsel %vm2018, %v1975, %v816
      %v2031 = vsel %vm2018, %v1976, %v818
      %v2032 = vsel %vm2018, %v1977, %v820
      %v2033 = vsel %vm2018, %v1978, %v822
      %v2034 = vsel %vm2018, %v1979, %v824
      %v2035 = vsel %vm2018, %v1980, %v826
      %v2036 = vsel %vm2018, %v1981, %v828
      %v2037 = vsel %vm2018, %v1982, %v830
      %v2038 = vsel %vm2018, %v1983, %v832
      %v2039 = vsel %vm2018, %v1984, %v834
      %v2040 = vsel %vm2018, %v1985, %v836
      %v2041 = vsel %vm2018, %v1986, %v838
      %v2042 = vsel %vm2018, %v1987, %v840
      %v2043 = vsel %vm2018, %v1988, %v842
      %v2044 = vsel %vm2018, %v1989, %v844
      %v2045 = vsel %vm2018, %v1990, %v846
      %v2046 = vsel %vm2018, %v1991, %v848
      %v2047 = vsel %vm2018, %v1992, %v850
      %v2048 = vsel %vm2018, %v1993, %v852
      %v2049 = vsel %vm2018, %v1994, %v854
      %v2050 = vsel %vm2018, %v1995, %v856
      %v2051 = vsel %vm2018, %v1996, %v858
      %v2052 = vsel %vm2018, %v1997, %v860
      %v2053 = vsel %vm2018, %v1998, %v862
      %v2054 = vsel %vm2018, %v1999, %v864
      %v2055 = vsel %vm2018, %v2000, %v866
      %v2056 = vsel %vm2018, %v2001, %v868
      %v2057 = vsel %vm2018, %v2002, %v870
      %v2058 = vsel %vm2018, %v2003, %v872
      %v2059 = vsel %vm2018, %v2004, %v874
      %v2060 = vsel %vm2018, %v2005, %v876
      %v2061 = vsel %vm2018, %v2006, %v878
      %v2062 = vsel %vm2018, %v2007, %v880
      %v2063 = vsel %vm2018, %v2008, %v882
      %v2064 = vsel %vm2018, %v2009, %v884
      %v2065 = vsel %vm2018, %v2010, %v886
      %v2066 = vsel %vm2018, %v2011, %v888
      %v2067 = vsel %vm2018, %v2012, %v890
      %v2068 = vsel %vm2018, %v2013, %v892
      %v2069 = vsel %vm2018, %v2014, %v894
      %v2070 = vsel %vm2018, %v2015, %v896
      %v2071 = vsel %vm2018, %v2016, %v898
      %v2072 = vsel %vm2018, %v2017, %v900
      %vm2073 = vcmask 97280
      %v2074 = vsel %vm2073, %v2019, %v959
      %v2075 = vsel %vm2073, %v2020, %v961
      %v2076 = vsel %vm2073, %v2021, %v963
      %v2077 = vsel %vm2073, %v2022, %v965
      %v2078 = vsel %vm2073, %v2023, %v967
      %v2079 = vsel %vm2073, %v2024, %v969
      %v2080 = vsel %vm2073, %v2025, %v971
      %v2081 = vsel %vm2073, %v2026, %v973
      %v2082 = vsel %vm2073, %v2027, %v975
      %v2083 = vsel %vm2073, %v2028, %v977
      %v2084 = vsel %vm2073, %v2029, %v979
      %v2085 = vsel %vm2073, %v2030, %v981
      %v2086 = vsel %vm2073, %v2031, %v983
      %v2087 = vsel %vm2073, %v2032, %v985
      %v2088 = vsel %vm2073, %v2033, %v987
      %v2089 = vsel %vm2073, %v2034, %v989
      %v2090 = vsel %vm2073, %v2035, %v991
      %v2091 = vsel %vm2073, %v2036, %v993
      %v2092 = vsel %vm2073, %v2037, %v995
      %v2093 = vsel %vm2073, %v2038, %v997
      %v2094 = vsel %vm2073, %v2039, %v999
      %v2095 = vsel %vm2073, %v2040, %v1001
      %v2096 = vsel %vm2073, %v2041, %v1003
      %v2097 = vsel %vm2073, %v2042, %v1005
      %v2098 = vsel %vm2073, %v2043, %v1007
      %v2099 = vsel %vm2073, %v2044, %v1009
      %v2100 = vsel %vm2073, %v2045, %v1011
      %v2101 = vsel %vm2073, %v2046, %v1013
      %v2102 = vsel %vm2073, %v2047, %v1015
      %v2103 = vsel %vm2073, %v2048, %v1017
      %v2104 = vsel %vm2073, %v2049, %v1019
      %v2105 = vsel %vm2073, %v2050, %v1021
      %v2106 = vsel %vm2073, %v2051, %v1023
      %v2107 = vsel %vm2073, %v2052, %v1025
      %v2108 = vsel %vm2073, %v2053, %v1027
      %v2109 = vsel %vm2073, %v2054, %v1029
      %v2110 = vsel %vm2073, %v2055, %v1031
      %v2111 = vsel %vm2073, %v2056, %v1033
      %v2112 = vsel %vm2073, %v2057, %v1035
      %v2113 = vsel %vm2073, %v2058, %v1037
      %v2114 = vsel %vm2073, %v2059, %v1039
      %v2115 = vsel %vm2073, %v2060, %v1041
      %v2116 = vsel %vm2073, %v2061, %v1043
      %v2117 = vsel %vm2073, %v2062, %v1045
      %v2118 = vsel %vm2073, %v2063, %v1047
      %v2119 = vsel %vm2073, %v2064, %v1049
      %v2120 = vsel %vm2073, %v2065, %v1051
      %v2121 = vsel %vm2073, %v2066, %v1053
      %v2122 = vsel %vm2073, %v2067, %v1055
      %v2123 = vsel %vm2073, %v2068, %v1057
      %v2124 = vsel %vm2073, %v2069, %v1059
      %v2125 = vsel %vm2073, %v2070, %v1061
      %v2126 = vsel %vm2073, %v2071, %v1063
      %v2127 = vsel %vm2073, %v2072, %v1065
      %vm2128 = vcmask 130048
      %v2129 = vsel %vm2128, %v2074, %v1129
      %v2130 = vsel %vm2128, %v2075, %v1131
      %v2131 = vsel %vm2128, %v2076, %v1133
      %v2132 = vsel %vm2128, %v2077, %v1135
      %v2133 = vsel %vm2128, %v2078, %v1137
      %v2134 = vsel %vm2128, %v2079, %v1139
      %v2135 = vsel %vm2128, %v2080, %v1141
      %v2136 = vsel %vm2128, %v2081, %v1143
      %v2137 = vsel %vm2128, %v2082, %v1145
      %v2138 = vsel %vm2128, %v2083, %v1147
      %v2139 = vsel %vm2128, %v2084, %v1149
      %v2140 = vsel %vm2128, %v2085, %v1151
      %v2141 = vsel %vm2128, %v2086, %v1153
      %v2142 = vsel %vm2128, %v2087, %v1155
      %v2143 = vsel %vm2128, %v2088, %v1157
      %v2144 = vsel %vm2128, %v2089, %v1159
      %v2145 = vsel %vm2128, %v2090, %v1161
      %v2146 = vsel %vm2128, %v2091, %v1163
      %v2147 = vsel %vm2128, %v2092, %v1165
      %v2148 = vsel %vm2128, %v2093, %v1167
      %v2149 = vsel %vm2128, %v2094, %v1169
      %v2150 = vsel %vm2128, %v2095, %v1171
      %v2151 = vsel %vm2128, %v2096, %v1173
      %v2152 = vsel %vm2128, %v2097, %v1175
      %v2153 = vsel %vm2128, %v2098, %v1177
      %v2154 = vsel %vm2128, %v2099, %v1179
      %v2155 = vsel %vm2128, %v2100, %v1181
      %v2156 = vsel %vm2128, %v2101, %v1183
      %v2157 = vsel %vm2128, %v2102, %v1185
      %v2158 = vsel %vm2128, %v2103, %v1187
      %v2159 = vsel %vm2128, %v2104, %v1189
      %v2160 = vsel %vm2128, %v2105, %v1191
      %v2161 = vsel %vm2128, %v2106, %v1193
      %v2162 = vsel %vm2128, %v2107, %v1195
      %v2163 = vsel %vm2128, %v2108, %v1197
      %v2164 = vsel %vm2128, %v2109, %v1199
      %v2165 = vsel %vm2128, %v2110, %v1201
      %v2166 = vsel %vm2128, %v2111, %v1203
      %v2167 = vsel %vm2128, %v2112, %v1205
      %v2168 = vsel %vm2128, %v2113, %v1207
      %v2169 = vsel %vm2128, %v2114, %v1209
      %v2170 = vsel %vm2128, %v2115, %v1211
      %v2171 = vsel %vm2128, %v2116, %v1213
      %v2172 = vsel %vm2128, %v2117, %v1215
      %v2173 = vsel %vm2128, %v2118, %v1217
      %v2174 = vsel %vm2128, %v2119, %v1219
      %v2175 = vsel %vm2128, %v2120, %v1221
      %v2176 = vsel %vm2128, %v2121, %v1223
      %v2177 = vsel %vm2128, %v2122, %v1225
      %v2178 = vsel %vm2128, %v2123, %v1227
      %v2179 = vsel %vm2128, %v2124, %v1229
      %v2180 = vsel %vm2128, %v2125, %v1231
      %v2181 = vsel %vm2128, %v2126, %v1233
      %v2182 = vsel %vm2128, %v2127, %v1235
      %vm2183 = vcmask 162816
      %v2184 = vsel %vm2183, %v2129, %v1298
      %v2185 = vsel %vm2183, %v2130, %v1300
      %v2186 = vsel %vm2183, %v2131, %v1302
      %v2187 = vsel %vm2183, %v2132, %v1304
      %v2188 = vsel %vm2183, %v2133, %v1306
      %v2189 = vsel %vm2183, %v2134, %v1308
      %v2190 = vsel %vm2183, %v2135, %v1310
      %v2191 = vsel %vm2183, %v2136, %v1312
      %v2192 = vsel %vm2183, %v2137, %v1314
      %v2193 = vsel %vm2183, %v2138, %v1316
      %v2194 = vsel %vm2183, %v2139, %v1318
      %v2195 = vsel %vm2183, %v2140, %v1320
      %v2196 = vsel %vm2183, %v2141, %v1322
      %v2197 = vsel %vm2183, %v2142, %v1324
      %v2198 = vsel %vm2183, %v2143, %v1326
      %v2199 = vsel %vm2183, %v2144, %v1328
      %v2200 = vsel %vm2183, %v2145, %v1330
      %v2201 = vsel %vm2183, %v2146, %v1332
      %v2202 = vsel %vm2183, %v2147, %v1334
      %v2203 = vsel %vm2183, %v2148, %v1336
      %v2204 = vsel %vm2183, %v2149, %v1338
      %v2205 = vsel %vm2183, %v2150, %v1340
      %v2206 = vsel %vm2183, %v2151, %v1342
      %v2207 = vsel %vm2183, %v2152, %v1344
      %v2208 = vsel %vm2183, %v2153, %v1346
      %v2209 = vsel %vm2183, %v2154, %v1348
      %v2210 = vsel %vm2183, %v2155, %v1350
      %v2211 = vsel %vm2183, %v2156, %v1352
      %v2212 = vsel %vm2183, %v2157, %v1354
      %v2213 = vsel %vm2183, %v2158, %v1356
      %v2214 = vsel %vm2183, %v2159, %v1358
      %v2215 = vsel %vm2183, %v2160, %v1360
      %v2216 = vsel %vm2183, %v2161, %v1362
      %v2217 = vsel %vm2183, %v2162, %v1364
      %v2218 = vsel %vm2183, %v2163, %v1366
      %v2219 = vsel %vm2183, %v2164, %v1368
      %v2220 = vsel %vm2183, %v2165, %v1370
      %v2221 = vsel %vm2183, %v2166, %v1372
      %v2222 = vsel %vm2183, %v2167, %v1374
      %v2223 = vsel %vm2183, %v2168, %v1376
      %v2224 = vsel %vm2183, %v2169, %v1378
      %v2225 = vsel %vm2183, %v2170, %v1380
      %v2226 = vsel %vm2183, %v2171, %v1382
      %v2227 = vsel %vm2183, %v2172, %v1384
      %v2228 = vsel %vm2183, %v2173, %v1386
      %v2229 = vsel %vm2183, %v2174, %v1388
      %v2230 = vsel %vm2183, %v2175, %v1390
      %v2231 = vsel %vm2183, %v2176, %v1392
      %v2232 = vsel %vm2183, %v2177, %v1394
      %v2233 = vsel %vm2183, %v2178, %v1396
      %v2234 = vsel %vm2183, %v2179, %v1398
      %v2235 = vsel %vm2183, %v2180, %v1400
      %v2236 = vsel %vm2183, %v2181, %v1402
      %v2237 = vsel %vm2183, %v2182, %v1404
      %vm2238 = vcmask 195584
      %v2239 = vsel %vm2238, %v2184, %v1463
      %v2240 = vsel %vm2238, %v2185, %v1465
      %v2241 = vsel %vm2238, %v2186, %v1467
      %v2242 = vsel %vm2238, %v2187, %v1469
      %v2243 = vsel %vm2238, %v2188, %v1471
      %v2244 = vsel %vm2238, %v2189, %v1473
      %v2245 = vsel %vm2238, %v2190, %v1475
      %v2246 = vsel %vm2238, %v2191, %v1477
      %v2247 = vsel %vm2238, %v2192, %v1479
      %v2248 = vsel %vm2238, %v2193, %v1481
      %v2249 = vsel %vm2238, %v2194, %v1483
      %v2250 = vsel %vm2238, %v2195, %v1485
      %v2251 = vsel %vm2238, %v2196, %v1487
      %v2252 = vsel %vm2238, %v2197, %v1489
      %v2253 = vsel %vm2238, %v2198, %v1491
      %v2254 = vsel %vm2238, %v2199, %v1493
      %v2255 = vsel %vm2238, %v2200, %v1495
      %v2256 = vsel %vm2238, %v2201, %v1497
      %v2257 = vsel %vm2238, %v2202, %v1499
      %v2258 = vsel %vm2238, %v2203, %v1501
      %v2259 = vsel %vm2238, %v2204, %v1503
      %v2260 = vsel %vm2238, %v2205, %v1505
      %v2261 = vsel %vm2238, %v2206, %v1507
      %v2262 = vsel %vm2238, %v2207, %v1509
      %v2263 = vsel %vm2238, %v2208, %v1511
      %v2264 = vsel %vm2238, %v2209, %v1513
      %v2265 = vsel %vm2238, %v2210, %v1515
      %v2266 = vsel %vm2238, %v2211, %v1517
      %v2267 = vsel %vm2238, %v2212, %v1519
      %v2268 = vsel %vm2238, %v2213, %v1521
      %v2269 = vsel %vm2238, %v2214, %v1523
      %v2270 = vsel %vm2238, %v2215, %v1525
      %v2271 = vsel %vm2238, %v2216, %v1527
      %v2272 = vsel %vm2238, %v2217, %v1529
      %v2273 = vsel %vm2238, %v2218, %v1531
      %v2274 = vsel %vm2238, %v2219, %v1533
      %v2275 = vsel %vm2238, %v2220, %v1535
      %v2276 = vsel %vm2238, %v2221, %v1537
      %v2277 = vsel %vm2238, %v2222, %v1539
      %v2278 = vsel %vm2238, %v2223, %v1541
      %v2279 = vsel %vm2238, %v2224, %v1543
      %v2280 = vsel %vm2238, %v2225, %v1545
      %v2281 = vsel %vm2238, %v2226, %v1547
      %v2282 = vsel %vm2238, %v2227, %v1549
      %v2283 = vsel %vm2238, %v2228, %v1551
      %v2284 = vsel %vm2238, %v2229, %v1553
      %v2285 = vsel %vm2238, %v2230, %v1555
      %v2286 = vsel %vm2238, %v2231, %v1557
      %v2287 = vsel %vm2238, %v2232, %v1559
      %v2288 = vsel %vm2238, %v2233, %v1561
      %v2289 = vsel %vm2238, %v2234, %v1563
      %v2290 = vsel %vm2238, %v2235, %v1565
      %v2291 = vsel %vm2238, %v2236, %v1567
      %v2292 = vsel %vm2238, %v2237, %v1569
      %vm2293 = vcmask 228352
      %v2294 = vsel %vm2293, %v2239, %v1633
      %v2295 = vsel %vm2293, %v2240, %v1635
      %v2296 = vsel %vm2293, %v2241, %v1637
      %v2297 = vsel %vm2293, %v2242, %v1639
      %v2298 = vsel %vm2293, %v2243, %v1641
      %v2299 = vsel %vm2293, %v2244, %v1643
      %v2300 = vsel %vm2293, %v2245, %v1645
      %v2301 = vsel %vm2293, %v2246, %v1647
      %v2302 = vsel %vm2293, %v2247, %v1649
      %v2303 = vsel %vm2293, %v2248, %v1651
      %v2304 = vsel %vm2293, %v2249, %v1653
      %v2305 = vsel %vm2293, %v2250, %v1655
      %v2306 = vsel %vm2293, %v2251, %v1657
      %v2307 = vsel %vm2293, %v2252, %v1659
      %v2308 = vsel %vm2293, %v2253, %v1661
      %v2309 = vsel %vm2293, %v2254, %v1663
      %v2310 = vsel %vm2293, %v2255, %v1665
      %v2311 = vsel %vm2293, %v2256, %v1667
      %v2312 = vsel %vm2293, %v2257, %v1669
      %v2313 = vsel %vm2293, %v2258, %v1671
      %v2314 = vsel %vm2293, %v2259, %v1673
      %v2315 = vsel %vm2293, %v2260, %v1675
      %v2316 = vsel %vm2293, %v2261, %v1677
      %v2317 = vsel %vm2293, %v2262, %v1679
      %v2318 = vsel %vm2293, %v2263, %v1681
      %v2319 = vsel %vm2293, %v2264, %v1683
      %v2320 = vsel %vm2293, %v2265, %v1685
      %v2321 = vsel %vm2293, %v2266, %v1687
      %v2322 = vsel %vm2293, %v2267, %v1689
      %v2323 = vsel %vm2293, %v2268, %v1691
      %v2324 = vsel %vm2293, %v2269, %v1693
      %v2325 = vsel %vm2293, %v2270, %v1695
      %v2326 = vsel %vm2293, %v2271, %v1697
      %v2327 = vsel %vm2293, %v2272, %v1699
      %v2328 = vsel %vm2293, %v2273, %v1701
      %v2329 = vsel %vm2293, %v2274, %v1703
      %v2330 = vsel %vm2293, %v2275, %v1705
      %v2331 = vsel %vm2293, %v2276, %v1707
      %v2332 = vsel %vm2293, %v2277, %v1709
      %v2333 = vsel %vm2293, %v2278, %v1711
      %v2334 = vsel %vm2293, %v2279, %v1713
      %v2335 = vsel %vm2293, %v2280, %v1715
      %v2336 = vsel %vm2293, %v2281, %v1717
      %v2337 = vsel %vm2293, %v2282, %v1719
      %v2338 = vsel %vm2293, %v2283, %v1721
      %v2339 = vsel %vm2293, %v2284, %v1723
      %v2340 = vsel %vm2293, %v2285, %v1725
      %v2341 = vsel %vm2293, %v2286, %v1727
      %v2342 = vsel %vm2293, %v2287, %v1729
      %v2343 = vsel %vm2293, %v2288, %v1731
      %v2344 = vsel %vm2293, %v2289, %v1733
      %v2345 = vsel %vm2293, %v2290, %v1735
      %v2346 = vsel %vm2293, %v2291, %v1737
      %v2347 = vsel %vm2293, %v2292, %v1739
      %vm2348 = vcmask 261120
      %v2349 = vsel %vm2348, %v2294, %v1802
      %v2350 = vsel %vm2348, %v2295, %v1804
      %v2351 = vsel %vm2348, %v2296, %v1806
      %v2352 = vsel %vm2348, %v2297, %v1808
      %v2353 = vsel %vm2348, %v2298, %v1810
      %v2354 = vsel %vm2348, %v2299, %v1812
      %v2355 = vsel %vm2348, %v2300, %v1814
      %v2356 = vsel %vm2348, %v2301, %v1816
      %v2357 = vsel %vm2348, %v2302, %v1818
      %v2358 = vsel %vm2348, %v2303, %v1820
      %v2359 = vsel %vm2348, %v2304, %v1822
      %v2360 = vsel %vm2348, %v2305, %v1824
      %v2361 = vsel %vm2348, %v2306, %v1826
      %v2362 = vsel %vm2348, %v2307, %v1828
      %v2363 = vsel %vm2348, %v2308, %v1830
      %v2364 = vsel %vm2348, %v2309, %v1832
      %v2365 = vsel %vm2348, %v2310, %v1834
      %v2366 = vsel %vm2348, %v2311, %v1836
      %v2367 = vsel %vm2348, %v2312, %v1838
      %v2368 = vsel %vm2348, %v2313, %v1840
      %v2369 = vsel %vm2348, %v2314, %v1842
      %v2370 = vsel %vm2348, %v2315, %v1844
      %v2371 = vsel %vm2348, %v2316, %v1846
      %v2372 = vsel %vm2348, %v2317, %v1848
      %v2373 = vsel %vm2348, %v2318, %v1850
      %v2374 = vsel %vm2348, %v2319, %v1852
      %v2375 = vsel %vm2348, %v2320, %v1854
      %v2376 = vsel %vm2348, %v2321, %v1856
      %v2377 = vsel %vm2348, %v2322, %v1858
      %v2378 = vsel %vm2348, %v2323, %v1860
      %v2379 = vsel %vm2348, %v2324, %v1862
      %v2380 = vsel %vm2348, %v2325, %v1864
      %v2381 = vsel %vm2348, %v2326, %v1866
      %v2382 = vsel %vm2348, %v2327, %v1868
      %v2383 = vsel %vm2348, %v2328, %v1870
      %v2384 = vsel %vm2348, %v2329, %v1872
      %v2385 = vsel %vm2348, %v2330, %v1874
      %v2386 = vsel %vm2348, %v2331, %v1876
      %v2387 = vsel %vm2348, %v2332, %v1878
      %v2388 = vsel %vm2348, %v2333, %v1880
      %v2389 = vsel %vm2348, %v2334, %v1882
      %v2390 = vsel %vm2348, %v2335, %v1884
      %v2391 = vsel %vm2348, %v2336, %v1886
      %v2392 = vsel %vm2348, %v2337, %v1888
      %v2393 = vsel %vm2348, %v2338, %v1890
      %v2394 = vsel %vm2348, %v2339, %v1892
      %v2395 = vsel %vm2348, %v2340, %v1894
      %v2396 = vsel %vm2348, %v2341, %v1896
      %v2397 = vsel %vm2348, %v2342, %v1898
      %v2398 = vsel %vm2348, %v2343, %v1900
      %v2399 = vsel %vm2348, %v2344, %v1902
      %v2400 = vsel %vm2348, %v2345, %v1904
      %v2401 = vsel %vm2348, %v2346, %v1906
      %v2402 = vsel %vm2348, %v2347, %v1908
      %v2403 = vld [vmem:[%s1] sm:$0xff]
      %v2404 = vld [vmem:[%s1 + $0x8] sm:$0xff]
      %v2405 = vld [vmem:[%s1 + $0x10] sm:$0xff]
      %v2406 = vld [vmem:[%s1 + $0x18] sm:$0xff]
      %v2407 = vld [vmem:[%s1 + $0x20] sm:$0xf]
      %v2408 = vld [vmem:[%s2] sm:$0x1]
      %v2410 = vlaneseq
      %v2411 = vshrl.u32 %v2410, 7
      %v2412 = vsub.s32 0, %v2411
      %v2413 = vrot.slane %v2408, %v2412
      %vm2415 = vcmask 293888
      %v2417 = vsel %vm2415, %v2349, 0
      %v2420 = vsel %vm2415, %v2350, 0
      %v2423 = vsel %vm2415, %v2351, 0
      %v2426 = vsel %vm2415, %v2352, 0
      %v2429 = vsel %vm2415, %v2353, 0
      %v2432 = vsel %vm2415, %v2354, 0
      %v2435 = vsel %vm2415, %v2355, 0
      %v2438 = vsel %vm2415, %v2356, 0
      %v2441 = vsel %vm2415, %v2357, 0
      %v2444 = vsel %vm2415, %v2358, 0
      %v2447 = vsel %vm2415, %v2359, 0
      %v2450 = vsel %vm2415, %v2360, 0
      %v2453 = vsel %vm2415, %v2361, 0
      %v2456 = vsel %vm2415, %v2362, 0
      %v2459 = vsel %vm2415, %v2363, 0
      %v2462 = vsel %vm2415, %v2364, 0
      %v2465 = vsel %vm2415, %v2365, 0
      %v2468 = vsel %vm2415, %v2366, 0
      %v2471 = vsel %vm2415, %v2367, 0
      %v2474 = vsel %vm2415, %v2368, 0
      %v2477 = vsel %vm2415, %v2369, 0
      %v2480 = vsel %vm2415, %v2370, 0
      %v2483 = vsel %vm2415, %v2371, 0
      %v2486 = vsel %vm2415, %v2372, 0
      %v2489 = vsel %vm2415, %v2373, 0
      %v2492 = vsel %vm2415, %v2374, 0
      %v2495 = vsel %vm2415, %v2375, 0
      %v2498 = vsel %vm2415, %v2376, 0
      %v2501 = vsel %vm2415, %v2377, 0
      %v2504 = vsel %vm2415, %v2378, 0
      %v2507 = vsel %vm2415, %v2379, 0
      %v2510 = vsel %vm2415, %v2380, 0
      %v2513 = vsel %vm2415, %v2381, 0
      %v2516 = vsel %vm2415, %v2382, 0
      %v2519 = vsel %vm2415, %v2383, 0
      %v2522 = vsel %vm2415, %v2384, 0
      %v2525 = vsel %vm2415, %v2385, 0
      %v2528 = vsel %vm2415, %v2386, 0
      %v2531 = vsel %vm2415, %v2387, 0
      %v2534 = vsel %vm2415, %v2388, 0
      %v2537 = vsel %vm2415, %v2389, 0
      %v2540 = vsel %vm2415, %v2390, 0
      %v2543 = vsel %vm2415, %v2391, 0
      %v2546 = vsel %vm2415, %v2392, 0
      %v2549 = vsel %vm2415, %v2393, 0
      %v2552 = vsel %vm2415, %v2394, 0
      %v2555 = vsel %vm2415, %v2395, 0
      %v2558 = vsel %vm2415, %v2396, 0
      %v2561 = vsel %vm2415, %v2397, 0
      %v2564 = vsel %vm2415, %v2398, 0
      %v2567 = vsel %vm2415, %v2399, 0
      %v2570 = vsel %vm2415, %v2400, 0
      %v2573 = vsel %vm2415, %v2401, 0
      %v2576 = vsel %vm2415, %v2402, 0
      %vm2578 = vcmask 1043456
      %v2580 = vsel %vm2578, %v2407, 0
      %2582 = vmatprep.subr.mxu0 0.0
      %2583 = vmatpush1.msra.mxu0 %v2403
      %2584 = vmatprep.subr.mxu0 0.0
      %2585 = vmatpush1.msra.mxu0 %v2404
      %2586 = vmatprep.subr.mxu0 0.0
      %2587 = vmatpush1.msra.mxu0 %v2405
      %2588 = vmatprep.subr.mxu0 0.0
      %2589 = vmatpush1.msra.mxu0 %v2406
      %2590 = vmatprep.subr.mxu0 0.0
      %2591 = vmatpush1.msra.mxu0 %v2580
      %2592 = vmatprep.subr.mxu0 0.0
      %2593 = vmatpush1.msra.mxu0 0.0
      %2594 = vmatprep.subr.mxu0 0.0
      %2595 = vmatpush1.msra.mxu0 0.0
      %2596 = vmatprep.subr.mxu0 0.0
      %2597 = vmatpush1.msra.mxu0 0.0
      %2598 = vmatprep.subr.mxu0 0.0
      %2599 = vmatpush1.msra.mxu0 0.0
      %2600 = vmatprep.subr.mxu0 0.0
      %2601 = vmatpush1.msra.mxu0 0.0
      %2602 = vmatprep.subr.mxu0 0.0
      %2603 = vmatpush1.msra.mxu0 0.0
      %2604 = vmatprep.subr.mxu0 0.0
      %2605 = vmatpush1.msra.mxu0 0.0
      %2606 = vmatprep.subr.mxu0 0.0
      %2607 = vmatpush1.msra.mxu0 0.0
      %2608 = vmatprep.subr.mxu0 0.0
      %2609 = vmatpush1.msra.mxu0 0.0
      %2610 = vmatprep.subr.mxu0 0.0
      %2611 = vmatpush1.msra.mxu0 0.0
      %2612 = vmatprep.subr.mxu0 0.0
      %2613 = vmatpush1.msra.mxu0 0.0
      %2614 = vmatprep.subr.mxu0 0.0
      %2615 = vmatpush1.msra.mxu0 0.0
      %2616 = vmatprep.subr.mxu0 0.0
      %2617 = vmatpush1.msra.mxu0 0.0
      %2618 = vmatprep.subr.mxu0 0.0
      %2619 = vmatpush1.msra.mxu0 0.0
      %2620 = vmatprep.subr.mxu0 0.0
      %2621 = vmatpush1.msra.mxu0 0.0
      %2622 = vmatprep.subr.mxu0 0.0
      %2623 = vmatpush1.msra.mxu0 0.0
      %2624 = vmatprep.subr.mxu0 0.0
      %2625 = vmatpush1.msra.mxu0 0.0
      %2626 = vmatprep.subr.mxu0 0.0
      %2627 = vmatpush1.msra.mxu0 0.0
      %2628 = vmatprep.subr.mxu0 0.0
      %2629 = vmatpush1.msra.mxu0 0.0
      %2630 = vmatprep.subr.mxu0 0.0
      %2631 = vmatpush1.msra.mxu0 0.0
      %2632 = vmatprep.subr.mxu0 0.0
      %2633 = vmatpush1.msra.mxu0 0.0
      %2634 = vmatprep.subr.mxu0 0.0
      %2635 = vmatpush1.msra.mxu0 0.0
      %2636 = vmatprep.subr.mxu0 0.0
      %2637 = vmatpush1.msra.mxu0 0.0
      %2638 = vmatprep.subr.mxu0 0.0
      %2639 = vmatpush1.msra.mxu0 0.0
      %2640 = vmatprep.subr.mxu0 0.0
      %2641 = vmatpush1.msra.mxu0 0.0
      %2642 = vmatprep.subr.mxu0 0.0
      %2643 = vmatpush1.msra.mxu0 0.0
      %2644 = vmatprep.subr.mxu0 0.0
      %2645 = vmatpush1.msra.mxu0 0.0
      %2646 = vmatprep.mubr.f32.mxu0 0.0
      %2647 = vmatmul.mubr.f32.gmra.mrb[0].mxu0 %v2417
      %v2648 = vpop.f32.mrb[0].mxu0
      %v2649 = vadd.f32 %v2413, %v2648
      %v2650 = vpop.f32.mrb[0].mxu0
      %2651 = vmatprep.mubr.f32.mxu0 0.0
      %2652 = vmatmul.mubr.f32.gmra.mrb[0].mxu0 %v2420
      %v2653 = vpop.f32.mrb[0].mxu0
      %v2654 = vadd.f32 %v2413, %v2653
      %v2655 = vpop.f32.mrb[0].mxu0
      %2656 = vmatprep.mubr.f32.mxu0 0.0
      %2657 = vmatmul.mubr.f32.gmra.mrb[0].mxu0 %v2423
      %v2658 = vpop.f32.mrb[0].mxu0
      %v2659 = vadd.f32 %v2413, %v2658
      %v2660 = vpop.f32.mrb[0].mxu0
      %2661 = vmatprep.mubr.f32.mxu0 0.0
      %2662 = vmatmul.mubr.f32.gmra.mrb[0].mxu0 %v2426
      %v2663 = vpop.f32.mrb[0].mxu0
      %v2664 = vadd.f32 %v2413, %v2663
      %v2665 = vpop.f32.mrb[0].mxu0
      %2666 = vmatprep.mubr.f32.mxu0 0.0
      %2667 = vmatmul.mubr.f32.gmra.mrb[0].mxu0 %v2429
      %v2668 = vpop.f32.mrb[0].mxu0
      %v2669 = vadd.f32 %v2413, %v2668
      %v2670 = vpop.f32.mrb[0].mxu0
      %2671 = vmatprep.mubr.f32.mxu0 0.0
      %2672 = vmatmul.mubr.f32.gmra.mrb[0].mxu0 %v2432
      %v2673 = vpop.f32.mrb[0].mxu0
      %v2674 = vadd.f32 %v2413, %v2673
      %v2675 = vpop.f32.mrb[0].mxu0
      %2676 = vmatprep.mubr.f32.mxu0 0.0
      %2677 = vmatmul.mubr.f32.gmra.mrb[0].mxu0 %v2435
      %v2678 = vpop.f32.mrb[0].mxu0
      %v2679 = vadd.f32 %v2413, %v2678
      %v2680 = vpop.f32.mrb[0].mxu0
      %2681 = vmatprep.mubr.f32.mxu0 0.0
      %2682 = vmatmul.mubr.f32.gmra.mrb[0].mxu0 %v2438
      %v2683 = vpop.f32.mrb[0].mxu0
      %v2684 = vadd.f32 %v2413, %v2683
      %v2685 = vpop.f32.mrb[0].mxu0
      %2686 = vmatprep.mubr.f32.mxu0 0.0
      %2687 = vmatmul.mubr.f32.gmra.mrb[0].mxu0 %v2441
      %v2688 = vpop.f32.mrb[0].mxu0
      %v2689 = vadd.f32 %v2413, %v2688
      %v2690 = vpop.f32.mrb[0].mxu0
      %2691 = vmatprep.mubr.f32.mxu0 0.0
      %2692 = vmatmul.mubr.f32.gmra.mrb[0].mxu0 %v2444
      %v2693 = vpop.f32.mrb[0].mxu0
      %v2694 = vadd.f32 %v2413, %v2693
      %v2695 = vpop.f32.mrb[0].mxu0
      %2696 = vmatprep.mubr.f32.mxu0 0.0
      %2697 = vmatmul.mubr.f32.gmra.mrb[0].mxu0 %v2447
      %v2698 = vpop.f32.mrb[0].mxu0
      %v2699 = vadd.f32 %v2413, %v2698
      %v2700 = vpop.f32.mrb[0].mxu0
      %2701 = vmatprep.mubr.f32.mxu0 0.0
      %2702 = vmatmul.mubr.f32.gmra.mrb[0].mxu0 %v2450
      %v2703 = vpop.f32.mrb[0].mxu0
      %v2704 = vadd.f32 %v2413, %v2703
      %v2705 = vpop.f32.mrb[0].mxu0
      %2706 = vmatprep.mubr.f32.mxu0 0.0
      %2707 = vmatmul.mubr.f32.gmra.mrb[0].mxu0 %v2453
      %v2708 = vpop.f32.mrb[0].mxu0
      %v2709 = vadd.f32 %v2413, %v2708
      %v2710 = vpop.f32.mrb[0].mxu0
      %2711 = vmatprep.mubr.f32.mxu0 0.0
      %2712 = vmatmul.mubr.f32.gmra.mrb[0].mxu0 %v2456
      %v2713 = vpop.f32.mrb[0].mxu0
      %v2714 = vadd.f32 %v2413, %v2713
      %v2715 = vpop.f32.mrb[0].mxu0
      %2716 = vmatprep.mubr.f32.mxu0 0.0
      %2717 = vmatmul.mubr.f32.gmra.mrb[0].mxu0 %v2459
      %v2718 = vpop.f32.mrb[0].mxu0
      %v2719 = vadd.f32 %v2413, %v2718
      %v2720 = vpop.f32.mrb[0].mxu0
      %2721 = vmatprep.mubr.f32.mxu0 0.0
      %2722 = vmatmul.mubr.f32.gmra.mrb[0].mxu0 %v2462
      %v2723 = vpop.f32.mrb[0].mxu0
      %v2724 = vadd.f32 %v2413, %v2723
      %v2725 = vpop.f32.mrb[0].mxu0
      %2726 = vmatprep.mubr.f32.mxu0 0.0
      %2727 = vmatmul.mubr.f32.gmra.mrb[0].mxu0 %v2465
      %v2728 = vpop.f32.mrb[0].mxu0
      %v2729 = vadd.f32 %v2413, %v2728
      %v2730 = vpop.f32.mrb[0].mxu0
      %2731 = vmatprep.mubr.f32.mxu0 0.0
      %2732 = vmatmul.mubr.f32.gmra.mrb[0].mxu0 %v2468
      %v2733 = vpop.f32.mrb[0].mxu0
      %v2734 = vadd.f32 %v2413, %v2733
      %v2735 = vpop.f32.mrb[0].mxu0
      %2736 = vmatprep.mubr.f32.mxu0 0.0
      %2737 = vmatmul.mubr.f32.gmra.mrb[0].mxu0 %v2471
      %v2738 = vpop.f32.mrb[0].mxu0
      %v2739 = vadd.f32 %v2413, %v2738
      %v2740 = vpop.f32.mrb[0].mxu0
      %2741 = vmatprep.mubr.f32.mxu0 0.0
      %2742 = vmatmul.mubr.f32.gmra.mrb[0].mxu0 %v2474
      %v2743 = vpop.f32.mrb[0].mxu0
      %v2744 = vadd.f32 %v2413, %v2743
      %v2745 = vpop.f32.mrb[0].mxu0
      %2746 = vmatprep.mubr.f32.mxu0 0.0
      %2747 = vmatmul.mubr.f32.gmra.mrb[0].mxu0 %v2477
      %v2748 = vpop.f32.mrb[0].mxu0
      %v2749 = vadd.f32 %v2413, %v2748
      %v2750 = vpop.f32.mrb[0].mxu0
      %2751 = vmatprep.mubr.f32.mxu0 0.0
      %2752 = vmatmul.mubr.f32.gmra.mrb[0].mxu0 %v2480
      %v2753 = vpop.f32.mrb[0].mxu0
      %v2754 = vadd.f32 %v2413, %v2753
      %v2755 = vpop.f32.mrb[0].mxu0
      %2756 = vmatprep.mubr.f32.mxu0 0.0
      %2757 = vmatmul.mubr.f32.gmra.mrb[0].mxu0 %v2483
      %v2758 = vpop.f32.mrb[0].mxu0
      %v2759 = vadd.f32 %v2413, %v2758
      %v2760 = vpop.f32.mrb[0].mxu0
      %2761 = vmatprep.mubr.f32.mxu0 0.0
      %2762 = vmatmul.mubr.f32.gmra.mrb[0].mxu0 %v2486
      %v2763 = vpop.f32.mrb[0].mxu0
      %v2764 = vadd.f32 %v2413, %v2763
      %v2765 = vpop.f32.mrb[0].mxu0
      %2766 = vmatprep.mubr.f32.mxu0 0.0
      %2767 = vmatmul.mubr.f32.gmra.mrb[0].mxu0 %v2489
      %v2768 = vpop.f32.mrb[0].mxu0
      %v2769 = vadd.f32 %v2413, %v2768
      %v2770 = vpop.f32.mrb[0].mxu0
      %2771 = vmatprep.mubr.f32.mxu0 0.0
      %2772 = vmatmul.mubr.f32.gmra.mrb[0].mxu0 %v2492
      %v2773 = vpop.f32.mrb[0].mxu0
      %v2774 = vadd.f32 %v2413, %v2773
      %v2775 = vpop.f32.mrb[0].mxu0
      %2776 = vmatprep.mubr.f32.mxu0 0.0
      %2777 = vmatmul.mubr.f32.gmra.mrb[0].mxu0 %v2495
      %v2778 = vpop.f32.mrb[0].mxu0
      %v2779 = vadd.f32 %v2413, %v2778
      %v2780 = vpop.f32.mrb[0].mxu0
      %2781 = vmatprep.mubr.f32.mxu0 0.0
      %2782 = vmatmul.mubr.f32.gmra.mrb[0].mxu0 %v2498
      %v2783 = vpop.f32.mrb[0].mxu0
      %v2784 = vadd.f32 %v2413, %v2783
      %v2785 = vpop.f32.mrb[0].mxu0
      %2786 = vmatprep.mubr.f32.mxu0 0.0
      %2787 = vmatmul.mubr.f32.gmra.mrb[0].mxu0 %v2501
      %v2788 = vpop.f32.mrb[0].mxu0
      %v2789 = vadd.f32 %v2413, %v2788
      %v2790 = vpop.f32.mrb[0].mxu0
      %2791 = vmatprep.mubr.f32.mxu0 0.0
      %2792 = vmatmul.mubr.f32.gmra.mrb[0].mxu0 %v2504
      %v2793 = vpop.f32.mrb[0].mxu0
      %v2794 = vadd.f32 %v2413, %v2793
      %v2795 = vpop.f32.mrb[0].mxu0
      %2796 = vmatprep.mubr.f32.mxu0 0.0
      %2797 = vmatmul.mubr.f32.gmra.mrb[0].mxu0 %v2507
      %v2798 = vpop.f32.mrb[0].mxu0
      %v2799 = vadd.f32 %v2413, %v2798
      %v2800 = vpop.f32.mrb[0].mxu0
      %2801 = vmatprep.mubr.f32.mxu0 0.0
      %2802 = vmatmul.mubr.f32.gmra.mrb[0].mxu0 %v2510
      %v2803 = vpop.f32.mrb[0].mxu0
      %v2804 = vadd.f32 %v2413, %v2803
      %v2805 = vpop.f32.mrb[0].mxu0
      %2806 = vmatprep.mubr.f32.mxu0 0.0
      %2807 = vmatmul.mubr.f32.gmra.mrb[0].mxu0 %v2513
      %v2808 = vpop.f32.mrb[0].mxu0
      %v2809 = vadd.f32 %v2413, %v2808
      %v2810 = vpop.f32.mrb[0].mxu0
      %2811 = vmatprep.mubr.f32.mxu0 0.0
      %2812 = vmatmul.mubr.f32.gmra.mrb[0].mxu0 %v2516
      %v2813 = vpop.f32.mrb[0].mxu0
      %v2814 = vadd.f32 %v2413, %v2813
      %v2815 = vpop.f32.mrb[0].mxu0
      %2816 = vmatprep.mubr.f32.mxu0 0.0
      %2817 = vmatmul.mubr.f32.gmra.mrb[0].mxu0 %v2519
      %v2818 = vpop.f32.mrb[0].mxu0
      %v2819 = vadd.f32 %v2413, %v2818
      %v2820 = vpop.f32.mrb[0].mxu0
      %2821 = vmatprep.mubr.f32.mxu0 0.0
      %2822 = vmatmul.mubr.f32.gmra.mrb[0].mxu0 %v2522
      %v2823 = vpop.f32.mrb[0].mxu0
      %v2824 = vadd.f32 %v2413, %v2823
      %v2825 = vpop.f32.mrb[0].mxu0
      %2826 = vmatprep.mubr.f32.mxu0 0.0
      %2827 = vmatmul.mubr.f32.gmra.mrb[0].mxu0 %v2525
      %v2828 = vpop.f32.mrb[0].mxu0
      %v2829 = vadd.f32 %v2413, %v2828
      %v2830 = vpop.f32.mrb[0].mxu0
      %2831 = vmatprep.mubr.f32.mxu0 0.0
      %2832 = vmatmul.mubr.f32.gmra.mrb[0].mxu0 %v2528
      %v2833 = vpop.f32.mrb[0].mxu0
      %v2834 = vadd.f32 %v2413, %v2833
      %v2835 = vpop.f32.mrb[0].mxu0
      %2836 = vmatprep.mubr.f32.mxu0 0.0
      %2837 = vmatmul.mubr.f32.gmra.mrb[0].mxu0 %v2531
      %v2838 = vpop.f32.mrb[0].mxu0
      %v2839 = vadd.f32 %v2413, %v2838
      %v2840 = vpop.f32.mrb[0].mxu0
      %2841 = vmatprep.mubr.f32.mxu0 0.0
      %2842 = vmatmul.mubr.f32.gmra.mrb[0].mxu0 %v2534
      %v2843 = vpop.f32.mrb[0].mxu0
      %v2844 = vadd.f32 %v2413, %v2843
      %v2845 = vpop.f32.mrb[0].mxu0
      %2846 = vmatprep.mubr.f32.mxu0 0.0
      %2847 = vmatmul.mubr.f32.gmra.mrb[0].mxu0 %v2537
      %v2848 = vpop.f32.mrb[0].mxu0
      %v2849 = vadd.f32 %v2413, %v2848
      %v2850 = vpop.f32.mrb[0].mxu0
      %2851 = vmatprep.mubr.f32.mxu0 0.0
      %2852 = vmatmul.mubr.f32.gmra.mrb[0].mxu0 %v2540
      %v2853 = vpop.f32.mrb[0].mxu0
      %v2854 = vadd.f32 %v2413, %v2853
      %v2855 = vpop.f32.mrb[0].mxu0
      %2856 = vmatprep.mubr.f32.mxu0 0.0
      %2857 = vmatmul.mubr.f32.gmra.mrb[0].mxu0 %v2543
      %v2858 = vpop.f32.mrb[0].mxu0
      %v2859 = vadd.f32 %v2413, %v2858
      %v2860 = vpop.f32.mrb[0].mxu0
      %2861 = vmatprep.mubr.f32.mxu0 0.0
      %2862 = vmatmul.mubr.f32.gmra.mrb[0].mxu0 %v2546
      %v2863 = vpop.f32.mrb[0].mxu0
      %v2864 = vadd.f32 %v2413, %v2863
      %v2865 = vpop.f32.mrb[0].mxu0
      %2866 = vmatprep.mubr.f32.mxu0 0.0
      %2867 = vmatmul.mubr.f32.gmra.mrb[0].mxu0 %v2549
      %v2868 = vpop.f32.mrb[0].mxu0
      %v2869 = vadd.f32 %v2413, %v2868
      %v2870 = vpop.f32.mrb[0].mxu0
      %2871 = vmatprep.mubr.f32.mxu0 0.0
      %2872 = vmatmul.mubr.f32.gmra.mrb[0].mxu0 %v2552
      %v2873 = vpop.f32.mrb[0].mxu0
      %v2874 = vadd.f32 %v2413, %v2873
      %v2875 = vpop.f32.mrb[0].mxu0
      %2876 = vmatprep.mubr.f32.mxu0 0.0
      %2877 = vmatmul.mubr.f32.gmra.mrb[0].mxu0 %v2555
      %v2878 = vpop.f32.mrb[0].mxu0
      %v2879 = vadd.f32 %v2413, %v2878
      %v2880 = vpop.f32.mrb[0].mxu0
      %2881 = vmatprep.mubr.f32.mxu0 0.0
      %2882 = vmatmul.mubr.f32.gmra.mrb[0].mxu0 %v2558
      %v2883 = vpop.f32.mrb[0].mxu0
      %v2884 = vadd.f32 %v2413, %v2883
      %v2885 = vpop.f32.mrb[0].mxu0
      %2886 = vmatprep.mubr.f32.mxu0 0.0
      %2887 = vmatmul.mubr.f32.gmra.mrb[0].mxu0 %v2561
      %v2888 = vpop.f32.mrb[0].mxu0
      %v2889 = vadd.f32 %v2413, %v2888
      %v2890 = vpop.f32.mrb[0].mxu0
      %2891 = vmatprep.mubr.f32.mxu0 0.0
      %2892 = vmatmul.mubr.f32.gmra.mrb[0].mxu0 %v2564
      %v2893 = vpop.f32.mrb[0].mxu0
      %v2894 = vadd.f32 %v2413, %v2893
      %v2895 = vpop.f32.mrb[0].mxu0
      %2896 = vmatprep.mubr.f32.mxu0 0.0
      %2897 = vmatmul.mubr.f32.gmra.mrb[0].mxu0 %v2567
      %v2898 = vpop.f32.mrb[0].mxu0
      %v2899 = vadd.f32 %v2413, %v2898
      %v2900 = vpop.f32.mrb[0].mxu0
      %2901 = vmatprep.mubr.f32.mxu0 0.0
      %2902 = vmatmul.mubr.f32.gmra.mrb[0].mxu0 %v2570
      %v2903 = vpop.f32.mrb[0].mxu0
      %v2904 = vadd.f32 %v2413, %v2903
      %v2905 = vpop.f32.mrb[0].mxu0
      %2906 = vmatprep.mubr.f32.mxu0 0.0
      %2907 = vmatmul.mubr.f32.gmra.mrb[0].mxu0 %v2573
      %v2908 = vpop.f32.mrb[0].mxu0
      %v2909 = vadd.f32 %v2413, %v2908
      %v2910 = vpop.f32.mrb[0].mxu0
      %2911 = vmatprep.mubr.f32.mxu0 0.0
      %2912 = vmatmul.mubr.f32.gmra.mrb[0].mxu0 %v2576
      %v2913 = vpop.f32.mrb[0].mxu0
      %v2914 = vadd.f32 %v2413, %v2913
      %v2915 = vpop.f32.mrb[0].mxu0
      %2916 = vdwg.mxu0
      %v2917 = vmax.f32 %v2649, 0.0
      %v2918 = vmax.f32 %v2654, 0.0
      %v2919 = vmax.f32 %v2659, 0.0
      %v2920 = vmax.f32 %v2664, 0.0
      %v2921 = vmax.f32 %v2669, 0.0
      %v2922 = vmax.f32 %v2674, 0.0
      %v2923 = vmax.f32 %v2679, 0.0
      %v2924 = vmax.f32 %v2684, 0.0
      %v2925 = vmax.f32 %v2689, 0.0
      %v2926 = vmax.f32 %v2694, 0.0
      %v2927 = vmax.f32 %v2699, 0.0
      %v2928 = vmax.f32 %v2704, 0.0
      %v2929 = vmax.f32 %v2709, 0.0
      %v2930 = vmax.f32 %v2714, 0.0
      %v2931 = vmax.f32 %v2719, 0.0
      %v2932 = vmax.f32 %v2724, 0.0
      %v2933 = vmax.f32 %v2729, 0.0
      %v2934 = vmax.f32 %v2734, 0.0
      %v2935 = vmax.f32 %v2739, 0.0
      %v2936 = vmax.f32 %v2744, 0.0
      %v2937 = vmax.f32 %v2749, 0.0
      %v2938 = vmax.f32 %v2754, 0.0
      %v2939 = vmax.f32 %v2759, 0.0
      %v2940 = vmax.f32 %v2764, 0.0
      %v2941 = vmax.f32 %v2769, 0.0
      %v2942 = vmax.f32 %v2774, 0.0
      %v2943 = vmax.f32 %v2779, 0.0
      %v2944 = vmax.f32 %v2784, 0.0
      %v2945 = vmax.f32 %v2789, 0.0
      %v2946 = vmax.f32 %v2794, 0.0
      %v2947 = vmax.f32 %v2799, 0.0
      %v2948 = vmax.f32 %v2804, 0.0
      %v2949 = vmax.f32 %v2809, 0.0
      %v2950 = vmax.f32 %v2814, 0.0
      %v2951 = vmax.f32 %v2819, 0.0
      %v2952 = vmax.f32 %v2824, 0.0
      %v2953 = vmax.f32 %v2829, 0.0
      %v2954 = vmax.f32 %v2834, 0.0
      %v2955 = vmax.f32 %v2839, 0.0
      %v2956 = vmax.f32 %v2844, 0.0
      %v2957 = vmax.f32 %v2849, 0.0
      %v2958 = vmax.f32 %v2854, 0.0
      %v2959 = vmax.f32 %v2859, 0.0
      %v2960 = vmax.f32 %v2864, 0.0
      %v2961 = vmax.f32 %v2869, 0.0
      %v2962 = vmax.f32 %v2874, 0.0
      %v2963 = vmax.f32 %v2879, 0.0
      %v2964 = vmax.f32 %v2884, 0.0
      %v2965 = vmax.f32 %v2889, 0.0
      %v2966 = vmax.f32 %v2894, 0.0
      %v2967 = vmax.f32 %v2899, 0.0
      %v2968 = vmax.f32 %v2904, 0.0
      %v2969 = vmax.f32 %v2909, 0.0
      %v2970 = vmax.f32 %v2914, 0.0
      %v2971 = vlaneseq
      %v2972 = vshrl.u32 %v2971, 7
      %v2973 = vadd.s32 %v2972, 8
      %v2974 = vadd.s32 %v2972, 16
      %vm2975 = vcmp.ge.s32.totalorder %v2972, 1
      %vm2976 = vcmp.ge.s32.totalorder %v2973, 1
      %vm2977 = vcmp.ge.s32.totalorder %v2974, 1
      %vm2978 = vmand 0, %vm2975
      %vm2979 = vmand 0, %vm2976
      %vm2980 = vmand 0, %vm2977
      %vm2981 = vmand 1, %vm2975
      %vm2982 = vmand 1, %vm2976
      %vm2983 = vmand 1, %vm2977
      %vm2984 = vcmp.le.s32.totalorder %v2972, 16
      %vm2985 = vcmp.le.s32.totalorder %v2973, 16
      %vm2986 = vcmp.le.s32.totalorder %v2974, 16
      %vm2987 = vmand %vm2978, %vm2984
      %vm2988 = vmand %vm2979, %vm2985
      %vm2989 = vmand %vm2980, %vm2986
      %vm2990 = vmand %vm2981, %vm2984
      %vm2991 = vmand %vm2982, %vm2985
      %vm2992 = vmand %vm2983, %vm2986
      %v2993 = vsel %vm2987, %v2917, 0.0
      %v2994 = vsel %vm2988, %v2918, 0.0
      %v2995 = vsel %vm2989, %v2919, 0.0
      %v2996 = vsel %vm2990, %v2920, 0.0
      %v2997 = vsel %vm2991, %v2921, 0.0
      %v2998 = vsel %vm2992, %v2922, 0.0
      %v2999 = vsel %vm2990, %v2923, 0.0
      %v3000 = vsel %vm2991, %v2924, 0.0
      %v3001 = vsel %vm2992, %v2925, 0.0
      %v3002 = vsel %vm2990, %v2926, 0.0
      %v3003 = vsel %vm2991, %v2927, 0.0
      %v3004 = vsel %vm2992, %v2928, 0.0
      %v3005 = vsel %vm2990, %v2929, 0.0
      %v3006 = vsel %vm2991, %v2930, 0.0
      %v3007 = vsel %vm2992, %v2931, 0.0
      %v3008 = vsel %vm2990, %v2932, 0.0
      %v3009 = vsel %vm2991, %v2933, 0.0
      %v3010 = vsel %vm2992, %v2934, 0.0
      %v3011 = vsel %vm2990, %v2935, 0.0
      %v3012 = vsel %vm2991, %v2936, 0.0
      %v3013 = vsel %vm2992, %v2937, 0.0
      %v3014 = vsel %vm2990, %v2938, 0.0
      %v3015 = vsel %vm2991, %v2939, 0.0
      %v3016 = vsel %vm2992, %v2940, 0.0
      %v3017 = vsel %vm2990, %v2941, 0.0
      %v3018 = vsel %vm2991, %v2942, 0.0
      %v3019 = vsel %vm2992, %v2943, 0.0
      %v3020 = vsel %vm2990, %v2944, 0.0
      %v3021 = vsel %vm2991, %v2945, 0.0
      %v3022 = vsel %vm2992, %v2946, 0.0
      %v3023 = vsel %vm2990, %v2947, 0.0
      %v3024 = vsel %vm2991, %v2948, 0.0
      %v3025 = vsel %vm2992, %v2949, 0.0
      %v3026 = vsel %vm2990, %v2950, 0.0
      %v3027 = vsel %vm2991, %v2951, 0.0
      %v3028 = vsel %vm2992, %v2952, 0.0
      %v3029 = vsel %vm2990, %v2953, 0.0
      %v3030 = vsel %vm2991, %v2954, 0.0
      %v3031 = vsel %vm2992, %v2955, 0.0
      %v3032 = vsel %vm2990, %v2956, 0.0
      %v3033 = vsel %vm2991, %v2957, 0.0
      %v3034 = vsel %vm2992, %v2958, 0.0
      %v3035 = vsel %vm2990, %v2959, 0.0
      %v3036 = vsel %vm2991, %v2960, 0.0
      %v3037 = vsel %vm2992, %v2961, 0.0
      %v3038 = vsel %vm2990, %v2962, 0.0
      %v3039 = vsel %vm2991, %v2963, 0.0
      %v3040 = vsel %vm2992, %v2964, 0.0
      %v3041 = vsel %vm2990, %v2965, 0.0
      %v3042 = vsel %vm2991, %v2966, 0.0
      %v3043 = vsel %vm2992, %v2967, 0.0
      %v3044 = vsel %vm2987, %v2968, 0.0
      %v3045 = vsel %vm2988, %v2969, 0.0
      %v3046 = vsel %vm2989, %v2970, 0.0
      %v3095 = vrot.slane %v2993, 1
      %v3096 = vrot.slane %v2994, 1
      %v3097 = vsel %vm377, %v3095, %v3096
      %v3098 = vrot.slane %v2995, 1
      %v3099 = vsel %vm377, %v3096, %v3098
      %v3100 = vrot.slane %v2996, 1
      %v3101 = vrot.slane %v2997, 1
      %v3102 = vsel %vm377, %v3100, %v3101
      %v3103 = vrot.slane %v2998, 1
      %v3104 = vsel %vm377, %v3101, %v3103
      %v3105 = vrot.slane %v2999, 1
      %v3106 = vrot.slane %v3000, 1
      %v3107 = vsel %vm377, %v3105, %v3106
      %v3108 = vrot.slane %v3001, 1
      %v3109 = vsel %vm377, %v3106, %v3108
      %v3110 = vrot.slane %v3002, 1
      %v3111 = vrot.slane %v3003, 1
      %v3112 = vsel %vm377, %v3110, %v3111
      %v3113 = vrot.slane %v3004, 1
      %v3114 = vsel %vm377, %v3111, %v3113
      %v3115 = vrot.slane %v3005, 1
      %v3116 = vrot.slane %v3006, 1
      %v3117 = vsel %vm377, %v3115, %v3116
      %v3118 = vrot.slane %v3007, 1
      %v3119 = vsel %vm377, %v3116, %v3118
      %v3120 = vrot.slane %v3008, 1
      %v3121 = vrot.slane %v3009, 1
      %v3122 = vsel %vm377, %v3120, %v3121
      %v3123 = vrot.slane %v3010, 1
      %v3124 = vsel %vm377, %v3121, %v3123
      %v3125 = vrot.slane %v3011, 1
      %v3126 = vrot.slane %v3012, 1
      %v3127 = vsel %vm377, %v3125, %v3126
      %v3128 = vrot.slane %v3013, 1
      %v3129 = vsel %vm377, %v3126, %v3128
      %v3130 = vrot.slane %v3014, 1
      %v3131 = vrot.slane %v3015, 1
      %v3132 = vsel %vm377, %v3130, %v3131
      %v3133 = vrot.slane %v3016, 1
      %v3134 = vsel %vm377, %v3131, %v3133
      %v3135 = vrot.slane %v3017, 1
      %v3136 = vrot.slane %v3018, 1
      %v3137 = vsel %vm377, %v3135, %v3136
      %v3138 = vrot.slane %v3019, 1
      %v3139 = vsel %vm377, %v3136, %v3138
      %v3140 = vrot.slane %v3020, 1
      %v3141 = vrot.slane %v3021, 1
      %v3142 = vsel %vm377, %v3140, %v3141
      %v3143 = vrot.slane %v3022, 1
      %v3144 = vsel %vm377, %v3141, %v3143
      %v3145 = vrot.slane %v3023, 1
      %v3146 = vrot.slane %v3024, 1
      %v3147 = vsel %vm377, %v3145, %v3146
      %v3148 = vrot.slane %v3025, 1
      %v3149 = vsel %vm377, %v3146, %v3148
      %v3150 = vrot.slane %v3026, 1
      %v3151 = vrot.slane %v3027, 1
      %v3152 = vsel %vm377, %v3150, %v3151
      %v3153 = vrot.slane %v3028, 1
      %v3154 = vsel %vm377, %v3151, %v3153
      %v3155 = vrot.slane %v3029, 1
      %v3156 = vrot.slane %v3030, 1
      %v3157 = vsel %vm377, %v3155, %v3156
      %v3158 = vrot.slane %v3031, 1
      %v3159 = vsel %vm377, %v3156, %v3158
      %v3160 = vrot.slane %v3032, 1
      %v3161 = vrot.slane %v3033, 1
      %v3162 = vsel %vm377, %v3160, %v3161
      %v3163 = vrot.slane %v3034, 1
      %v3164 = vsel %vm377, %v3161, %v3163
      %v3165 = vrot.slane %v3035, 1
      %v3166 = vrot.slane %v3036, 1
      %v3167 = vsel %vm377, %v3165, %v3166
      %v3168 = vrot.slane %v3037, 1
      %v3169 = vsel %vm377, %v3166, %v3168
      %v3170 = vrot.slane %v3038, 1
      %v3171 = vrot.slane %v3039, 1
      %v3172 = vsel %vm377, %v3170, %v3171
      %v3173 = vrot.slane %v3040, 1
      %v3174 = vsel %vm377, %v3171, %v3173
      %3175 = vrot.lane.b32.xlu0 %v3097, 8
      %v3176 = vpop.permute.xlu0 %3175
      %3177 = vrot.lane.b32.xlu0 %v3099, 8
      %v3178 = vpop.permute.xlu0 %3177
      %3179 = vrot.lane.b32.xlu0 %v3102, 8
      %v3180 = vpop.permute.xlu0 %3179
      %3181 = vrot.lane.b32.xlu0 %v3104, 8
      %v3182 = vpop.permute.xlu0 %3181
      %3183 = vrot.lane.b32.xlu0 %v3107, 8
      %v3184 = vpop.permute.xlu0 %3183
      %3185 = vrot.lane.b32.xlu0 %v3109, 8
      %v3186 = vpop.permute.xlu0 %3185
      %3187 = vrot.lane.b32.xlu0 %v3112, 8
      %v3188 = vpop.permute.xlu0 %3187
      %3189 = vrot.lane.b32.xlu0 %v3114, 8
      %v3190 = vpop.permute.xlu0 %3189
      %3191 = vrot.lane.b32.xlu0 %v3117, 8
      %v3192 = vpop.permute.xlu0 %3191
      %3193 = vrot.lane.b32.xlu0 %v3119, 8
      %v3194 = vpop.permute.xlu0 %3193
      %3195 = vrot.lane.b32.xlu0 %v3122, 8
      %v3196 = vpop.permute.xlu0 %3195
      %3197 = vrot.lane.b32.xlu0 %v3124, 8
      %v3198 = vpop.permute.xlu0 %3197
      %3199 = vrot.lane.b32.xlu0 %v3127, 8
      %v3200 = vpop.permute.xlu0 %3199
      %3201 = vrot.lane.b32.xlu0 %v3129, 8
      %v3202 = vpop.permute.xlu0 %3201
      %3203 = vrot.lane.b32.xlu0 %v3132, 8
      %v3204 = vpop.permute.xlu0 %3203
      %3205 = vrot.lane.b32.xlu0 %v3134, 8
      %v3206 = vpop.permute.xlu0 %3205
      %3207 = vrot.lane.b32.xlu0 %v3137, 8
      %v3208 = vpop.permute.xlu0 %3207
      %3209 = vrot.lane.b32.xlu0 %v3139, 8
      %v3210 = vpop.permute.xlu0 %3209
      %3211 = vrot.lane.b32.xlu0 %v3142, 8
      %v3212 = vpop.permute.xlu0 %3211
      %3213 = vrot.lane.b32.xlu0 %v3144, 8
      %v3214 = vpop.permute.xlu0 %3213
      %3215 = vrot.lane.b32.xlu0 %v3147, 8
      %v3216 = vpop.permute.xlu0 %3215
      %3217 = vrot.lane.b32.xlu0 %v3149, 8
      %v3218 = vpop.permute.xlu0 %3217
      %3219 = vrot.lane.b32.xlu0 %v3152, 8
      %v3220 = vpop.permute.xlu0 %3219
      %3221 = vrot.lane.b32.xlu0 %v3154, 8
      %v3222 = vpop.permute.xlu0 %3221
      %3223 = vrot.lane.b32.xlu0 %v3157, 8
      %v3224 = vpop.permute.xlu0 %3223
      %3225 = vrot.lane.b32.xlu0 %v3159, 8
      %v3226 = vpop.permute.xlu0 %3225
      %3227 = vrot.lane.b32.xlu0 %v3162, 8
      %v3228 = vpop.permute.xlu0 %3227
      %3229 = vrot.lane.b32.xlu0 %v3164, 8
      %v3230 = vpop.permute.xlu0 %3229
      %3231 = vrot.lane.b32.xlu0 %v3167, 8
      %v3232 = vpop.permute.xlu0 %3231
      %3233 = vrot.lane.b32.xlu0 %v3169, 8
      %v3234 = vpop.permute.xlu0 %3233
      %3235 = vrot.lane.b32.xlu0 %v3172, 8
      %v3236 = vpop.permute.xlu0 %3235
      %3237 = vrot.lane.b32.xlu0 %v3174, 8
      %v3238 = vpop.permute.xlu0 %3237
      %v3271 = vrot.slane %v2993, 2
      %v3272 = vrot.slane %v2994, 2
      %v3273 = vsel %vm666, %v3271, %v3272
      %v3274 = vrot.slane %v2995, 2
      %v3275 = vsel %vm666, %v3272, %v3274
      %v3276 = vrot.slane %v2996, 2
      %v3277 = vrot.slane %v2997, 2
      %v3278 = vsel %vm666, %v3276, %v3277
      %v3279 = vrot.slane %v2998, 2
      %v3280 = vsel %vm666, %v3277, %v3279
      %v3281 = vrot.slane %v2999, 2
      %v3282 = vrot.slane %v3000, 2
      %v3283 = vsel %vm666, %v3281, %v3282
      %v3284 = vrot.slane %v3001, 2
      %v3285 = vsel %vm666, %v3282, %v3284
      %v3286 = vrot.slane %v3002, 2
      %v3287 = vrot.slane %v3003, 2
      %v3288 = vsel %vm666, %v3286, %v3287
      %v3289 = vrot.slane %v3004, 2
      %v3290 = vsel %vm666, %v3287, %v3289
      %v3291 = vrot.slane %v3005, 2
      %v3292 = vrot.slane %v3006, 2
      %v3293 = vsel %vm666, %v3291, %v3292
      %v3294 = vrot.slane %v3007, 2
      %v3295 = vsel %vm666, %v3292, %v3294
      %v3296 = vrot.slane %v3008, 2
      %v3297 = vrot.slane %v3009, 2
      %v3298 = vsel %vm666, %v3296, %v3297
      %v3299 = vrot.slane %v3010, 2
      %v3300 = vsel %vm666, %v3297, %v3299
      %v3301 = vrot.slane %v3011, 2
      %v3302 = vrot.slane %v3012, 2
      %v3303 = vsel %vm666, %v3301, %v3302
      %v3304 = vrot.slane %v3013, 2
      %v3305 = vsel %vm666, %v3302, %v3304
      %v3306 = vrot.slane %v3014, 2
      %v3307 = vrot.slane %v3015, 2
      %v3308 = vsel %vm666, %v3306, %v3307
      %v3309 = vrot.slane %v3016, 2
      %v3310 = vsel %vm666, %v3307, %v3309
      %v3311 = vrot.slane %v3017, 2
      %v3312 = vrot.slane %v3018, 2
      %v3313 = vsel %vm666, %v3311, %v3312
      %v3314 = vrot.slane %v3019, 2
      %v3315 = vsel %vm666, %v3312, %v3314
      %v3316 = vrot.slane %v3020, 2
      %v3317 = vrot.slane %v3021, 2
      %v3318 = vsel %vm666, %v3316, %v3317
      %v3319 = vrot.slane %v3022, 2
      %v3320 = vsel %vm666, %v3317, %v3319
      %v3321 = vrot.slane %v3023, 2
      %v3322 = vrot.slane %v3024, 2
      %v3323 = vsel %vm666, %v3321, %v3322
      %v3324 = vrot.slane %v3025, 2
      %v3325 = vsel %vm666, %v3322, %v3324
      %v3326 = vrot.slane %v3026, 2
      %v3327 = vrot.slane %v3027, 2
      %v3328 = vsel %vm666, %v3326, %v3327
      %v3329 = vrot.slane %v3028, 2
      %v3330 = vsel %vm666, %v3327, %v3329
      %v3331 = vrot.slane %v3029, 2
      %v3332 = vrot.slane %v3030, 2
      %v3333 = vsel %vm666, %v3331, %v3332
      %v3334 = vrot.slane %v3031, 2
      %v3335 = vsel %vm666, %v3332, %v3334
      %v3336 = vrot.slane %v3032, 2
      %v3337 = vrot.slane %v3033, 2
      %v3338 = vsel %vm666, %v3336, %v3337
      %v3339 = vrot.slane %v3034, 2
      %v3340 = vsel %vm666, %v3337, %v3339
      %v3341 = vrot.slane %v3035, 2
      %v3342 = vrot.slane %v3036, 2
      %v3343 = vsel %vm666, %v3341, %v3342
      %v3344 = vrot.slane %v3037, 2
      %v3345 = vsel %vm666, %v3342, %v3344
      %v3346 = vrot.slane %v3038, 2
      %v3347 = vrot.slane %v3039, 2
      %v3348 = vsel %vm666, %v3346, %v3347
      %v3349 = vrot.slane %v3040, 2
      %v3350 = vsel %vm666, %v3347, %v3349
      %3351 = vrot.lane.b32.xlu0 %v3273, 16
      %v3352 = vpop.permute.xlu0 %3351
      %3353 = vrot.lane.b32.xlu0 %v3275, 16
      %v3354 = vpop.permute.xlu0 %3353
      %3355 = vrot.lane.b32.xlu0 %v3278, 16
      %v3356 = vpop.permute.xlu0 %3355
      %3357 = vrot.lane.b32.xlu0 %v3280, 16
      %v3358 = vpop.permute.xlu0 %3357
      %3359 = vrot.lane.b32.xlu0 %v3283, 16
      %v3360 = vpop.permute.xlu0 %3359
      %3361 = vrot.lane.b32.xlu0 %v3285, 16
      %v3362 = vpop.permute.xlu0 %3361
      %3363 = vrot.lane.b32.xlu0 %v3288, 16
      %v3364 = vpop.permute.xlu0 %3363
      %3365 = vrot.lane.b32.xlu0 %v3290, 16
      %v3366 = vpop.permute.xlu0 %3365
      %3367 = vrot.lane.b32.xlu0 %v3293, 16
      %v3368 = vpop.permute.xlu0 %3367
      %3369 = vrot.lane.b32.xlu0 %v3295, 16
      %v3370 = vpop.permute.xlu0 %3369
      %3371 = vrot.lane.b32.xlu0 %v3298, 16
      %v3372 = vpop.permute.xlu0 %3371
      %3373 = vrot.lane.b32.xlu0 %v3300, 16
      %v3374 = vpop.permute.xlu0 %3373
      %3375 = vrot.lane.b32.xlu0 %v3303, 16
      %v3376 = vpop.permute.xlu0 %3375
      %3377 = vrot.lane.b32.xlu0 %v3305, 16
      %v3378 = vpop.permute.xlu0 %3377
      %3379 = vrot.lane.b32.xlu0 %v3308, 16
      %v3380 = vpop.permute.xlu0 %3379
      %3381 = vrot.lane.b32.xlu0 %v3310, 16
      %v3382 = vpop.permute.xlu0 %3381
      %3383 = vrot.lane.b32.xlu0 %v3313, 16
      %v3384 = vpop.permute.xlu0 %3383
      %3385 = vrot.lane.b32.xlu0 %v3315, 16
      %v3386 = vpop.permute.xlu0 %3385
      %3387 = vrot.lane.b32.xlu0 %v3318, 16
      %v3388 = vpop.permute.xlu0 %3387
      %3389 = vrot.lane.b32.xlu0 %v3320, 16
      %v3390 = vpop.permute.xlu0 %3389
      %3391 = vrot.lane.b32.xlu0 %v3323, 16
      %v3392 = vpop.permute.xlu0 %3391
      %3393 = vrot.lane.b32.xlu0 %v3325, 16
      %v3394 = vpop.permute.xlu0 %3393
      %3395 = vrot.lane.b32.xlu0 %v3328, 16
      %v3396 = vpop.permute.xlu0 %3395
      %3397 = vrot.lane.b32.xlu0 %v3330, 16
      %v3398 = vpop.permute.xlu0 %3397
      %3399 = vrot.lane.b32.xlu0 %v3333, 16
      %v3400 = vpop.permute.xlu0 %3399
      %3401 = vrot.lane.b32.xlu0 %v3335, 16
      %v3402 = vpop.permute.xlu0 %3401
      %3403 = vrot.lane.b32.xlu0 %v3338, 16
      %v3404 = vpop.permute.xlu0 %3403
      %3405 = vrot.lane.b32.xlu0 %v3340, 16
      %v3406 = vpop.permute.xlu0 %3405
      %3407 = vrot.lane.b32.xlu0 %v3343, 16
      %v3408 = vpop.permute.xlu0 %3407
      %3409 = vrot.lane.b32.xlu0 %v3345, 16
      %v3410 = vpop.permute.xlu0 %3409
      %3411 = vrot.lane.b32.xlu0 %v3348, 16
      %v3412 = vpop.permute.xlu0 %3411
      %3413 = vrot.lane.b32.xlu0 %v3350, 16
      %v3414 = vpop.permute.xlu0 %3413
      %3449 = vrot.lane.b32.xlu0 %v2996, 24
      %v3450 = vpop.permute.xlu0 %3449
      %3451 = vrot.lane.b32.xlu0 %v2997, 24
      %v3452 = vpop.permute.xlu0 %3451
      %3453 = vrot.lane.b32.xlu0 %v2999, 24
      %v3454 = vpop.permute.xlu0 %3453
      %3455 = vrot.lane.b32.xlu0 %v3000, 24
      %v3456 = vpop.permute.xlu0 %3455
      %3457 = vrot.lane.b32.xlu0 %v3002, 24
      %v3458 = vpop.permute.xlu0 %3457
      %3459 = vrot.lane.b32.xlu0 %v3003, 24
      %v3460 = vpop.permute.xlu0 %3459
      %3461 = vrot.lane.b32.xlu0 %v3005, 24
      %v3462 = vpop.permute.xlu0 %3461
      %3463 = vrot.lane.b32.xlu0 %v3006, 24
      %v3464 = vpop.permute.xlu0 %3463
      %3465 = vrot.lane.b32.xlu0 %v3008, 24
      %v3466 = vpop.permute.xlu0 %3465
      %3467 = vrot.lane.b32.xlu0 %v3009, 24
      %v3468 = vpop.permute.xlu0 %3467
      %3469 = vrot.lane.b32.xlu0 %v3011, 24
      %v3470 = vpop.permute.xlu0 %3469
      %3471 = vrot.lane.b32.xlu0 %v3012, 24
      %v3472 = vpop.permute.xlu0 %3471
      %3473 = vrot.lane.b32.xlu0 %v3014, 24
      %v3474 = vpop.permute.xlu0 %3473
      %3475 = vrot.lane.b32.xlu0 %v3015, 24
      %v3476 = vpop.permute.xlu0 %3475
      %3477 = vrot.lane.b32.xlu0 %v3017, 24
      %v3478 = vpop.permute.xlu0 %3477
      %3479 = vrot.lane.b32.xlu0 %v3018, 24
      %v3480 = vpop.permute.xlu0 %3479
      %3481 = vrot.lane.b32.xlu0 %v3020, 24
      %v3482 = vpop.permute.xlu0 %3481
      %3483 = vrot.lane.b32.xlu0 %v3021, 24
      %v3484 = vpop.permute.xlu0 %3483
      %3485 = vrot.lane.b32.xlu0 %v3023, 24
      %v3486 = vpop.permute.xlu0 %3485
      %3487 = vrot.lane.b32.xlu0 %v3024, 24
      %v3488 = vpop.permute.xlu0 %3487
      %3489 = vrot.lane.b32.xlu0 %v3026, 24
      %v3490 = vpop.permute.xlu0 %3489
      %3491 = vrot.lane.b32.xlu0 %v3027, 24
      %v3492 = vpop.permute.xlu0 %3491
      %3493 = vrot.lane.b32.xlu0 %v3029, 24
      %v3494 = vpop.permute.xlu0 %3493
      %3495 = vrot.lane.b32.xlu0 %v3030, 24
      %v3496 = vpop.permute.xlu0 %3495
      %3497 = vrot.lane.b32.xlu0 %v3032, 24
      %v3498 = vpop.permute.xlu0 %3497
      %3499 = vrot.lane.b32.xlu0 %v3033, 24
      %v3500 = vpop.permute.xlu0 %3499
      %3501 = vrot.lane.b32.xlu0 %v3035, 24
      %v3502 = vpop.permute.xlu0 %3501
      %3503 = vrot.lane.b32.xlu0 %v3036, 24
      %v3504 = vpop.permute.xlu0 %3503
      %3505 = vrot.lane.b32.xlu0 %v3038, 24
      %v3506 = vpop.permute.xlu0 %3505
      %3507 = vrot.lane.b32.xlu0 %v3039, 24
      %v3508 = vpop.permute.xlu0 %3507
      %3509 = vrot.lane.b32.xlu0 %v3041, 24
      %v3510 = vpop.permute.xlu0 %3509
      %3511 = vrot.lane.b32.xlu0 %v3042, 24
      %v3512 = vpop.permute.xlu0 %3511
      %v3546 = vrot.slane %v3041, 1
      %v3547 = vrot.slane %v3042, 1
      %v3548 = vsel %vm377, %v3546, %v3547
      %v3549 = vrot.slane %v3043, 1
      %v3550 = vsel %vm377, %v3547, %v3549
      %3551 = vrot.lane.b32.xlu0 %v3102, 32
      %v3552 = vpop.permute.xlu0 %3551
      %3553 = vrot.lane.b32.xlu0 %v3104, 32
      %v3554 = vpop.permute.xlu0 %3553
      %3555 = vrot.lane.b32.xlu0 %v3107, 32
      %v3556 = vpop.permute.xlu0 %3555
      %3557 = vrot.lane.b32.xlu0 %v3109, 32
      %v3558 = vpop.permute.xlu0 %3557
      %3559 = vrot.lane.b32.xlu0 %v3112, 32
      %v3560 = vpop.permute.xlu0 %3559
      %3561 = vrot.lane.b32.xlu0 %v3114, 32
      %v3562 = vpop.permute.xlu0 %3561
      %3563 = vrot.lane.b32.xlu0 %v3117, 32
      %v3564 = vpop.permute.xlu0 %3563
      %3565 = vrot.lane.b32.xlu0 %v3119, 32
      %v3566 = vpop.permute.xlu0 %3565
      %3567 = vrot.lane.b32.xlu0 %v3122, 32
      %v3568 = vpop.permute.xlu0 %3567
      %3569 = vrot.lane.b32.xlu0 %v3124, 32
      %v3570 = vpop.permute.xlu0 %3569
      %3571 = vrot.lane.b32.xlu0 %v3127, 32
      %v3572 = vpop.permute.xlu0 %3571
      %3573 = vrot.lane.b32.xlu0 %v3129, 32
      %v3574 = vpop.permute.xlu0 %3573
      %3575 = vrot.lane.b32.xlu0 %v3132, 32
      %v3576 = vpop.permute.xlu0 %3575
      %3577 = vrot.lane.b32.xlu0 %v3134, 32
      %v3578 = vpop.permute.xlu0 %3577
      %3579 = vrot.lane.b32.xlu0 %v3137, 32
      %v3580 = vpop.permute.xlu0 %3579
      %3581 = vrot.lane.b32.xlu0 %v3139, 32
      %v3582 = vpop.permute.xlu0 %3581
      %3583 = vrot.lane.b32.xlu0 %v3142, 32
      %v3584 = vpop.permute.xlu0 %3583
      %3585 = vrot.lane.b32.xlu0 %v3144, 32
      %v3586 = vpop.permute.xlu0 %3585
      %3587 = vrot.lane.b32.xlu0 %v3147, 32
      %v3588 = vpop.permute.xlu0 %3587
      %3589 = vrot.lane.b32.xlu0 %v3149, 32
      %v3590 = vpop.permute.xlu0 %3589
      %3591 = vrot.lane.b32.xlu0 %v3152, 32
      %v3592 = vpop.permute.xlu0 %3591
      %3593 = vrot.lane.b32.xlu0 %v3154, 32
      %v3594 = vpop.permute.xlu0 %3593
      %3595 = vrot.lane.b32.xlu0 %v3157, 32
      %v3596 = vpop.permute.xlu0 %3595
      %3597 = vrot.lane.b32.xlu0 %v3159, 32
      %v3598 = vpop.permute.xlu0 %3597
      %3599 = vrot.lane.b32.xlu0 %v3162, 32
      %v3600 = vpop.permute.xlu0 %3599
      %3601 = vrot.lane.b32.xlu0 %v3164, 32
      %v3602 = vpop.permute.xlu0 %3601
      %3603 = vrot.lane.b32.xlu0 %v3167, 32
      %v3604 = vpop.permute.xlu0 %3603
      %3605 = vrot.lane.b32.xlu0 %v3169, 32
      %v3606 = vpop.permute.xlu0 %3605
      %3607 = vrot.lane.b32.xlu0 %v3172, 32
      %v3608 = vpop.permute.xlu0 %3607
      %3609 = vrot.lane.b32.xlu0 %v3174, 32
      %v3610 = vpop.permute.xlu0 %3609
      %3611 = vrot.lane.b32.xlu0 %v3548, 32
      %v3612 = vpop.permute.xlu0 %3611
      %3613 = vrot.lane.b32.xlu0 %v3550, 32
      %v3614 = vpop.permute.xlu0 %3613
      %v3647 = vrot.slane %v3041, 2
      %v3648 = vrot.slane %v3042, 2
      %v3649 = vsel %vm666, %v3647, %v3648
      %v3650 = vrot.slane %v3043, 2
      %v3651 = vsel %vm666, %v3648, %v3650
      %3652 = vrot.lane.b32.xlu0 %v3278, 40
      %v3653 = vpop.permute.xlu0 %3652
      %3654 = vrot.lane.b32.xlu0 %v3280, 40
      %v3655 = vpop.permute.xlu0 %3654
      %3656 = vrot.lane.b32.xlu0 %v3283, 40
      %v3657 = vpop.permute.xlu0 %3656
      %3658 = vrot.lane.b32.xlu0 %v3285, 40
      %v3659 = vpop.permute.xlu0 %3658
      %3660 = vrot.lane.b32.xlu0 %v3288, 40
      %v3661 = vpop.permute.xlu0 %3660
      %3662 = vrot.lane.b32.xlu0 %v3290, 40
      %v3663 = vpop.permute.xlu0 %3662
      %3664 = vrot.lane.b32.xlu0 %v3293, 40
      %v3665 = vpop.permute.xlu0 %3664
      %3666 = vrot.lane.b32.xlu0 %v3295, 40
      %v3667 = vpop.permute.xlu0 %3666
      %3668 = vrot.lane.b32.xlu0 %v3298, 40
      %v3669 = vpop.permute.xlu0 %3668
      %3670 = vrot.lane.b32.xlu0 %v3300, 40
      %v3671 = vpop.permute.xlu0 %3670
      %3672 = vrot.lane.b32.xlu0 %v3303, 40
      %v3673 = vpop.permute.xlu0 %3672
      %3674 = vrot.lane.b32.xlu0 %v3305, 40
      %v3675 = vpop.permute.xlu0 %3674
      %3676 = vrot.lane.b32.xlu0 %v3308, 40
      %v3677 = vpop.permute.xlu0 %3676
      %3678 = vrot.lane.b32.xlu0 %v3310, 40
      %v3679 = vpop.permute.xlu0 %3678
      %3680 = vrot.lane.b32.xlu0 %v3313, 40
      %v3681 = vpop.permute.xlu0 %3680
      %3682 = vrot.lane.b32.xlu0 %v3315, 40
      %v3683 = vpop.permute.xlu0 %3682
      %3684 = vrot.lane.b32.xlu0 %v3318, 40
      %v3685 = vpop.permute.xlu0 %3684
      %3686 = vrot.lane.b32.xlu0 %v3320, 40
      %v3687 = vpop.permute.xlu0 %3686
      %3688 = vrot.lane.b32.xlu0 %v3323, 40
      %v3689 = vpop.permute.xlu0 %3688
      %3690 = vrot.lane.b32.xlu0 %v3325, 40
      %v3691 = vpop.permute.xlu0 %3690
      %3692 = vrot.lane.b32.xlu0 %v3328, 40
      %v3693 = vpop.permute.xlu0 %3692
      %3694 = vrot.lane.b32.xlu0 %v3330, 40
      %v3695 = vpop.permute.xlu0 %3694
      %3696 = vrot.lane.b32.xlu0 %v3333, 40
      %v3697 = vpop.permute.xlu0 %3696
      %3698 = vrot.lane.b32.xlu0 %v3335, 40
      %v3699 = vpop.permute.xlu0 %3698
      %3700 = vrot.lane.b32.xlu0 %v3338, 40
      %v3701 = vpop.permute.xlu0 %3700
      %3702 = vrot.lane.b32.xlu0 %v3340, 40
      %v3703 = vpop.permute.xlu0 %3702
      %3704 = vrot.lane.b32.xlu0 %v3343, 40
      %v3705 = vpop.permute.xlu0 %3704
      %3706 = vrot.lane.b32.xlu0 %v3345, 40
      %v3707 = vpop.permute.xlu0 %3706
      %3708 = vrot.lane.b32.xlu0 %v3348, 40
      %v3709 = vpop.permute.xlu0 %3708
      %3710 = vrot.lane.b32.xlu0 %v3350, 40
      %v3711 = vpop.permute.xlu0 %3710
      %3712 = vrot.lane.b32.xlu0 %v3649, 40
      %v3713 = vpop.permute.xlu0 %3712
      %3714 = vrot.lane.b32.xlu0 %v3651, 40
      %v3715 = vpop.permute.xlu0 %3714
      %3750 = vrot.lane.b32.xlu0 %v2999, 48
      %v3751 = vpop.permute.xlu0 %3750
      %3752 = vrot.lane.b32.xlu0 %v3000, 48
      %v3753 = vpop.permute.xlu0 %3752
      %3754 = vrot.lane.b32.xlu0 %v3002, 48
      %v3755 = vpop.permute.xlu0 %3754
      %3756 = vrot.lane.b32.xlu0 %v3003, 48
      %v3757 = vpop.permute.xlu0 %3756
      %3758 = vrot.lane.b32.xlu0 %v3005, 48
      %v3759 = vpop.permute.xlu0 %3758
      %3760 = vrot.lane.b32.xlu0 %v3006, 48
      %v3761 = vpop.permute.xlu0 %3760
      %3762 = vrot.lane.b32.xlu0 %v3008, 48
      %v3763 = vpop.permute.xlu0 %3762
      %3764 = vrot.lane.b32.xlu0 %v3009, 48
      %v3765 = vpop.permute.xlu0 %3764
      %3766 = vrot.lane.b32.xlu0 %v3011, 48
      %v3767 = vpop.permute.xlu0 %3766
      %3768 = vrot.lane.b32.xlu0 %v3012, 48
      %v3769 = vpop.permute.xlu0 %3768
      %3770 = vrot.lane.b32.xlu0 %v3014, 48
      %v3771 = vpop.permute.xlu0 %3770
      %3772 = vrot.lane.b32.xlu0 %v3015, 48
      %v3773 = vpop.permute.xlu0 %3772
      %3774 = vrot.lane.b32.xlu0 %v3017, 48
      %v3775 = vpop.permute.xlu0 %3774
      %3776 = vrot.lane.b32.xlu0 %v3018, 48
      %v3777 = vpop.permute.xlu0 %3776
      %3778 = vrot.lane.b32.xlu0 %v3020, 48
      %v3779 = vpop.permute.xlu0 %3778
      %3780 = vrot.lane.b32.xlu0 %v3021, 48
      %v3781 = vpop.permute.xlu0 %3780
      %3782 = vrot.lane.b32.xlu0 %v3023, 48
      %v3783 = vpop.permute.xlu0 %3782
      %3784 = vrot.lane.b32.xlu0 %v3024, 48
      %v3785 = vpop.permute.xlu0 %3784
      %3786 = vrot.lane.b32.xlu0 %v3026, 48
      %v3787 = vpop.permute.xlu0 %3786
      %3788 = vrot.lane.b32.xlu0 %v3027, 48
      %v3789 = vpop.permute.xlu0 %3788
      %3790 = vrot.lane.b32.xlu0 %v3029, 48
      %v3791 = vpop.permute.xlu0 %3790
      %3792 = vrot.lane.b32.xlu0 %v3030, 48
      %v3793 = vpop.permute.xlu0 %3792
      %3794 = vrot.lane.b32.xlu0 %v3032, 48
      %v3795 = vpop.permute.xlu0 %3794
      %3796 = vrot.lane.b32.xlu0 %v3033, 48
      %v3797 = vpop.permute.xlu0 %3796
      %3798 = vrot.lane.b32.xlu0 %v3035, 48
      %v3799 = vpop.permute.xlu0 %3798
      %3800 = vrot.lane.b32.xlu0 %v3036, 48
      %v3801 = vpop.permute.xlu0 %3800
      %3802 = vrot.lane.b32.xlu0 %v3038, 48
      %v3803 = vpop.permute.xlu0 %3802
      %3804 = vrot.lane.b32.xlu0 %v3039, 48
      %v3805 = vpop.permute.xlu0 %3804
      %3806 = vrot.lane.b32.xlu0 %v3041, 48
      %v3807 = vpop.permute.xlu0 %3806
      %3808 = vrot.lane.b32.xlu0 %v3042, 48
      %v3809 = vpop.permute.xlu0 %3808
      %3810 = vrot.lane.b32.xlu0 %v3044, 48
      %v3811 = vpop.permute.xlu0 %3810
      %3812 = vrot.lane.b32.xlu0 %v3045, 48
      %v3813 = vpop.permute.xlu0 %3812
      %v3847 = vrot.slane %v3044, 1
      %v3848 = vrot.slane %v3045, 1
      %v3849 = vsel %vm377, %v3847, %v3848
      %v3850 = vrot.slane %v3046, 1
      %v3851 = vsel %vm377, %v3848, %v3850
      %3852 = vrot.lane.b32.xlu0 %v3107, 56
      %v3853 = vpop.permute.xlu0 %3852
      %3854 = vrot.lane.b32.xlu0 %v3109, 56
      %v3855 = vpop.permute.xlu0 %3854
      %3856 = vrot.lane.b32.xlu0 %v3112, 56
      %v3857 = vpop.permute.xlu0 %3856
      %3858 = vrot.lane.b32.xlu0 %v3114, 56
      %v3859 = vpop.permute.xlu0 %3858
      %3860 = vrot.lane.b32.xlu0 %v3117, 56
      %v3861 = vpop.permute.xlu0 %3860
      %3862 = vrot.lane.b32.xlu0 %v3119, 56
      %v3863 = vpop.permute.xlu0 %3862
      %3864 = vrot.lane.b32.xlu0 %v3122, 56
      %v3865 = vpop.permute.xlu0 %3864
      %3866 = vrot.lane.b32.xlu0 %v3124, 56
      %v3867 = vpop.permute.xlu0 %3866
      %3868 = vrot.lane.b32.xlu0 %v3127, 56
      %v3869 = vpop.permute.xlu0 %3868
      %3870 = vrot.lane.b32.xlu0 %v3129, 56
      %v3871 = vpop.permute.xlu0 %3870
      %3872 = vrot.lane.b32.xlu0 %v3132, 56
      %v3873 = vpop.permute.xlu0 %3872
      %3874 = vrot.lane.b32.xlu0 %v3134, 56
      %v3875 = vpop.permute.xlu0 %3874
      %3876 = vrot.lane.b32.xlu0 %v3137, 56
      %v3877 = vpop.permute.xlu0 %3876
      %3878 = vrot.lane.b32.xlu0 %v3139, 56
      %v3879 = vpop.permute.xlu0 %3878
      %3880 = vrot.lane.b32.xlu0 %v3142, 56
      %v3881 = vpop.permute.xlu0 %3880
      %3882 = vrot.lane.b32.xlu0 %v3144, 56
      %v3883 = vpop.permute.xlu0 %3882
      %3884 = vrot.lane.b32.xlu0 %v3147, 56
      %v3885 = vpop.permute.xlu0 %3884
      %3886 = vrot.lane.b32.xlu0 %v3149, 56
      %v3887 = vpop.permute.xlu0 %3886
      %3888 = vrot.lane.b32.xlu0 %v3152, 56
      %v3889 = vpop.permute.xlu0 %3888
      %3890 = vrot.lane.b32.xlu0 %v3154, 56
      %v3891 = vpop.permute.xlu0 %3890
      %3892 = vrot.lane.b32.xlu0 %v3157, 56
      %v3893 = vpop.permute.xlu0 %3892
      %3894 = vrot.lane.b32.xlu0 %v3159, 56
      %v3895 = vpop.permute.xlu0 %3894
      %3896 = vrot.lane.b32.xlu0 %v3162, 56
      %v3897 = vpop.permute.xlu0 %3896
      %3898 = vrot.lane.b32.xlu0 %v3164, 56
      %v3899 = vpop.permute.xlu0 %3898
      %3900 = vrot.lane.b32.xlu0 %v3167, 56
      %v3901 = vpop.permute.xlu0 %3900
      %3902 = vrot.lane.b32.xlu0 %v3169, 56
      %v3903 = vpop.permute.xlu0 %3902
      %3904 = vrot.lane.b32.xlu0 %v3172, 56
      %v3905 = vpop.permute.xlu0 %3904
      %3906 = vrot.lane.b32.xlu0 %v3174, 56
      %v3907 = vpop.permute.xlu0 %3906
      %3908 = vrot.lane.b32.xlu0 %v3548, 56
      %v3909 = vpop.permute.xlu0 %3908
      %3910 = vrot.lane.b32.xlu0 %v3550, 56
      %v3911 = vpop.permute.xlu0 %3910
      %3912 = vrot.lane.b32.xlu0 %v3849, 56
      %v3913 = vpop.permute.xlu0 %3912
      %3914 = vrot.lane.b32.xlu0 %v3851, 56
      %v3915 = vpop.permute.xlu0 %3914
      %v3948 = vrot.slane %v3044, 2
      %v3949 = vrot.slane %v3045, 2
      %v3950 = vsel %vm666, %v3948, %v3949
      %v3951 = vrot.slane %v3046, 2
      %v3952 = vsel %vm666, %v3949, %v3951
      %3953 = vrot.lane.b32.xlu0 %v3283, 64
      %v3954 = vpop.permute.xlu0 %3953
      %3955 = vrot.lane.b32.xlu0 %v3285, 64
      %v3956 = vpop.permute.xlu0 %3955
      %3957 = vrot.lane.b32.xlu0 %v3288, 64
      %v3958 = vpop.permute.xlu0 %3957
      %3959 = vrot.lane.b32.xlu0 %v3290, 64
      %v3960 = vpop.permute.xlu0 %3959
      %3961 = vrot.lane.b32.xlu0 %v3293, 64
      %v3962 = vpop.permute.xlu0 %3961
      %3963 = vrot.lane.b32.xlu0 %v3295, 64
      %v3964 = vpop.permute.xlu0 %3963
      %3965 = vrot.lane.b32.xlu0 %v3298, 64
      %v3966 = vpop.permute.xlu0 %3965
      %3967 = vrot.lane.b32.xlu0 %v3300, 64
      %v3968 = vpop.permute.xlu0 %3967
      %3969 = vrot.lane.b32.xlu0 %v3303, 64
      %v3970 = vpop.permute.xlu0 %3969
      %3971 = vrot.lane.b32.xlu0 %v3305, 64
      %v3972 = vpop.permute.xlu0 %3971
      %3973 = vrot.lane.b32.xlu0 %v3308, 64
      %v3974 = vpop.permute.xlu0 %3973
      %3975 = vrot.lane.b32.xlu0 %v3310, 64
      %v3976 = vpop.permute.xlu0 %3975
      %3977 = vrot.lane.b32.xlu0 %v3313, 64
      %v3978 = vpop.permute.xlu0 %3977
      %3979 = vrot.lane.b32.xlu0 %v3315, 64
      %v3980 = vpop.permute.xlu0 %3979
      %3981 = vrot.lane.b32.xlu0 %v3318, 64
      %v3982 = vpop.permute.xlu0 %3981
      %3983 = vrot.lane.b32.xlu0 %v3320, 64
      %v3984 = vpop.permute.xlu0 %3983
      %3985 = vrot.lane.b32.xlu0 %v3323, 64
      %v3986 = vpop.permute.xlu0 %3985
      %3987 = vrot.lane.b32.xlu0 %v3325, 64
      %v3988 = vpop.permute.xlu0 %3987
      %3989 = vrot.lane.b32.xlu0 %v3328, 64
      %v3990 = vpop.permute.xlu0 %3989
      %3991 = vrot.lane.b32.xlu0 %v3330, 64
      %v3992 = vpop.permute.xlu0 %3991
      %3993 = vrot.lane.b32.xlu0 %v3333, 64
      %v3994 = vpop.permute.xlu0 %3993
      %3995 = vrot.lane.b32.xlu0 %v3335, 64
      %v3996 = vpop.permute.xlu0 %3995
      %3997 = vrot.lane.b32.xlu0 %v3338, 64
      %v3998 = vpop.permute.xlu0 %3997
      %3999 = vrot.lane.b32.xlu0 %v3340, 64
      %v4000 = vpop.permute.xlu0 %3999
      %4001 = vrot.lane.b32.xlu0 %v3343, 64
      %v4002 = vpop.permute.xlu0 %4001
      %4003 = vrot.lane.b32.xlu0 %v3345, 64
      %v4004 = vpop.permute.xlu0 %4003
      %4005 = vrot.lane.b32.xlu0 %v3348, 64
      %v4006 = vpop.permute.xlu0 %4005
      %4007 = vrot.lane.b32.xlu0 %v3350, 64
      %v4008 = vpop.permute.xlu0 %4007
      %4009 = vrot.lane.b32.xlu0 %v3649, 64
      %v4010 = vpop.permute.xlu0 %4009
      %4011 = vrot.lane.b32.xlu0 %v3651, 64
      %v4012 = vpop.permute.xlu0 %4011
      %4013 = vrot.lane.b32.xlu0 %v3950, 64
      %v4014 = vpop.permute.xlu0 %4013
      %4015 = vrot.lane.b32.xlu0 %v3952, 64
      %v4016 = vpop.permute.xlu0 %4015
      %4049 = vrot.lane.b32.xlu0 %v683, 72
      %v4050 = vpop.permute.xlu0 %4049
      %4051 = vrot.lane.b32.xlu0 %v685, 72
      %v4052 = vpop.permute.xlu0 %4051
      %4053 = vrot.lane.b32.xlu0 %v690, 72
      %v4054 = vpop.permute.xlu0 %4053
      %4055 = vrot.lane.b32.xlu0 %v692, 72
      %v4056 = vpop.permute.xlu0 %4055
      %4057 = vrot.lane.b32.xlu0 %v697, 72
      %v4058 = vpop.permute.xlu0 %4057
      %4059 = vrot.lane.b32.xlu0 %v699, 72
      %v4060 = vpop.permute.xlu0 %4059
      %4061 = vrot.lane.b32.xlu0 %v704, 72
      %v4062 = vpop.permute.xlu0 %4061
      %4063 = vrot.lane.b32.xlu0 %v706, 72
      %v4064 = vpop.permute.xlu0 %4063
      %4065 = vrot.lane.b32.xlu0 %v711, 72
      %v4066 = vpop.permute.xlu0 %4065
      %4067 = vrot.lane.b32.xlu0 %v713, 72
      %v4068 = vpop.permute.xlu0 %4067
      %4069 = vrot.lane.b32.xlu0 %v718, 72
      %v4070 = vpop.permute.xlu0 %4069
      %4071 = vrot.lane.b32.xlu0 %v720, 72
      %v4072 = vpop.permute.xlu0 %4071
      %4073 = vrot.lane.b32.xlu0 %v725, 72
      %v4074 = vpop.permute.xlu0 %4073
      %4075 = vrot.lane.b32.xlu0 %v727, 72
      %v4076 = vpop.permute.xlu0 %4075
      %4077 = vrot.lane.b32.xlu0 %v732, 72
      %v4078 = vpop.permute.xlu0 %4077
      %4079 = vrot.lane.b32.xlu0 %v734, 72
      %v4080 = vpop.permute.xlu0 %4079
      %4081 = vrot.lane.b32.xlu0 %v739, 72
      %v4082 = vpop.permute.xlu0 %4081
      %4083 = vrot.lane.b32.xlu0 %v741, 72
      %v4084 = vpop.permute.xlu0 %4083
      %4085 = vrot.lane.b32.xlu0 %v746, 72
      %v4086 = vpop.permute.xlu0 %4085
      %4087 = vrot.lane.b32.xlu0 %v748, 72
      %v4088 = vpop.permute.xlu0 %4087
      %4089 = vrot.lane.b32.xlu0 %v753, 72
      %v4090 = vpop.permute.xlu0 %4089
      %4091 = vrot.lane.b32.xlu0 %v755, 72
      %v4092 = vpop.permute.xlu0 %4091
      %4093 = vrot.lane.b32.xlu0 %v760, 72
      %v4094 = vpop.permute.xlu0 %4093
      %4095 = vrot.lane.b32.xlu0 %v762, 72
      %v4096 = vpop.permute.xlu0 %4095
      %4097 = vrot.lane.b32.xlu0 %v767, 72
      %v4098 = vpop.permute.xlu0 %4097
      %4099 = vrot.lane.b32.xlu0 %v769, 72
      %v4100 = vpop.permute.xlu0 %4099
      %4101 = vrot.lane.b32.xlu0 %v774, 72
      %v4102 = vpop.permute.xlu0 %4101
      %4103 = vrot.lane.b32.xlu0 %v776, 72
      %v4104 = vpop.permute.xlu0 %4103
      %4105 = vrot.lane.b32.xlu0 %v781, 72
      %v4106 = vpop.permute.xlu0 %4105
      %4107 = vrot.lane.b32.xlu0 %v783, 72
      %v4108 = vpop.permute.xlu0 %4107
      %4109 = vrot.lane.b32.xlu0 %v788, 72
      %v4110 = vpop.permute.xlu0 %4109
      %4111 = vrot.lane.b32.xlu0 %v790, 72
      %v4112 = vpop.permute.xlu0 %4111
      %v4145 = vsel %vm2018, %v2993, %v3176
      %v4146 = vsel %vm2018, %v2994, %v3178
      %v4147 = vsel %vm2018, %v2996, %v3180
      %v4148 = vsel %vm2018, %v2997, %v3182
      %v4149 = vsel %vm2018, %v2999, %v3184
      %v4150 = vsel %vm2018, %v3000, %v3186
      %v4151 = vsel %vm2018, %v3002, %v3188
      %v4152 = vsel %vm2018, %v3003, %v3190
      %v4153 = vsel %vm2018, %v3005, %v3192
      %v4154 = vsel %vm2018, %v3006, %v3194
      %v4155 = vsel %vm2018, %v3008, %v3196
      %v4156 = vsel %vm2018, %v3009, %v3198
      %v4157 = vsel %vm2018, %v3011, %v3200
      %v4158 = vsel %vm2018, %v3012, %v3202
      %v4159 = vsel %vm2018, %v3014, %v3204
      %v4160 = vsel %vm2018, %v3015, %v3206
      %v4161 = vsel %vm2018, %v3017, %v3208
      %v4162 = vsel %vm2018, %v3018, %v3210
      %v4163 = vsel %vm2018, %v3020, %v3212
      %v4164 = vsel %vm2018, %v3021, %v3214
      %v4165 = vsel %vm2018, %v3023, %v3216
      %v4166 = vsel %vm2018, %v3024, %v3218
      %v4167 = vsel %vm2018, %v3026, %v3220
      %v4168 = vsel %vm2018, %v3027, %v3222
      %v4169 = vsel %vm2018, %v3029, %v3224
      %v4170 = vsel %vm2018, %v3030, %v3226
      %v4171 = vsel %vm2018, %v3032, %v3228
      %v4172 = vsel %vm2018, %v3033, %v3230
      %v4173 = vsel %vm2018, %v3035, %v3232
      %v4174 = vsel %vm2018, %v3036, %v3234
      %v4175 = vsel %vm2018, %v3038, %v3236
      %v4176 = vsel %vm2018, %v3039, %v3238
      %v4177 = vsel %vm2128, %v4145, %v3352
      %v4178 = vsel %vm2128, %v4146, %v3354
      %v4179 = vsel %vm2128, %v4147, %v3356
      %v4180 = vsel %vm2128, %v4148, %v3358
      %v4181 = vsel %vm2128, %v4149, %v3360
      %v4182 = vsel %vm2128, %v4150, %v3362
      %v4183 = vsel %vm2128, %v4151, %v3364
      %v4184 = vsel %vm2128, %v4152, %v3366
      %v4185 = vsel %vm2128, %v4153, %v3368
      %v4186 = vsel %vm2128, %v4154, %v3370
      %v4187 = vsel %vm2128, %v4155, %v3372
      %v4188 = vsel %vm2128, %v4156, %v3374
      %v4189 = vsel %vm2128, %v4157, %v3376
      %v4190 = vsel %vm2128, %v4158, %v3378
      %v4191 = vsel %vm2128, %v4159, %v3380
      %v4192 = vsel %vm2128, %v4160, %v3382
      %v4193 = vsel %vm2128, %v4161, %v3384
      %v4194 = vsel %vm2128, %v4162, %v3386
      %v4195 = vsel %vm2128, %v4163, %v3388
      %v4196 = vsel %vm2128, %v4164, %v3390
      %v4197 = vsel %vm2128, %v4165, %v3392
      %v4198 = vsel %vm2128, %v4166, %v3394
      %v4199 = vsel %vm2128, %v4167, %v3396
      %v4200 = vsel %vm2128, %v4168, %v3398
      %v4201 = vsel %vm2128, %v4169, %v3400
      %v4202 = vsel %vm2128, %v4170, %v3402
      %v4203 = vsel %vm2128, %v4171, %v3404
      %v4204 = vsel %vm2128, %v4172, %v3406
      %v4205 = vsel %vm2128, %v4173, %v3408
      %v4206 = vsel %vm2128, %v4174, %v3410
      %v4207 = vsel %vm2128, %v4175, %v3412
      %v4208 = vsel %vm2128, %v4176, %v3414
      %v4209 = vsel %vm2238, %v4177, %v3450
      %v4210 = vsel %vm2238, %v4178, %v3452
      %v4211 = vsel %vm2238, %v4179, %v3454
      %v4212 = vsel %vm2238, %v4180, %v3456
      %v4213 = vsel %vm2238, %v4181, %v3458
      %v4214 = vsel %vm2238, %v4182, %v3460
      %v4215 = vsel %vm2238, %v4183, %v3462
      %v4216 = vsel %vm2238, %v4184, %v3464
      %v4217 = vsel %vm2238, %v4185, %v3466
      %v4218 = vsel %vm2238, %v4186, %v3468
      %v4219 = vsel %vm2238, %v4187, %v3470
      %v4220 = vsel %vm2238, %v4188, %v3472
      %v4221 = vsel %vm2238, %v4189, %v3474
      %v4222 = vsel %vm2238, %v4190, %v3476
      %v4223 = vsel %vm2238, %v4191, %v3478
      %v4224 = vsel %vm2238, %v4192, %v3480
      %v4225 = vsel %vm2238, %v4193, %v3482
      %v4226 = vsel %vm2238, %v4194, %v3484
      %v4227 = vsel %vm2238, %v4195, %v3486
      %v4228 = vsel %vm2238, %v4196, %v3488
      %v4229 = vsel %vm2238, %v4197, %v3490
      %v4230 = vsel %vm2238, %v4198, %v3492
      %v4231 = vsel %vm2238, %v4199, %v3494
      %v4232 = vsel %vm2238, %v4200, %v3496
      %v4233 = vsel %vm2238, %v4201, %v3498
      %v4234 = vsel %vm2238, %v4202, %v3500
      %v4235 = vsel %vm2238, %v4203, %v3502
      %v4236 = vsel %vm2238, %v4204, %v3504
      %v4237 = vsel %vm2238, %v4205, %v3506
      %v4238 = vsel %vm2238, %v4206, %v3508
      %v4239 = vsel %vm2238, %v4207, %v3510
      %v4240 = vsel %vm2238, %v4208, %v3512
      %v4241 = vsel %vm2348, %v4209, %v3552
      %v4242 = vsel %vm2348, %v4210, %v3554
      %v4243 = vsel %vm2348, %v4211, %v3556
      %v4244 = vsel %vm2348, %v4212, %v3558
      %v4245 = vsel %vm2348, %v4213, %v3560
      %v4246 = vsel %vm2348, %v4214, %v3562
      %v4247 = vsel %vm2348, %v4215, %v3564
      %v4248 = vsel %vm2348, %v4216, %v3566
      %v4249 = vsel %vm2348, %v4217, %v3568
      %v4250 = vsel %vm2348, %v4218, %v3570
      %v4251 = vsel %vm2348, %v4219, %v3572
      %v4252 = vsel %vm2348, %v4220, %v3574
      %v4253 = vsel %vm2348, %v4221, %v3576
      %v4254 = vsel %vm2348, %v4222, %v3578
      %v4255 = vsel %vm2348, %v4223, %v3580
      %v4256 = vsel %vm2348, %v4224, %v3582
      %v4257 = vsel %vm2348, %v4225, %v3584
      %v4258 = vsel %vm2348, %v4226, %v3586
      %v4259 = vsel %vm2348, %v4227, %v3588
      %v4260 = vsel %vm2348, %v4228, %v3590
      %v4261 = vsel %vm2348, %v4229, %v3592
      %v4262 = vsel %vm2348, %v4230, %v3594
      %v4263 = vsel %vm2348, %v4231, %v3596
      %v4264 = vsel %vm2348, %v4232, %v3598
      %v4265 = vsel %vm2348, %v4233, %v3600
      %v4266 = vsel %vm2348, %v4234, %v3602
      %v4267 = vsel %vm2348, %v4235, %v3604
      %v4268 = vsel %vm2348, %v4236, %v3606
      %v4269 = vsel %vm2348, %v4237, %v3608
      %v4270 = vsel %vm2348, %v4238, %v3610
      %v4271 = vsel %vm2348, %v4239, %v3612
      %v4272 = vsel %vm2348, %v4240, %v3614
      %vm4273 = vcmask 326656
      %v4274 = vsel %vm4273, %v4241, %v3653
      %v4275 = vsel %vm4273, %v4242, %v3655
      %v4276 = vsel %vm4273, %v4243, %v3657
      %v4277 = vsel %vm4273, %v4244, %v3659
      %v4278 = vsel %vm4273, %v4245, %v3661
      %v4279 = vsel %vm4273, %v4246, %v3663
      %v4280 = vsel %vm4273, %v4247, %v3665
      %v4281 = vsel %vm4273, %v4248, %v3667
      %v4282 = vsel %vm4273, %v4249, %v3669
      %v4283 = vsel %vm4273, %v4250, %v3671
      %v4284 = vsel %vm4273, %v4251, %v3673
      %v4285 = vsel %vm4273, %v4252, %v3675
      %v4286 = vsel %vm4273, %v4253, %v3677
      %v4287 = vsel %vm4273, %v4254, %v3679
      %v4288 = vsel %vm4273, %v4255, %v3681
      %v4289 = vsel %vm4273, %v4256, %v3683
      %v4290 = vsel %vm4273, %v4257, %v3685
      %v4291 = vsel %vm4273, %v4258, %v3687
      %v4292 = vsel %vm4273, %v4259, %v3689
      %v4293 = vsel %vm4273, %v4260, %v3691
      %v4294 = vsel %vm4273, %v4261, %v3693
      %v4295 = vsel %vm4273, %v4262, %v3695
      %v4296 = vsel %vm4273, %v4263, %v3697
      %v4297 = vsel %vm4273, %v4264, %v3699
      %v4298 = vsel %vm4273, %v4265, %v3701
      %v4299 = vsel %vm4273, %v4266, %v3703
      %v4300 = vsel %vm4273, %v4267, %v3705
      %v4301 = vsel %vm4273, %v4268, %v3707
      %v4302 = vsel %vm4273, %v4269, %v3709
      %v4303 = vsel %vm4273, %v4270, %v3711
      %v4304 = vsel %vm4273, %v4271, %v3713
      %v4305 = vsel %vm4273, %v4272, %v3715
      %vm4306 = vcmask 392192
      %v4307 = vsel %vm4306, %v4274, %v3751
      %v4308 = vsel %vm4306, %v4275, %v3753
      %v4309 = vsel %vm4306, %v4276, %v3755
      %v4310 = vsel %vm4306, %v4277, %v3757
      %v4311 = vsel %vm4306, %v4278, %v3759
      %v4312 = vsel %vm4306, %v4279, %v3761
      %v4313 = vsel %vm4306, %v4280, %v3763
      %v4314 = vsel %vm4306, %v4281, %v3765
      %v4315 = vsel %vm4306, %v4282, %v3767
      %v4316 = vsel %vm4306, %v4283, %v3769
      %v4317 = vsel %vm4306, %v4284, %v3771
      %v4318 = vsel %vm4306, %v4285, %v3773
      %v4319 = vsel %vm4306, %v4286, %v3775
      %v4320 = vsel %vm4306, %v4287, %v3777
      %v4321 = vsel %vm4306, %v4288, %v3779
      %v4322 = vsel %vm4306, %v4289, %v3781
      %v4323 = vsel %vm4306, %v4290, %v3783
      %v4324 = vsel %vm4306, %v4291, %v3785
      %v4325 = vsel %vm4306, %v4292, %v3787
      %v4326 = vsel %vm4306, %v4293, %v3789
      %v4327 = vsel %vm4306, %v4294, %v3791
      %v4328 = vsel %vm4306, %v4295, %v3793
      %v4329 = vsel %vm4306, %v4296, %v3795
      %v4330 = vsel %vm4306, %v4297, %v3797
      %v4331 = vsel %vm4306, %v4298, %v3799
      %v4332 = vsel %vm4306, %v4299, %v3801
      %v4333 = vsel %vm4306, %v4300, %v3803
      %v4334 = vsel %vm4306, %v4301, %v3805
      %v4335 = vsel %vm4306, %v4302, %v3807
      %v4336 = vsel %vm4306, %v4303, %v3809
      %v4337 = vsel %vm4306, %v4304, %v3811
      %v4338 = vsel %vm4306, %v4305, %v3813
      %vm4339 = vcmask 457728
      %v4340 = vsel %vm4339, %v4307, %v3853
      %v4341 = vsel %vm4339, %v4308, %v3855
      %v4342 = vsel %vm4339, %v4309, %v3857
      %v4343 = vsel %vm4339, %v4310, %v3859
      %v4344 = vsel %vm4339, %v4311, %v3861
      %v4345 = vsel %vm4339, %v4312, %v3863
      %v4346 = vsel %vm4339, %v4313, %v3865
      %v4347 = vsel %vm4339, %v4314, %v3867
      %v4348 = vsel %vm4339, %v4315, %v3869
      %v4349 = vsel %vm4339, %v4316, %v3871
      %v4350 = vsel %vm4339, %v4317, %v3873
      %v4351 = vsel %vm4339, %v4318, %v3875
      %v4352 = vsel %vm4339, %v4319, %v3877
      %v4353 = vsel %vm4339, %v4320, %v3879
      %v4354 = vsel %vm4339, %v4321, %v3881
      %v4355 = vsel %vm4339, %v4322, %v3883
      %v4356 = vsel %vm4339, %v4323, %v3885
      %v4357 = vsel %vm4339, %v4324, %v3887
      %v4358 = vsel %vm4339, %v4325, %v3889
      %v4359 = vsel %vm4339, %v4326, %v3891
      %v4360 = vsel %vm4339, %v4327, %v3893
      %v4361 = vsel %vm4339, %v4328, %v3895
      %v4362 = vsel %vm4339, %v4329, %v3897
      %v4363 = vsel %vm4339, %v4330, %v3899
      %v4364 = vsel %vm4339, %v4331, %v3901
      %v4365 = vsel %vm4339, %v4332, %v3903
      %v4366 = vsel %vm4339, %v4333, %v3905
      %v4367 = vsel %vm4339, %v4334, %v3907
      %v4368 = vsel %vm4339, %v4335, %v3909
      %v4369 = vsel %vm4339, %v4336, %v3911
      %v4370 = vsel %vm4339, %v4337, %v3913
      %v4371 = vsel %vm4339, %v4338, %v3915
      %vm4372 = vcmask 523264
      %v4373 = vsel %vm4372, %v4340, %v3954
      %v4374 = vsel %vm4372, %v4341, %v3956
      %v4375 = vsel %vm4372, %v4342, %v3958
      %v4376 = vsel %vm4372, %v4343, %v3960
      %v4377 = vsel %vm4372, %v4344, %v3962
      %v4378 = vsel %vm4372, %v4345, %v3964
      %v4379 = vsel %vm4372, %v4346, %v3966
      %v4380 = vsel %vm4372, %v4347, %v3968
      %v4381 = vsel %vm4372, %v4348, %v3970
      %v4382 = vsel %vm4372, %v4349, %v3972
      %v4383 = vsel %vm4372, %v4350, %v3974
      %v4384 = vsel %vm4372, %v4351, %v3976
      %v4385 = vsel %vm4372, %v4352, %v3978
      %v4386 = vsel %vm4372, %v4353, %v3980
      %v4387 = vsel %vm4372, %v4354, %v3982
      %v4388 = vsel %vm4372, %v4355, %v3984
      %v4389 = vsel %vm4372, %v4356, %v3986
      %v4390 = vsel %vm4372, %v4357, %v3988
      %v4391 = vsel %vm4372, %v4358, %v3990
      %v4392 = vsel %vm4372, %v4359, %v3992
      %v4393 = vsel %vm4372, %v4360, %v3994
      %v4394 = vsel %vm4372, %v4361, %v3996
      %v4395 = vsel %vm4372, %v4362, %v3998
      %v4396 = vsel %vm4372, %v4363, %v4000
      %v4397 = vsel %vm4372, %v4364, %v4002
      %v4398 = vsel %vm4372, %v4365, %v4004
      %v4399 = vsel %vm4372, %v4366, %v4006
      %v4400 = vsel %vm4372, %v4367, %v4008
      %v4401 = vsel %vm4372, %v4368, %v4010
      %v4402 = vsel %vm4372, %v4369, %v4012
      %v4403 = vsel %vm4372, %v4370, %v4014
      %v4404 = vsel %vm4372, %v4371, %v4016
      %vm4405 = vcmask 588800
      %v4406 = vsel %vm4405, %v4373, %v4050
      %v4407 = vsel %vm4405, %v4374, %v4052
      %v4408 = vsel %vm4405, %v4375, %v4054
      %v4409 = vsel %vm4405, %v4376, %v4056
      %v4410 = vsel %vm4405, %v4377, %v4058
      %v4411 = vsel %vm4405, %v4378, %v4060
      %v4412 = vsel %vm4405, %v4379, %v4062
      %v4413 = vsel %vm4405, %v4380, %v4064
      %v4414 = vsel %vm4405, %v4381, %v4066
      %v4415 = vsel %vm4405, %v4382, %v4068
      %v4416 = vsel %vm4405, %v4383, %v4070
      %v4417 = vsel %vm4405, %v4384, %v4072
      %v4418 = vsel %vm4405, %v4385, %v4074
      %v4419 = vsel %vm4405, %v4386, %v4076
      %v4420 = vsel %vm4405, %v4387, %v4078
      %v4421 = vsel %vm4405, %v4388, %v4080
      %v4422 = vsel %vm4405, %v4389, %v4082
      %v4423 = vsel %vm4405, %v4390, %v4084
      %v4424 = vsel %vm4405, %v4391, %v4086
      %v4425 = vsel %vm4405, %v4392, %v4088
      %v4426 = vsel %vm4405, %v4393, %v4090
      %v4427 = vsel %vm4405, %v4394, %v4092
      %v4428 = vsel %vm4405, %v4395, %v4094
      %v4429 = vsel %vm4405, %v4396, %v4096
      %v4430 = vsel %vm4405, %v4397, %v4098
      %v4431 = vsel %vm4405, %v4398, %v4100
      %v4432 = vsel %vm4405, %v4399, %v4102
      %v4433 = vsel %vm4405, %v4400, %v4104
      %v4434 = vsel %vm4405, %v4401, %v4106
      %v4435 = vsel %vm4405, %v4402, %v4108
      %v4436 = vsel %vm4405, %v4403, %v4110
      %v4437 = vsel %vm4405, %v4404, %v4112
      %v4438 = vld [vmem:[%s3] sm:$0xff]
      %v4439 = vld [vmem:[%s4] sm:$0xff]
      %4441 = vset.pattern.permute.xlu0 0
      %4442 = vperm.xlu0 %4441, %v4439
      %v4443 = vpop.permute.xlu0 %4442
      %vm4445 = vcmask 621568
      %v4447 = vsel %vm4445, %v4438, 0
      %v4450 = vsel %vm4445, %v4406, 0
      %v4453 = vsel %vm4445, %v4407, 0
      %v4456 = vsel %vm4445, %v4408, 0
      %v4459 = vsel %vm4445, %v4409, 0
      %v4462 = vsel %vm4445, %v4410, 0
      %v4465 = vsel %vm4445, %v4411, 0
      %v4468 = vsel %vm4445, %v4412, 0
      %v4471 = vsel %vm4445, %v4413, 0
      %v4474 = vsel %vm4445, %v4414, 0
      %v4477 = vsel %vm4445, %v4415, 0
      %v4480 = vsel %vm4445, %v4416, 0
      %v4483 = vsel %vm4445, %v4417, 0
      %v4486 = vsel %vm4445, %v4418, 0
      %v4489 = vsel %vm4445, %v4419, 0
      %v4492 = vsel %vm4445, %v4420, 0
      %v4495 = vsel %vm4445, %v4421, 0
      %v4498 = vsel %vm4445, %v4422, 0
      %v4501 = vsel %vm4445, %v4423, 0
      %v4504 = vsel %vm4445, %v4424, 0
      %v4507 = vsel %vm4445, %v4425, 0
      %v4510 = vsel %vm4445, %v4426, 0
      %v4513 = vsel %vm4445, %v4427, 0
      %v4516 = vsel %vm4445, %v4428, 0
      %v4519 = vsel %vm4445, %v4429, 0
      %v4522 = vsel %vm4445, %v4430, 0
      %v4525 = vsel %vm4445, %v4431, 0
      %v4528 = vsel %vm4445, %v4432, 0
      %v4531 = vsel %vm4445, %v4433, 0
      %v4534 = vsel %vm4445, %v4434, 0
      %v4537 = vsel %vm4445, %v4435, 0
      %v4540 = vsel %vm4445, %v4436, 0
      %v4543 = vsel %vm4445, %v4437, 0
      %4545 = vmatprep.subr.mxu0 0.0
      %4546 = vmatpush1.xpose.msra.mxu0 %v4450
      %4547 = vmatprep.subr.mxu0 0.0
      %4548 = vmatpush1.xpose.msra.mxu0 %v4453
      %4549 = vmatprep.subr.mxu0 0.0
      %4550 = vmatpush1.xpose.msra.mxu0 %v4456
      %4551 = vmatprep.subr.mxu0 0.0
      %4552 = vmatpush1.xpose.msra.mxu0 %v4459
      %4553 = vmatprep.subr.mxu0 0.0
      %4554 = vmatpush1.xpose.msra.mxu0 %v4462
      %4555 = vmatprep.subr.mxu0 0.0
      %4556 = vmatpush1.xpose.msra.mxu0 %v4465
      %4557 = vmatprep.subr.mxu0 0.0
      %4558 = vmatpush1.xpose.msra.mxu0 %v4468
      %4559 = vmatprep.subr.mxu0 0.0
      %4560 = vmatpush1.xpose.msra.mxu0 %v4471
      %4561 = vmatprep.subr.mxu0 0.0
      %4562 = vmatpush1.xpose.msra.mxu0 %v4474
      %4563 = vmatprep.subr.mxu0 0.0
      %4564 = vmatpush1.xpose.msra.mxu0 %v4477
      %4565 = vmatprep.subr.mxu0 0.0
      %4566 = vmatpush1.xpose.msra.mxu0 %v4480
      %4567 = vmatprep.subr.mxu0 0.0
      %4568 = vmatpush1.xpose.msra.mxu0 %v4483
      %4569 = vmatprep.subr.mxu0 0.0
      %4570 = vmatpush1.xpose.msra.mxu0 %v4486
      %4571 = vmatprep.subr.mxu0 0.0
      %4572 = vmatpush1.xpose.msra.mxu0 %v4489
      %4573 = vmatprep.subr.mxu0 0.0
      %4574 = vmatpush1.xpose.msra.mxu0 %v4492
      %4575 = vmatprep.subr.mxu0 0.0
      %4576 = vmatpush1.xpose.msra.mxu0 %v4495
      %4577 = vmatprep.subr.mxu0 0.0
      %4578 = vmatpush1.xpose.msra.mxu0 %v4498
      %4579 = vmatprep.subr.mxu0 0.0
      %4580 = vmatpush1.xpose.msra.mxu0 %v4501
      %4581 = vmatprep.subr.mxu0 0.0
      %4582 = vmatpush1.xpose.msra.mxu0 %v4504
      %4583 = vmatprep.subr.mxu0 0.0
      %4584 = vmatpush1.xpose.msra.mxu0 %v4507
      %4585 = vmatprep.subr.mxu0 0.0
      %4586 = vmatpush1.xpose.msra.mxu0 %v4510
      %4587 = vmatprep.subr.mxu0 0.0
      %4588 = vmatpush1.xpose.msra.mxu0 %v4513
      %4589 = vmatprep.subr.mxu0 0.0
      %4590 = vmatpush1.xpose.msra.mxu0 %v4516
      %4591 = vmatprep.subr.mxu0 0.0
      %4592 = vmatpush1.xpose.msra.mxu0 %v4519
      %4593 = vmatprep.subr.mxu0 0.0
      %4594 = vmatpush1.xpose.msra.mxu0 %v4522
      %4595 = vmatprep.subr.mxu0 0.0
      %4596 = vmatpush1.xpose.msra.mxu0 %v4525
      %4597 = vmatprep.subr.mxu0 0.0
      %4598 = vmatpush1.xpose.msra.mxu0 %v4528
      %4599 = vmatprep.subr.mxu0 0.0
      %4600 = vmatpush1.xpose.msra.mxu0 %v4531
      %4601 = vmatprep.subr.mxu0 0.0
      %4602 = vmatpush1.xpose.msra.mxu0 %v4534
      %4603 = vmatprep.subr.mxu0 0.0
      %4604 = vmatpush1.xpose.msra.mxu0 %v4537
      %4605 = vmatprep.subr.mxu0 0.0
      %4606 = vmatpush1.xpose.msra.mxu0 %v4540
      %4607 = vmatprep.subr.mxu0 0.0
      %4608 = vmatpush1.xpose.msra.mxu0 %v4543
      %4609 = vmatprep.mubr.f32.mxu0 0.0
      %4610 = vmatmul.mubr.f32.gmra.mrb[0].mxu0 %v4447
      %v4611 = vpop.f32.mrb[0].mxu0
      %v4612 = vadd.f32 %v4443, %v4611
      %v4613 = vpop.f32.mrb[0].mxu0
      %v4614 = vadd.f32 %v4443, %v4613
      %4615 = vdwg.mxu0
      %v4616 = vmax.f32 %v4612, 0.0
      %v4617 = vmax.f32 %v4614, 0.0
      %4618 = vst [vmem:[%s224] sm:$0xff] %v4616
      %4619 = vst [vmem:[%s224 + $0x8] sm:$0xff] %v4617
      %p4620 = scmp.lt.s32.totalorder %s16, 1
      %s4621 = scalar_select %p4620, %s16, 1
      %s4622 = smul.addr %s4621, 2
      %s4623 = smul.addr %s4622, 8
      %s4624 = scalar_lea.vmem %s5, %s4623
      // Predicated region
      $region41: #{standard_residual_block.1} parent=39 // pred_check
        %p4625 = pneg %p144
      $region42: #{standard_residual_block.1} parent=39 // pred_check_branch
        %4627 = sbr.rel (%p4625) target = $region44
      $region43: #{standard_residual_block.1} parent=39 // pred_region
        _
      $region44: #{standard_residual_block.1} parent=39 // pred_fallthru
        _
    $region40: #{standard_residual_block.1} parent=5 // pred_fallthru
      _
    %p4628 = scmp.le.s32.totalorder 2, %s11
    // Predicated region
    $region45: #{standard_residual_block.1} parent=5 // pred_check
      %p4629 = pneg %p4628
    $region46: #{standard_residual_block.1} parent=5 // pred_check_branch
      %4631 = sbr.rel (%p4629) target = $region48
    $region47: #{standard_residual_block.1} parent=5 // pred_region
      %s4632 = ssub.s32 %s11, 2
      // Predicated region
      $region49: #{standard_residual_block.1} parent=47 // pred_check
        %p4633 = pneg %p150
      $region50: #{standard_residual_block.1} parent=47 // pred_check_branch
        %4635 = sbr.rel (%p4633) target = $region52
      $region51: #{standard_residual_block.1} parent=47 // pred_region
        %p4636 = scmp.lt.s32.totalorder %s17, 1
        %s4637 = scalar_select %p4636, %s17, 1
        %s4638 = smul.addr %s4637, 2
        %s4639 = smul.addr %s4638, 8
        %s4640 = scalar_lea.vmem %s5, %s4639
      $region52: #{standard_residual_block.1} parent=47 // pred_fallthru
        _
    $region48: #{standard_residual_block.1} parent=5 // pred_fallthru
      _
  $region6: #{standard_residual_block.1} parent=0 // loop_footer
    %s15 = sadd.s32 1, %s11
  $region7: #{standard_residual_block.1} parent=0 // loop_footer_branch
    %10 = sbr.rel target = $region3
  $region8: #{standard_residual_block.1} parent=0 // loop_exit
    _

</llo_original>
